<compile_context>
chip_gen: v5e
topology: v5e:2x2
jax: 0.10.0
libtpu: 0.0.40
codegen_flags: <defaults>
</compile_context>

<pallas_src>
import jax
import jax.numpy as jnp
from jax import lax
from jax.experimental import pallas as pl
from jax.experimental.pallas import tpu as pltpu

LANE = 128


def _round_up(x, m):
    return (x + m - 1) // m * m


# ----------------------------------------------------------------------------
# Pallas kernels
# ----------------------------------------------------------------------------
def _conv_bn_relu_kernel(x_ref, w_ref, shift_ref, mask_ref, o_ref):
    # Y = relu(X @ W_folded + shift) * mask ; single full-K MXU matmul,
    # f32 accumulation, bf16 writeback (the next layer consumes bf16).
    acc = jnp.dot(x_ref[...], w_ref[...], preferred_element_type=jnp.float32)
    y = jnp.maximum(acc + shift_ref[...], 0.0)
    o_ref[...] = (y * mask_ref[...]).astype(o_ref.dtype)


def _conv_bn_relu_x2_kernel(x_ref, w1_ref, s1_ref, w2_ref, s2_ref,
                            mask_ref, o_ref):
    # Last downsample block fused with conv4_out (SparseConv3d k=1,s=1):
    #   y1 = relu(X @ W1 + s1) * mask        (3x3x3 block conv + BN + ReLU)
    #   o  = relu(y1 @ W2 + s2) * mask       (conv4_out + BN + ReLU)
    # y1 never leaves VMEM; its zero lane-padding columns (64..127) stand in
    # for the zero grouper features feeding conv4_out.
    m = mask_ref[...]
    y1 = jnp.maximum(
        jnp.dot(x_ref[...], w1_ref[...], preferred_element_type=jnp.float32)
        + s1_ref[...], 0.0) * m
    y2 = jnp.maximum(
        jnp.dot(y1.astype(jnp.bfloat16), w2_ref[...],
                preferred_element_type=jnp.float32) + s2_ref[...], 0.0) * m
    o_ref[...] = y2.astype(o_ref.dtype)


# ----------------------------------------------------------------------------
# Kernel wrapper
# ----------------------------------------------------------------------------
def _pick_tm(M):
    """M-tile policy: divides M when possible (no ragged pad of the
    K-expanded patch tensor), yields >=2 M-blocks for M >= 512 so both v7x
    TensorCores get work, caps at 2048 for short grid steps on v5e/v6e."""
    if M <= 256:
        return M if M % 8 == 0 else _round_up(M, 8)
    cap = min(2048, M // 2)
    cap -= cap % 8
    for tm in range(cap, 7, -8):
        if M % tm == 0:
            return tm
    return cap  # fallback: ragged tail handled by zero-padding


def fused_conv_bn_relu(x2d, mask, w1, s1, n_out, w2=None, s2=None):
    """x2d: (M, K) bf16 im2col patches; w1: (K, 128) bf16 (BN-scale folded,
    N zero-padded to 128); s1: (1, 128) f32 folded-BN shift; mask: (M,) f32.
    Optional fused second 1x1 conv stage (w2: (128, 128) bf16, s2: (1, 128)).
    Returns (M, n_out) bf16."""
    M, K = x2d.shape
    assert w1.shape == (K, LANE)

    tm = _pick_tm(M)
    Mp = _round_up(M, tm)
    if Mp != M:  # not hit at the shapes below; avoids re-streaming x2d when hit
        x2d = jnp.pad(x2d, ((0, Mp - M), (0, 0)))
        mask = jnp.pad(mask, ((0, Mp - M),))
    mask2d = mask.reshape(Mp, 1)

    grid = (Mp // tm,)  # single M axis; N is always one lane-dense 128 block
    x_spec = pl.BlockSpec((tm, K), lambda i: (i, 0))
    w_spec = pl.BlockSpec((K, LANE), lambda i: (0, 0))
    v_spec = pl.BlockSpec((1, LANE), lambda i: (0, 0))
    m_spec = pl.BlockSpec((tm, 1), lambda i: (i, 0))
    o_spec = pl.BlockSpec((tm, LANE), lambda i: (i, 0))

    flops = 2 * Mp * K * LANE
    bytes_accessed = (x2d.size * 2 + w1.size * 2 + s1.size * 4
                      + mask2d.size * 4 + Mp * LANE * 2)

    if w2 is None:
        kernel = _conv_bn_relu_kernel
        in_specs = [x_spec, w_spec, v_spec, m_spec]
        args = (x2d, w1, s1, mask2d)
    else:
        kernel = _conv_bn_relu_x2_kernel
        in_specs = [x_spec, w_spec, v_spec,
                    pl.BlockSpec((LANE, LANE), lambda i: (0, 0)), v_spec, m_spec]
        args = (x2d, w1, s1, w2, s2, mask2d)
        flops += 2 * Mp * LANE * LANE
        bytes_accessed += w2.size * 2 + s2.size * 4

    out = pl.pallas_call(
        kernel,
        out_shape=jax.ShapeDtypeStruct((Mp, LANE), jnp.bfloat16),
        grid=grid,
        in_specs=in_specs,
        out_specs=o_spec,
        compiler_params=pltpu.CompilerParams(
            dimension_semantics=("parallel",)),
        cost_estimate=pl.CostEstimate(flops=flops, transcendentals=0,
                                      bytes_accessed=bytes_accessed),
    )(*args)
    return out[:M, :n_out]


# ----------------------------------------------------------------------------
# Plain-JAX glue: im2col for 3-D convolutions + sparse-conv wrapper
# ----------------------------------------------------------------------------
def im2col_3d(x, kernel, stride, padding):
    """x: [B, D, H, W, C] -> patches [B, Do, Ho, Wo, k^3*C] (kd, kh, kw, c)."""
    B, D, H, W, C = x.shape
    p = padding
    xp = jnp.pad(x, ((0, 0), (p, p), (p, p), (p, p), (0, 0))) if p else x
    Do = (D + 2 * p - kernel) // stride + 1
    Ho = (H + 2 * p - kernel) // stride + 1
    Wo = (W + 2 * p - kernel) // stride + 1
    cols = []
    for kd in range(kernel):
        for kh in range(kernel):
            for kw in range(kernel):
                cols.append(xp[:,
                               kd:kd + stride * Do:stride,
                               kh:kh + stride * Ho:stride,
                               kw:kw + stride * Wo:stride, :])
    return jnp.concatenate(cols, axis=-1), (Do, Ho, Wo)


def sparse_conv_bn_relu(x, occ, p, *, cout, kernel, stride, padding, subm,
                        p2=None, cout2=None):
    """Simulated spconv {SubMConv3d|SparseConv3d} + folded-BN(eval) + ReLU,
    with an optionally fused trailing 1x1 SparseConv3d + BN + ReLU stage."""
    B = x.shape[0]
    xb = x if x.dtype == jnp.bfloat16 else x.astype(jnp.bfloat16)  # bf16 before im2col
    patches, (Do, Ho, Wo) = im2col_3d(xb, kernel, stride, padding)

    if subm:
        occ_out = occ                           # submanifold: active set unchanged
    else:
        pooled = lax.reduce_window(             # dilated active set (max-pool)
            occ, 0.0, lax.max,
            (1, kernel, kernel, kernel, 1), (1, stride, stride, stride, 1),
            ((0, 0), (padding, padding), (padding, padding),
             (padding, padding), (0, 0)))
        occ_out = (pooled > 0).astype(jnp.float32)

    M = B * Do * Ho * Wo
    x2d = patches.reshape(M, -1)
    mask = occ_out.reshape(M)

    n_out = cout if p2 is None else cout2
    w2 = None if p2 is None else p2['w']
    s2 = None if p2 is None else p2['shift']
    y2d = fused_conv_bn_relu(x2d, mask, p['w'], p['shift'], n_out, w2=w2, s2=s2)
    return y2d.reshape(B, Do, Ho, Wo, n_out), occ_out


# ----------------------------------------------------------------------------
# BiGNN config + deterministic parameter init (BN folded, eps=1e-3)
# ----------------------------------------------------------------------------
MODEL_CFG = dict(
    conv_inputs=(4, 16),
    downsample_layers=[
        dict(filters=(16, 32), strides=(2,), paddings=(1,), types=('spconv',)),
        dict(filters=(32, 64), strides=(2,), paddings=(1,), types=('spconv',)),
    ],
    groupers=[dict(out_channels=64)],
)


def _make_conv_bn(key, cin, cout, kernel):
    kw_, kg, kb, km, kv = jax.random.split(key, 5)
    fan_in = cin * kernel ** 3
    w = jax.random.normal(kw_, (fan_in, cout), jnp.float32) / jnp.sqrt(float(fan_in))
    gamma = 1.0 + 0.1 * jax.random.normal(kg, (cout,), jnp.float32)
    beta = 0.1 * jax.random.normal(kb, (cout,), jnp.float32)
    mean = 0.1 * jax.random.normal(km, (cout,), jnp.float32)
    var = 1.0 + 0.1 * jnp.abs(jax.random.normal(kv, (cout,), jnp.float32))
    eps = 1e-3                                   # BatchNorm1d(eps=0.001), eval mode
    scale = gamma / jnp.sqrt(var + eps)
    shift = beta - mean * scale
    w_folded = w * scale[None, :]                # fold BN scale into conv weights
    Np = _round_up(cout, LANE)                   # lane-dense N=128, padded once at init
    w_p = jnp.pad(w_folded, ((0, 0), (0, Np - cout))).astype(jnp.bfloat16)
    shift_p = jnp.pad(shift.reshape(1, cout), ((0, 0), (0, Np - cout)))
    return dict(w=w_p, shift=shift_p)            # arrays only (jit-safe pytree)


def init_bignn_params(key, cfg):
    keys = jax.random.split(key, 8)
    params = {}
    ci, co = cfg['conv_inputs']
    params['conv_input'] = _make_conv_bn(keys[0], ci, co, 3)
    params['downsample'] = []
    kidx = 1
    for layer in cfg['downsample_layers']:
        blocks = []
        f = layer['filters']
        for i in range(len(layer['types'])):
            blocks.append(_make_conv_bn(keys[kidx], f[i], f[i + 1], 3))
            kidx += 1
        params['downsample'].append(blocks)
    last_c = cfg['downsample_layers'][-1]['filters'][-1]
    out_channels = last_c + 64 * len(cfg['groupers'])       # 64 + 64 = 128
    # conv4_out consumes concat([last block features, grouper features]); the
    # grouper features are zero here and are realized as the zero lane-padding
    # columns (64..127) of the previous stage's 128-wide in-VMEM output.
    params['conv4_out'] = _make_conv_bn(keys[kidx], out_channels, 64, 1)
    return params


# ----------------------------------------------------------------------------
# BiGNN forward
# ----------------------------------------------------------------------------
def bignn_forward(params, cfg, x, occ):
    # conv_input: SubMConv3d(ci->co, 3, pad=1, bias=False) + BN + ReLU
    co = cfg['conv_inputs'][1]
    x, occ = sparse_conv_bn_relu(x, occ, params['conv_input'], cout=co,
                                 kernel=3, stride=1, padding=1, subm=True)

    n_layers = len(cfg['downsample_layers'])
    for li, (layer_cfg, layer_params) in enumerate(
            zip(cfg['downsample_layers'], params['downsample'])):
        n_blocks = len(layer_cfg['types'])
        for bi, blk in enumerate(layer_params):
            last_block = (li == n_layers - 1) and (bi == n_blocks - 1)
            subm = (layer_cfg['types'][bi] == 'subm')
            # TODO(synk): grouper_models / structured_forward_{v1,pcs} are
            # external and undefined in the reference snippet; each grouper's
            # 64-ch per-voxel feature is treated as zero.  conv4_out
            # (SparseConv3d k=1,s=1,pad=0 + BN + ReLU) is fused into the last
            # downsample block's kernel epilogue; its output active set equals
            # its input active set (k=1), so `occ` is unchanged by it.
            x, occ = sparse_conv_bn_relu(
                x, occ, blk,
                cout=layer_cfg['filters'][bi + 1],
                kernel=3,
                stride=layer_cfg['strides'][bi],
                padding=layer_cfg['paddings'][bi],
                subm=subm,
                p2=params['conv4_out'] if last_block else None,
                cout2=64 if last_block else None)

    return x.astype(jnp.float32), occ


# ----------------------------------------------------------------------------
if __name__ == "__main__":
    key = jax.random.PRNGKey(0)
    kx, ko, kp = jax.random.split(key, 3)

    B, D, H, W = 2, 8, 16, 16
    Cin = MODEL_CFG['conv_inputs'][0]

    # synthetic sparse voxel grid: ~30% occupancy, zero features elsewhere
    occ = (jax.random.uniform(ko, (B, D, H, W, 1)) < 0.3).astype(jnp.float32)
    x = jax.random.normal(kx, (B, D, H, W, Cin), jnp.float32) * occ

    params = init_bignn_params(kp, MODEL_CFG)

    fwd = jax.jit(lambda p, xx, oo: bignn_forward(p, MODEL_CFG, xx, oo))
    out, out_occ = fwd(params, x, occ)
    jax.block_until_ready(out)

    assert out.shape == (B, 2, 4, 4, 64), out.shape
    assert out_occ.shape == (B, 2, 4, 4, 1), out_occ.shape
    print("KERNEL_OK")
</pallas_src>

<mosaic_0001>
module attributes {stable_mosaic.version = 11 : i64} {
  func.func @_conv_bn_relu_kernel(%arg0: i32, %arg1: memref<2048x108xbf16, #tpu.memory_space<vmem>>, %arg2: memref<108x128xbf16, #tpu.memory_space<vmem>>, %arg3: memref<1x128xf32, #tpu.memory_space<vmem>>, %arg4: memref<2048x1xf32, #tpu.memory_space<vmem>>, %arg5: memref<2048x128xbf16, #tpu.memory_space<vmem>>) attributes {dimension_semantics = [#tpu.dimension_semantics<parallel>], iteration_bounds = array<i64: 2>, scalar_prefetch = 0 : i64, scratch_operands = 0 : i64, tpu.core_type = #tpu.core_type<tc>, window_params = [{transform_indices = @transform_0, window_bounds = array<i64: 2048, 108>}, {pipeline_mode = #tpu.pipeline_mode<synchronous>, transform_indices = @transform_1, window_bounds = array<i64: 108, 128>}, {pipeline_mode = #tpu.pipeline_mode<synchronous>, transform_indices = @transform_2, window_bounds = array<i64: 1, 128>}, {transform_indices = @transform_3, window_bounds = array<i64: 2048, 1>}, {transform_indices = @transform_4, window_bounds = array<i64: 2048, 128>}]} {
    %c0 = arith.constant 0 : index
    %c0_0 = arith.constant 0 : index
    %0 = vector.load %arg1[%c0, %c0_0] : memref<2048x108xbf16, #tpu.memory_space<vmem>>, vector<2048x108xbf16>
    %c0_1 = arith.constant 0 : index
    %c0_2 = arith.constant 0 : index
    %1 = vector.load %arg2[%c0_1, %c0_2] : memref<108x128xbf16, #tpu.memory_space<vmem>>, vector<108x128xbf16>
    %cst = arith.constant dense<0.000000e+00> : vector<2048x128xf32>
    %2 = tpu.matmul %0, %1, %cst {dimension_numbers = #tpu.dot_dimension_numbers<[1], [0], [0], [1], [0, 0, 1, 1], [], []>} : vector<2048x108xbf16>, vector<108x128xbf16>, vector<2048x128xf32> -> vector<2048x128xf32>
    %c0_3 = arith.constant 0 : index
    %c0_4 = arith.constant 0 : index
    %3 = vector.load %arg3[%c0_3, %c0_4] : memref<1x128xf32, #tpu.memory_space<vmem>>, vector<1x128xf32>
    %4 = vector.broadcast %3 : vector<1x128xf32> to vector<2048x128xf32>
    %5 = arith.addf %2, %4 : vector<2048x128xf32>
    %cst_5 = arith.constant 0.000000e+00 : f32
    %6 = vector.broadcast %cst_5 : f32 to vector<2048x128xf32>
    %7 = arith.maximumf %5, %6 : vector<2048x128xf32>
    %c0_6 = arith.constant 0 : index
    %c0_7 = arith.constant 0 : index
    %8 = vector.load %arg4[%c0_6, %c0_7] : memref<2048x1xf32, #tpu.memory_space<vmem>>, vector<2048x1xf32>
    %9 = vector.broadcast %8 : vector<2048x1xf32> to vector<2048x128xf32>
    %10 = arith.mulf %7, %9 : vector<2048x128xf32>
    %11 = arith.truncf %10 : vector<2048x128xf32> to vector<2048x128xbf16>
    %c0_8 = arith.constant 0 : index
    %c0_9 = arith.constant 0 : index
    %12 = vector.load %arg5[%c0_8, %c0_9] : memref<2048x128xbf16, #tpu.memory_space<vmem>>, vector<2048x128xbf16>
    tpu.vector_store %arg5[%c0_8, %c0_9], %11 {strides = array<i32>} : memref<2048x128xbf16, #tpu.memory_space<vmem>>, vector<2048x128xbf16>,
    return
  }
  func.func @transform_0(%arg0: i32) -> (i32, i32) {
    %c0_i32 = arith.constant 0 : i32
    %c0_i32_0 = arith.constant 0 : i32
    return %arg0, %c0_i32 : i32, i32
  }
  func.func @transform_1(%arg0: i32) -> (i32, i32) {
    %c0_i32 = arith.constant 0 : i32
    %c0_i32_0 = arith.constant 0 : i32
    %c0_i32_1 = arith.constant 0 : i32
    return %c0_i32, %c0_i32_0 : i32, i32
  }
  func.func @transform_2(%arg0: i32) -> (i32, i32) {
    %c0_i32 = arith.constant 0 : i32
    %c0_i32_0 = arith.constant 0 : i32
    %c0_i32_1 = arith.constant 0 : i32
    return %c0_i32, %c0_i32_0 : i32, i32
  }
  func.func @transform_3(%arg0: i32) -> (i32, i32) {
    %c0_i32 = arith.constant 0 : i32
    %c0_i32_0 = arith.constant 0 : i32
    return %arg0, %c0_i32 : i32, i32
  }
  func.func @transform_4(%arg0: i32) -> (i32, i32) {
    %c0_i32 = arith.constant 0 : i32
    %c0_i32_0 = arith.constant 0 : i32
    return %arg0, %c0_i32 : i32, i32
  }
}

module attributes {stable_mosaic.version = 11 : i64} {
  func.func @_conv_bn_relu_kernel(%arg0: i32, %arg1: memref<256x432xbf16, #tpu.memory_space<vmem>>, %arg2: memref<432x128xbf16, #tpu.memory_space<vmem>>, %arg3: memref<1x128xf32, #tpu.memory_space<vmem>>, %arg4: memref<256x1xf32, #tpu.memory_space<vmem>>, %arg5: memref<256x128xbf16, #tpu.memory_space<vmem>>) attributes {dimension_semantics = [#tpu.dimension_semantics<parallel>], iteration_bounds = array<i64: 2>, scalar_prefetch = 0 : i64, scratch_operands = 0 : i64, tpu.core_type = #tpu.core_type<tc>, window_params = [{transform_indices = @transform_0, window_bounds = array<i64: 256, 432>}, {pipeline_mode = #tpu.pipeline_mode<synchronous>, transform_indices = @transform_1, window_bounds = array<i64: 432, 128>}, {pipeline_mode = #tpu.pipeline_mode<synchronous>, transform_indices = @transform_2, window_bounds = array<i64: 1, 128>}, {transform_indices = @transform_3, window_bounds = array<i64: 256, 1>}, {transform_indices = @transform_4, window_bounds = array<i64: 256, 128>}]} {
    %c0 = arith.constant 0 : index
    %c0_0 = arith.constant 0 : index
    %0 = vector.load %arg1[%c0, %c0_0] : memref<256x432xbf16, #tpu.memory_space<vmem>>, vector<256x432xbf16>
    %c0_1 = arith.constant 0 : index
    %c0_2 = arith.constant 0 : index
    %1 = vector.load %arg2[%c0_1, %c0_2] : memref<432x128xbf16, #tpu.memory_space<vmem>>, vector<432x128xbf16>
    %cst = arith.constant dense<0.000000e+00> : vector<256x128xf32>
    %2 = tpu.matmul %0, %1, %cst {dimension_numbers = #tpu.dot_dimension_numbers<[1], [0], [0], [1], [0, 0, 1, 1], [], []>} : vector<256x432xbf16>, vector<432x128xbf16>, vector<256x128xf32> -> vector<256x128xf32>
    %c0_3 = arith.constant 0 : index
    %c0_4 = arith.constant 0 : index
    %3 = vector.load %arg3[%c0_3, %c0_4] : memref<1x128xf32, #tpu.memory_space<vmem>>, vector<1x128xf32>
    %4 = vector.broadcast %3 : vector<1x128xf32> to vector<256x128xf32>
    %5 = arith.addf %2, %4 : vector<256x128xf32>
    %cst_5 = arith.constant 0.000000e+00 : f32
    %6 = vector.broadcast %cst_5 : f32 to vector<256x128xf32>
    %7 = arith.maximumf %5, %6 : vector<256x128xf32>
    %c0_6 = arith.constant 0 : index
    %c0_7 = arith.constant 0 : index
    %8 = vector.load %arg4[%c0_6, %c0_7] : memref<256x1xf32, #tpu.memory_space<vmem>>, vector<256x1xf32>
    %9 = vector.broadcast %8 : vector<256x1xf32> to vector<256x128xf32>
    %10 = arith.mulf %7, %9 : vector<256x128xf32>
    %11 = arith.truncf %10 : vector<256x128xf32> to vector<256x128xbf16>
    %c0_8 = arith.constant 0 : index
    %c0_9 = arith.constant 0 : index
    %12 = vector.load %arg5[%c0_8, %c0_9] : memref<256x128xbf16, #tpu.memory_space<vmem>>, vector<256x128xbf16>
    tpu.vector_store %arg5[%c0_8, %c0_9], %11 {strides = array<i32>} : memref<256x128xbf16, #tpu.memory_space<vmem>>, vector<256x128xbf16>,
    return
  }
  func.func @transform_0(%arg0: i32) -> (i32, i32) {
    %c0_i32 = arith.constant 0 : i32
    %c0_i32_0 = arith.constant 0 : i32
    return %arg0, %c0_i32 : i32, i32
  }
  func.func @transform_1(%arg0: i32) -> (i32, i32) {
    %c0_i32 = arith.constant 0 : i32
    %c0_i32_0 = arith.constant 0 : i32
    %c0_i32_1 = arith.constant 0 : i32
    return %c0_i32, %c0_i32_0 : i32, i32
  }
  func.func @transform_2(%arg0: i32) -> (i32, i32) {
    %c0_i32 = arith.constant 0 : i32
    %c0_i32_0 = arith.constant 0 : i32
    %c0_i32_1 = arith.constant 0 : i32
    return %c0_i32, %c0_i32_0 : i32, i32
  }
  func.func @transform_3(%arg0: i32) -> (i32, i32) {
    %c0_i32 = arith.constant 0 : i32
    %c0_i32_0 = arith.constant 0 : i32
    return %arg0, %c0_i32 : i32, i32
  }
  func.func @transform_4(%arg0: i32) -> (i32, i32) {
    %c0_i32 = arith.constant 0 : i32
    %c0_i32_0 = arith.constant 0 : i32
    return %arg0, %c0_i32 : i32, i32
  }
}

module attributes {stable_mosaic.version = 11 : i64} {
  func.func @_conv_bn_relu_x2_kernel(%arg0: i32, %arg1: memref<64x864xbf16, #tpu.memory_space<vmem>>, %arg2: memref<864x128xbf16, #tpu.memory_space<vmem>>, %arg3: memref<1x128xf32, #tpu.memory_space<vmem>>, %arg4: memref<128x128xbf16, #tpu.memory_space<vmem>>, %arg5: memref<1x128xf32, #tpu.memory_space<vmem>>, %arg6: memref<64x1xf32, #tpu.memory_space<vmem>>, %arg7: memref<64x128xbf16, #tpu.memory_space<vmem>>) attributes {dimension_semantics = [#tpu.dimension_semantics<parallel>], iteration_bounds = array<i64: 1>, scalar_prefetch = 0 : i64, scratch_operands = 0 : i64, tpu.core_type = #tpu.core_type<tc>, window_params = [{transform_indices = @transform_0, window_bounds = array<i64: 64, 864>}, {pipeline_mode = #tpu.pipeline_mode<synchronous>, transform_indices = @transform_1, window_bounds = array<i64: 864, 128>}, {pipeline_mode = #tpu.pipeline_mode<synchronous>, transform_indices = @transform_2, window_bounds = array<i64: 1, 128>}, {pipeline_mode = #tpu.pipeline_mode<synchronous>, transform_indices = @transform_3, window_bounds = array<i64: 128, 128>}, {pipeline_mode = #tpu.pipeline_mode<synchronous>, transform_indices = @transform_4, window_bounds = array<i64: 1, 128>}, {transform_indices = @transform_5, window_bounds = array<i64: 64, 1>}, {transform_indices = @transform_6, window_bounds = array<i64: 64, 128>}]} {
    %c0 = arith.constant 0 : index
    %c0_0 = arith.constant 0 : index
    %0 = vector.load %arg6[%c0, %c0_0] : memref<64x1xf32, #tpu.memory_space<vmem>>, vector<64x1xf32>
    %c0_1 = arith.constant 0 : index
    %c0_2 = arith.constant 0 : index
    %1 = vector.load %arg1[%c0_1, %c0_2] : memref<64x864xbf16, #tpu.memory_space<vmem>>, vector<64x864xbf16>
    %c0_3 = arith.constant 0 : index
    %c0_4 = arith.constant 0 : index
    %2 = vector.load %arg2[%c0_3, %c0_4] : memref<864x128xbf16, #tpu.memory_space<vmem>>, vector<864x128xbf16>
    %cst = arith.constant dense<0.000000e+00> : vector<64x128xf32>
    %3 = tpu.matmul %1, %2, %cst {dimension_numbers = #tpu.dot_dimension_numbers<[1], [0], [0], [1], [0, 0, 1, 1], [], []>} : vector<64x864xbf16>, vector<864x128xbf16>, vector<64x128xf32> -> vector<64x128xf32>
    %c0_5 = arith.constant 0 : index
    %c0_6 = arith.constant 0 : index
    %4 = vector.load %arg3[%c0_5, %c0_6] : memref<1x128xf32, #tpu.memory_space<vmem>>, vector<1x128xf32>
    %5 = vector.broadcast %4 : vector<1x128xf32> to vector<64x128xf32>
    %6 = arith.addf %3, %5 : vector<64x128xf32>
    %cst_7 = arith.constant 0.000000e+00 : f32
    %7 = vector.broadcast %cst_7 : f32 to vector<64x128xf32>
    %8 = arith.maximumf %6, %7 : vector<64x128xf32>
    %9 = vector.broadcast %0 : vector<64x1xf32> to vector<64x128xf32>
    %10 = arith.mulf %8, %9 : vector<64x128xf32>
    %11 = arith.truncf %10 : vector<64x128xf32> to vector<64x128xbf16>
    %c0_8 = arith.constant 0 : index
    %c0_9 = arith.constant 0 : index
    %12 = vector.load %arg4[%c0_8, %c0_9] : memref<128x128xbf16, #tpu.memory_space<vmem>>, vector<128x128xbf16>
    %cst_10 = arith.constant dense<0.000000e+00> : vector<64x128xf32>
    %13 = tpu.matmul %11, %12, %cst_10 {dimension_numbers = #tpu.dot_dimension_numbers<[1], [0], [0], [1], [0, 0, 1, 1], [], []>} : vector<64x128xbf16>, vector<128x128xbf16>, vector<64x128xf32> -> vector<64x128xf32>
    %c0_11 = arith.constant 0 : index
    %c0_12 = arith.constant 0 : index
    %14 = vector.load %arg5[%c0_11, %c0_12] : memref<1x128xf32, #tpu.memory_space<vmem>>, vector<1x128xf32>
    %15 = vector.broadcast %14 : vector<1x128xf32> to vector<64x128xf32>
    %16 = arith.addf %13, %15 : vector<64x128xf32>
    %cst_13 = arith.constant 0.000000e+00 : f32
    %17 = vector.broadcast %cst_13 : f32 to vector<64x128xf32>
    %18 = arith.maximumf %16, %17 : vector<64x128xf32>
    %19 = vector.broadcast %0 : vector<64x1xf32> to vector<64x128xf32>
    %20 = arith.mulf %18, %19 : vector<64x128xf32>
    %21 = arith.truncf %20 : vector<64x128xf32> to vector<64x128xbf16>
    %c0_14 = arith.constant 0 : index
    %c0_15 = arith.constant 0 : index
    %22 = vector.load %arg7[%c0_14, %c0_15] : memref<64x128xbf16, #tpu.memory_space<vmem>>, vector<64x128xbf16>
    tpu.vector_store %arg7[%c0_14, %c0_15], %21 {strides = array<i32>} : memref<64x128xbf16, #tpu.memory_space<vmem>>, vector<64x128xbf16>,
    return
  }
  func.func @transform_0(%arg0: i32) -> (i32, i32) {
    %c0_i32 = arith.constant 0 : i32
    %c0_i32_0 = arith.constant 0 : i32
    return %arg0, %c0_i32 : i32, i32
  }
  func.func @transform_1(%arg0: i32) -> (i32, i32) {
    %c0_i32 = arith.constant 0 : i32
    %c0_i32_0 = arith.constant 0 : i32
    %c0_i32_1 = arith.constant 0 : i32
    return %c0_i32, %c0_i32_0 : i32, i32
  }
  func.func @transform_2(%arg0: i32) -> (i32, i32) {
    %c0_i32 = arith.constant 0 : i32
    %c0_i32_0 = arith.constant 0 : i32
    %c0_i32_1 = arith.constant 0 : i32
    return %c0_i32, %c0_i32_0 : i32, i32
  }
  func.func @transform_3(%arg0: i32) -> (i32, i32) {
    %c0_i32 = arith.constant 0 : i32
    %c0_i32_0 = arith.constant 0 : i32
    %c0_i32_1 = arith.constant 0 : i32
    return %c0_i32, %c0_i32_0 : i32, i32
  }
  func.func @transform_4(%arg0: i32) -> (i32, i32) {
    %c0_i32 = arith.constant 0 : i32
    %c0_i32_0 = arith.constant 0 : i32
    %c0_i32_1 = arith.constant 0 : i32
    return %c0_i32, %c0_i32_0 : i32, i32
  }
  func.func @transform_5(%arg0: i32) -> (i32, i32) {
    %c0_i32 = arith.constant 0 : i32
    %c0_i32_0 = arith.constant 0 : i32
    return %arg0, %c0_i32 : i32, i32
  }
  func.func @transform_6(%arg0: i32) -> (i32, i32) {
    %c0_i32 = arith.constant 0 : i32
    %c0_i32_0 = arith.constant 0 : i32
    return %arg0, %c0_i32 : i32, i32
  }
}

</mosaic_0001>

<llo_original>
// kernel: _lambda_.3
$region0: #{_lambda_.3}
  #allocation0 [shape = 'u32[]', space=smem, size = 0x4, offset = 0x4, fixed_abs, tag = 'smem constant byte address 0x4 - core index']
  #allocation1 [shape = 'u32[72,128]{1,0:T(1,128)}', space=vmem, size = 0x9000, scoped, tag = 'internal scratch']
  %s0 = inlined_call_operand.vmem [shape: bf16[4096,108], index: 0, kind: input, shape index: {}]
  %s1 = inlined_call_operand.vmem [shape: bf16[108,128], index: 1, kind: input, shape index: {}]
  %s2 = inlined_call_operand.vmem [shape: f32[1,128], index: 2, kind: input, shape index: {}]
  %s3 = inlined_call_operand.vmem [shape: f32[4096,1], index: 3, kind: input, shape index: {}]
  %s4 = inlined_call_operand.vmem [shape: bf16[4096,128], index: 4, kind: output, shape index: {}]
  %s5 = sld [smem:[#allocation0]]
  $region49: #{_lambda_.3} parent=0
    _
  %s7 = ssub.s32 1, %s5
  %s8 = scalar_select 0, %s7, %s5
  loop: start=0, step=1, limit=4
  $region2: #{_lambda_.3} parent=0 // loop_pre_header
    _
  $region3: #{_lambda_.3} parent=0 // loop_header
    %s10 = sphi 0, %s14
    %p11 = scmp.ge.s32.totalorder %s10, 4
    %s20 = sphi 0, %s22
    %s23 = sphi 0, %s20
    %s24 = sphi 0, %s23
    %s40 = sphi 0, %s24
    %s44 = sphi 0, %s44
    %s46 = sphi 0, %s44
    %s47 = sphi 0, %s46
    %s61 = sphi 0, %s47
    %s65 = sphi 0, %s65
    %s67 = sphi 0, %s65
    %s68 = sphi 0, %s67
    %s82 = sphi 0, %s68
    %s88 = sphi 0, %s90
    %s91 = sphi 0, %s88
    %s92 = sphi 0, %s91
    %s108 = sphi 0, %s92
    %s114 = sphi 0, %s116
    %s117 = sphi 0, %s114
    %s118 = sphi 0, %s117
    %s134 = sphi 0, %s118
  $region4: #{_lambda_.3} parent=0 // loop_header_branch
    %13 = sbr.rel (%p11) target = $region8
  $region5: #{_lambda_.3} parent=0 // loop_body
    %s15 = ssub.s32 %s10, 1
    %s16 = ssub.s32 %s10, 2
    %s17 = sadd.s32 %s10, 1
    %s18 = ssub.s32 %s10, %s17
    %p19 = scmp.eq.s32.totalorder %s18, 0
    %s21 = sadd.s32 %s20, 1
    %s22 = scalar_select %p19, %s20, %s21
    %p25 = pneg %p19
    %p26 = scmp.eq.s32.totalorder %s10, 1
    %p27 = por %p25, %p26
    %p28 = scmp.ne.s32.totalorder %s20, %s23
    %p29 = scmp.eq.s32.totalorder %s10, 0
    %p30 = por %p28, %p29
    %p31 = scmp.ne.s32.totalorder %s20, %s23
    %p32 = scmp.eq.s32.totalorder %s15, 1
    %p33 = por %p31, %p32
    %p34 = scmp.ne.s32.totalorder %s23, %s24
    %p35 = scmp.eq.s32.totalorder %s15, 0
    %p36 = por %p34, %p35
    %p37 = scmp.ne.s32.totalorder %s23, %s24
    %p38 = scmp.eq.s32.totalorder %s16, 1
    %p39 = por %p37, %p38
    %p41 = scmp.ne.s32.totalorder %s24, %s40
    %p42 = scmp.eq.s32.totalorder %s16, 0
    %p43 = por %p41, %p42
    %s45 = sadd.s32 %s44, 1
    %p48 = scmp.eq.s32.totalorder %s10, 1
    %p49 = scmp.ne.s32.totalorder %s44, %s46
    %p50 = scmp.eq.s32.totalorder %s10, 0
    %p51 = por %p49, %p50
    %p52 = scmp.ne.s32.totalorder %s44, %s46
    %p53 = scmp.eq.s32.totalorder %s15, 1
    %p54 = por %p52, %p53
    %p55 = scmp.ne.s32.totalorder %s46, %s47
    %p56 = scmp.eq.s32.totalorder %s15, 0
    %p57 = por %p55, %p56
    %p58 = scmp.ne.s32.totalorder %s46, %s47
    %p59 = scmp.eq.s32.totalorder %s16, 1
    %p60 = por %p58, %p59
    %p62 = scmp.ne.s32.totalorder %s47, %s61
    %p63 = scmp.eq.s32.totalorder %s16, 0
    %p64 = por %p62, %p63
    %s66 = sadd.s32 %s65, 1
    %p69 = scmp.eq.s32.totalorder %s10, 1
    %p70 = scmp.ne.s32.totalorder %s65, %s67
    %p71 = scmp.eq.s32.totalorder %s10, 0
    %p72 = por %p70, %p71
    %p73 = scmp.ne.s32.totalorder %s65, %s67
    %p74 = scmp.eq.s32.totalorder %s15, 1
    %p75 = por %p73, %p74
    %p76 = scmp.ne.s32.totalorder %s67, %s68
    %p77 = scmp.eq.s32.totalorder %s15, 0
    %p78 = por %p76, %p77
    %p79 = scmp.ne.s32.totalorder %s67, %s68
    %p80 = scmp.eq.s32.totalorder %s16, 1
    %p81 = por %p79, %p80
    %p83 = scmp.ne.s32.totalorder %s68, %s82
    %p84 = scmp.eq.s32.totalorder %s16, 0
    %p85 = por %p83, %p84
    %s86 = ssub.s32 %s10, %s17
    %p87 = scmp.eq.s32.totalorder %s86, 0
    %s89 = sadd.s32 %s88, 1
    %s90 = scalar_select %p87, %s88, %s89
    %p93 = pneg %p87
    %p94 = scmp.eq.s32.totalorder %s10, 1
    %p95 = por %p93, %p94
    %p96 = scmp.ne.s32.totalorder %s88, %s91
    %p97 = scmp.eq.s32.totalorder %s10, 0
    %p98 = por %p96, %p97
    %p99 = scmp.ne.s32.totalorder %s88, %s91
    %p100 = scmp.eq.s32.totalorder %s15, 1
    %p101 = por %p99, %p100
    %p102 = scmp.ne.s32.totalorder %s91, %s92
    %p103 = scmp.eq.s32.totalorder %s15, 0
    %p104 = por %p102, %p103
    %p105 = scmp.ne.s32.totalorder %s91, %s92
    %p106 = scmp.eq.s32.totalorder %s16, 1
    %p107 = por %p105, %p106
    %p109 = scmp.ne.s32.totalorder %s92, %s108
    %p110 = scmp.eq.s32.totalorder %s16, 0
    %p111 = por %p109, %p110
    %s112 = ssub.s32 %s10, %s17
    %p113 = scmp.eq.s32.totalorder %s112, 0
    %s115 = sadd.s32 %s114, 1
    %s116 = scalar_select %p113, %s114, %s115
    %p119 = pneg %p113
    %p120 = scmp.eq.s32.totalorder %s10, 1
    %p121 = por %p119, %p120
    %p122 = scmp.ne.s32.totalorder %s114, %s117
    %p123 = scmp.eq.s32.totalorder %s10, 0
    %p124 = por %p122, %p123
    %p125 = scmp.ne.s32.totalorder %s114, %s117
    %p126 = scmp.eq.s32.totalorder %s15, 1
    %p127 = por %p125, %p126
    %p128 = scmp.ne.s32.totalorder %s117, %s118
    %p129 = scmp.eq.s32.totalorder %s15, 0
    %p130 = por %p128, %p129
    %p131 = scmp.ne.s32.totalorder %s117, %s118
    %p132 = scmp.eq.s32.totalorder %s16, 1
    %p133 = por %p131, %p132
    %p135 = scmp.ne.s32.totalorder %s118, %s134
    %p136 = scmp.eq.s32.totalorder %s16, 0
    %p137 = por %p135, %p136
    %p138 = scmp.le.s32.totalorder 1, %s10
    %p139 = scmp.lt.s32.totalorder %s10, 3
    %p140 = pnand %p138, %p139
    %p141 = pneg %p140
    // Predicated region
    $region9: #{_lambda_.3} parent=5 // pred_check
      _
    $region10: #{_lambda_.3} parent=5 // pred_check_branch
      %143 = sbr.rel (%p140) target = $region12
    $region11: #{_lambda_.3} parent=5 // pred_region
      %s144 = ssub.s32 %s10, 1
      // Predicated region
      $region13: #{_lambda_.3} parent=11 // pred_check
        %p145 = pneg %p57
      $region14: #{_lambda_.3} parent=11 // pred_check_branch
        %147 = sbr.rel (%p145) target = $region16
      $region15: #{_lambda_.3} parent=11 // pred_region
        _
      $region16: #{_lambda_.3} parent=11 // pred_fallthru
        _
      // Predicated region
      $region17: #{_lambda_.3} parent=11 // pred_check
        %p148 = pneg %p78
      $region18: #{_lambda_.3} parent=11 // pred_check_branch
        %150 = sbr.rel (%p148) target = $region20
      $region19: #{_lambda_.3} parent=11 // pred_region
        _
      $region20: #{_lambda_.3} parent=11 // pred_fallthru
        _
    $region12: #{_lambda_.3} parent=5 // pred_fallthru
      _
    %p151 = scmp.lt.s32.totalorder %s10, 2
    // Predicated region
    $region21: #{_lambda_.3} parent=5 // pred_check
      %p152 = pneg %p151
    $region22: #{_lambda_.3} parent=5 // pred_check_branch
      %154 = sbr.rel (%p152) target = $region24
    $region23: #{_lambda_.3} parent=5 // pred_region
      // Predicated region
      $region25: #{_lambda_.3} parent=23 // pred_check
        %p155 = pneg %p30
      $region26: #{_lambda_.3} parent=23 // pred_check_branch
        %157 = sbr.rel (%p155) target = $region28
      $region27: #{_lambda_.3} parent=23 // pred_region
        %s158 = smul.u32 256, %s10
        %p159 = scmp.lt.s32.totalorder %s158, 511
        %s160 = scalar_select %p159, %s158, 511
        %s161 = smul.addr %s160, 4
        %s162 = scalar_lea.vmem %s0, %s161
        %s163 = smul.u32 256, %s10
      $region28: #{_lambda_.3} parent=23 // pred_fallthru
        _
      // Predicated region
      $region29: #{_lambda_.3} parent=23 // pred_check
        %p164 = pneg %p98
      $region30: #{_lambda_.3} parent=23 // pred_check_branch
        %166 = sbr.rel (%p164) target = $region32
      $region31: #{_lambda_.3} parent=23 // pred_region
        %s167 = smul.u32 256, %s10
        %p168 = scmp.lt.s32.totalorder %s167, 511
        %s169 = scalar_select %p168, %s167, 511
        %s170 = smul.addr %s169, 8
        %s171 = scalar_lea.vmem %s3, %s170
        %s172 = smul.u32 256, %s10
      $region32: #{_lambda_.3} parent=23 // pred_fallthru
        _
    $region24: #{_lambda_.3} parent=5 // pred_fallthru
      _
    %p173 = scmp.le.s32.totalorder 1, %s10
    %p174 = scmp.lt.s32.totalorder %s10, 3
    %p175 = pnand %p173, %p174
    %p176 = pneg %p175
    // Predicated region
    $region33: #{_lambda_.3} parent=5 // pred_check
      _
    $region34: #{_lambda_.3} parent=5 // pred_check_branch
      %178 = sbr.rel (%p175) target = $region36
    $region35: #{_lambda_.3} parent=5 // pred_region
      %s179 = ssub.s32 %s10, 1
      %s180 = smul.u32 256, %s15
      %p181 = scmp.lt.s32.totalorder %s180, 511
      %s182 = scalar_select %p181, %s180, 511
      %s183 = smul.addr %s182, 4
      %s184 = scalar_lea.vmem %s0, %s183
      %p185 = pneg %p36
      %p186 = pneg %p33
      %p187 = pneg %p57
      %p188 = pneg %p54
      %p189 = pneg %p78
      %p190 = pneg %p75
      %s191 = smul.u32 256, %s15
      %p192 = scmp.lt.s32.totalorder %s191, 511
      %s193 = scalar_select %p192, %s191, 511
      %s194 = smul.addr %s193, 8
      %s195 = scalar_lea.vmem %s3, %s194
      %p196 = pneg %p104
      %p197 = pneg %p101
      %p198 = pneg %p130
      %p199 = pneg %p127
      %s200 = smul.u32 256, %s15
      %p201 = scmp.lt.s32.totalorder %s200, 511
      %s202 = scalar_select %p201, %s200, 511
      %s203 = smul.addr %s202, 4
      %s204 = scalar_lea.vmem %s4, %s203
      %s205 = smul.u32 256, %s15
      %p206 = scmp.lt.s32.totalorder %s205, 511
      %s207 = scalar_select %p206, %s205, 511
      %s208 = smul.addr %s207, 4
      %s209 = scalar_lea.vmem %s0, %s208
      %s210 = smul.u32 256, %s15
      %s211 = smul.u32 256, %s15
      %p212 = scmp.lt.s32.totalorder %s211, 511
      %s213 = scalar_select %p212, %s211, 511
      %s214 = smul.addr %s213, 8
      %s215 = scalar_lea.vmem %s3, %s214
      %s216 = smul.u32 256, %s15
      %s217 = smul.u32 256, %s15
      %p218 = scmp.lt.s32.totalorder %s217, 511
      %s219 = scalar_select %p218, %s217, 511
      %s220 = smul.addr %s219, 4
      %s221 = scalar_lea.vmem %s4, %s220
      %s222 = smul.u32 256, %s15
      %v224 = vld [vmem:[%s209] sm:$0xf]
      %v225 = vld [vmem:[%s209 + $0x4] sm:$0xf]
      %v226 = vld [vmem:[%s209 + $0x8] sm:$0xf]
      %v227 = vld [vmem:[%s209 + $0xc] sm:$0xf]
      %v228 = vld [vmem:[%s209 + $0x10] sm:$0xf]
      %v229 = vld [vmem:[%s209 + $0x14] sm:$0xf]
      %v230 = vld [vmem:[%s209 + $0x18] sm:$0xf]
      %v231 = vld [vmem:[%s209 + $0x1c] sm:$0xf]
      %v232 = vld [vmem:[%s209 + $0x20] sm:$0xf]
      %v233 = vld [vmem:[%s209 + $0x24] sm:$0xf]
      %v234 = vld [vmem:[%s209 + $0x28] sm:$0xf]
      %v235 = vld [vmem:[%s209 + $0x2c] sm:$0xf]
      %v236 = vld [vmem:[%s209 + $0x30] sm:$0xf]
      %v237 = vld [vmem:[%s209 + $0x34] sm:$0xf]
      %v238 = vld [vmem:[%s209 + $0x38] sm:$0xf]
      %v239 = vld [vmem:[%s209 + $0x3c] sm:$0xf]
      %v240 = vld [vmem:[%s209 + $0x40] sm:$0xf]
      %v241 = vld [vmem:[%s209 + $0x44] sm:$0xf]
      %v242 = vld [vmem:[%s209 + $0x48] sm:$0xf]
      %v243 = vld [vmem:[%s209 + $0x4c] sm:$0xf]
      %v244 = vld [vmem:[%s209 + $0x50] sm:$0xf]
      %v245 = vld [vmem:[%s209 + $0x54] sm:$0xf]
      %v246 = vld [vmem:[%s209 + $0x58] sm:$0xf]
      %v247 = vld [vmem:[%s209 + $0x5c] sm:$0xf]
      %v248 = vld [vmem:[%s209 + $0x60] sm:$0xf]
      %v249 = vld [vmem:[%s209 + $0x64] sm:$0xf]
      %v250 = vld [vmem:[%s209 + $0x68] sm:$0xf]
      %v251 = vld [vmem:[%s209 + $0x6c] sm:$0xf]
      %v252 = vld [vmem:[%s209 + $0x70] sm:$0xf]
      %v253 = vld [vmem:[%s209 + $0x74] sm:$0xf]
      %v254 = vld [vmem:[%s209 + $0x78] sm:$0xf]
      %v255 = vld [vmem:[%s209 + $0x7c] sm:$0xf]
      %v256 = vld [vmem:[%s209 + $0x80] sm:$0xf]
      %v257 = vld [vmem:[%s209 + $0x84] sm:$0xf]
      %v258 = vld [vmem:[%s209 + $0x88] sm:$0xf]
      %v259 = vld [vmem:[%s209 + $0x8c] sm:$0xf]
      %v260 = vld [vmem:[%s209 + $0x90] sm:$0xf]
      %v261 = vld [vmem:[%s209 + $0x94] sm:$0xf]
      %v262 = vld [vmem:[%s209 + $0x98] sm:$0xf]
      %v263 = vld [vmem:[%s209 + $0x9c] sm:$0xf]
      %v264 = vld [vmem:[%s209 + $0xa0] sm:$0xf]
      %v265 = vld [vmem:[%s209 + $0xa4] sm:$0xf]
      %v266 = vld [vmem:[%s209 + $0xa8] sm:$0xf]
      %v267 = vld [vmem:[%s209 + $0xac] sm:$0xf]
      %v268 = vld [vmem:[%s209 + $0xb0] sm:$0xf]
      %v269 = vld [vmem:[%s209 + $0xb4] sm:$0xf]
      %v270 = vld [vmem:[%s209 + $0xb8] sm:$0xf]
      %v271 = vld [vmem:[%s209 + $0xbc] sm:$0xf]
      %v272 = vld [vmem:[%s209 + $0xc0] sm:$0xf]
      %v273 = vld [vmem:[%s209 + $0xc4] sm:$0xf]
      %v274 = vld [vmem:[%s209 + $0xc8] sm:$0xf]
      %v275 = vld [vmem:[%s209 + $0xcc] sm:$0xf]
      %v276 = vld [vmem:[%s209 + $0xd0] sm:$0xf]
      %v277 = vld [vmem:[%s209 + $0xd4] sm:$0xf]
      %v278 = vld [vmem:[%s209 + $0xd8] sm:$0xf]
      %v279 = vld [vmem:[%s209 + $0xdc] sm:$0xf]
      %v280 = vld [vmem:[%s209 + $0xe0] sm:$0xf]
      %v281 = vld [vmem:[%s209 + $0xe4] sm:$0xf]
      %v282 = vld [vmem:[%s209 + $0xe8] sm:$0xf]
      %v283 = vld [vmem:[%s209 + $0xec] sm:$0xf]
      %v284 = vld [vmem:[%s209 + $0xf0] sm:$0xf]
      %v285 = vld [vmem:[%s209 + $0xf4] sm:$0xf]
      %v286 = vld [vmem:[%s209 + $0xf8] sm:$0xf]
      %v287 = vld [vmem:[%s209 + $0xfc] sm:$0xf]
      %v288 = vld [vmem:[%s209 + $0x100] sm:$0xf]
      %v289 = vld [vmem:[%s209 + $0x104] sm:$0xf]
      %v290 = vld [vmem:[%s209 + $0x108] sm:$0xf]
      %v291 = vld [vmem:[%s209 + $0x10c] sm:$0xf]
      %v292 = vld [vmem:[%s209 + $0x110] sm:$0xf]
      %v293 = vld [vmem:[%s209 + $0x114] sm:$0xf]
      %v294 = vld [vmem:[%s209 + $0x118] sm:$0xf]
      %v295 = vld [vmem:[%s209 + $0x11c] sm:$0xf]
      %v296 = vld [vmem:[%s209 + $0x120] sm:$0xf]
      %v297 = vld [vmem:[%s209 + $0x124] sm:$0xf]
      %v298 = vld [vmem:[%s209 + $0x128] sm:$0xf]
      %v299 = vld [vmem:[%s209 + $0x12c] sm:$0xf]
      %v300 = vld [vmem:[%s209 + $0x130] sm:$0xf]
      %v301 = vld [vmem:[%s209 + $0x134] sm:$0xf]
      %v302 = vld [vmem:[%s209 + $0x138] sm:$0xf]
      %v303 = vld [vmem:[%s209 + $0x13c] sm:$0xf]
      %v304 = vld [vmem:[%s209 + $0x140] sm:$0xf]
      %v305 = vld [vmem:[%s209 + $0x144] sm:$0xf]
      %v306 = vld [vmem:[%s209 + $0x148] sm:$0xf]
      %v307 = vld [vmem:[%s209 + $0x14c] sm:$0xf]
      %v308 = vld [vmem:[%s209 + $0x150] sm:$0xf]
      %v309 = vld [vmem:[%s209 + $0x154] sm:$0xf]
      %v310 = vld [vmem:[%s209 + $0x158] sm:$0xf]
      %v311 = vld [vmem:[%s209 + $0x15c] sm:$0xf]
      %v312 = vld [vmem:[%s209 + $0x160] sm:$0xf]
      %v313 = vld [vmem:[%s209 + $0x164] sm:$0xf]
      %v314 = vld [vmem:[%s209 + $0x168] sm:$0xf]
      %v315 = vld [vmem:[%s209 + $0x16c] sm:$0xf]
      %v316 = vld [vmem:[%s209 + $0x170] sm:$0xf]
      %v317 = vld [vmem:[%s209 + $0x174] sm:$0xf]
      %v318 = vld [vmem:[%s209 + $0x178] sm:$0xf]
      %v319 = vld [vmem:[%s209 + $0x17c] sm:$0xf]
      %v320 = vld [vmem:[%s209 + $0x180] sm:$0xf]
      %v321 = vld [vmem:[%s209 + $0x184] sm:$0xf]
      %v322 = vld [vmem:[%s209 + $0x188] sm:$0xf]
      %v323 = vld [vmem:[%s209 + $0x18c] sm:$0xf]
      %v324 = vld [vmem:[%s209 + $0x190] sm:$0xf]
      %v325 = vld [vmem:[%s209 + $0x194] sm:$0xf]
      %v326 = vld [vmem:[%s209 + $0x198] sm:$0xf]
      %v327 = vld [vmem:[%s209 + $0x19c] sm:$0xf]
      %v328 = vld [vmem:[%s209 + $0x1a0] sm:$0xf]
      %v329 = vld [vmem:[%s209 + $0x1a4] sm:$0xf]
      %v330 = vld [vmem:[%s209 + $0x1a8] sm:$0xf]
      %v331 = vld [vmem:[%s209 + $0x1ac] sm:$0xf]
      %v332 = vld [vmem:[%s209 + $0x1b0] sm:$0xf]
      %v333 = vld [vmem:[%s209 + $0x1b4] sm:$0xf]
      %v334 = vld [vmem:[%s209 + $0x1b8] sm:$0xf]
      %v335 = vld [vmem:[%s209 + $0x1bc] sm:$0xf]
      %v336 = vld [vmem:[%s209 + $0x1c0] sm:$0xf]
      %v337 = vld [vmem:[%s209 + $0x1c4] sm:$0xf]
      %v338 = vld [vmem:[%s209 + $0x1c8] sm:$0xf]
      %v339 = vld [vmem:[%s209 + $0x1cc] sm:$0xf]
      %v340 = vld [vmem:[%s209 + $0x1d0] sm:$0xf]
      %v341 = vld [vmem:[%s209 + $0x1d4] sm:$0xf]
      %v342 = vld [vmem:[%s209 + $0x1d8] sm:$0xf]
      %v343 = vld [vmem:[%s209 + $0x1dc] sm:$0xf]
      %v344 = vld [vmem:[%s209 + $0x1e0] sm:$0xf]
      %v345 = vld [vmem:[%s209 + $0x1e4] sm:$0xf]
      %v346 = vld [vmem:[%s209 + $0x1e8] sm:$0xf]
      %v347 = vld [vmem:[%s209 + $0x1ec] sm:$0xf]
      %v348 = vld [vmem:[%s209 + $0x1f0] sm:$0xf]
      %v349 = vld [vmem:[%s209 + $0x1f4] sm:$0xf]
      %v350 = vld [vmem:[%s209 + $0x1f8] sm:$0xf]
      %v351 = vld [vmem:[%s209 + $0x1fc] sm:$0xf]
      %v352 = vld [vmem:[%s209 + $0x200] sm:$0xf]
      %v353 = vld [vmem:[%s209 + $0x204] sm:$0xf]
      %v354 = vld [vmem:[%s209 + $0x208] sm:$0xf]
      %v355 = vld [vmem:[%s209 + $0x20c] sm:$0xf]
      %v356 = vld [vmem:[%s209 + $0x210] sm:$0xf]
      %v357 = vld [vmem:[%s209 + $0x214] sm:$0xf]
      %v358 = vld [vmem:[%s209 + $0x218] sm:$0xf]
      %v359 = vld [vmem:[%s209 + $0x21c] sm:$0xf]
      %v360 = vld [vmem:[%s209 + $0x220] sm:$0xf]
      %v361 = vld [vmem:[%s209 + $0x224] sm:$0xf]
      %v362 = vld [vmem:[%s209 + $0x228] sm:$0xf]
      %v363 = vld [vmem:[%s209 + $0x22c] sm:$0xf]
      %v364 = vld [vmem:[%s209 + $0x230] sm:$0xf]
      %v365 = vld [vmem:[%s209 + $0x234] sm:$0xf]
      %v366 = vld [vmem:[%s209 + $0x238] sm:$0xf]
      %v367 = vld [vmem:[%s209 + $0x23c] sm:$0xf]
      %v368 = vld [vmem:[%s209 + $0x240] sm:$0xf]
      %v369 = vld [vmem:[%s209 + $0x244] sm:$0xf]
      %v370 = vld [vmem:[%s209 + $0x248] sm:$0xf]
      %v371 = vld [vmem:[%s209 + $0x24c] sm:$0xf]
      %v372 = vld [vmem:[%s209 + $0x250] sm:$0xf]
      %v373 = vld [vmem:[%s209 + $0x254] sm:$0xf]
      %v374 = vld [vmem:[%s209 + $0x258] sm:$0xf]
      %v375 = vld [vmem:[%s209 + $0x25c] sm:$0xf]
      %v376 = vld [vmem:[%s209 + $0x260] sm:$0xf]
      %v377 = vld [vmem:[%s209 + $0x264] sm:$0xf]
      %v378 = vld [vmem:[%s209 + $0x268] sm:$0xf]
      %v379 = vld [vmem:[%s209 + $0x26c] sm:$0xf]
      %v380 = vld [vmem:[%s209 + $0x270] sm:$0xf]
      %v381 = vld [vmem:[%s209 + $0x274] sm:$0xf]
      %v382 = vld [vmem:[%s209 + $0x278] sm:$0xf]
      %v383 = vld [vmem:[%s209 + $0x27c] sm:$0xf]
      %v384 = vld [vmem:[%s209 + $0x280] sm:$0xf]
      %v385 = vld [vmem:[%s209 + $0x284] sm:$0xf]
      %v386 = vld [vmem:[%s209 + $0x288] sm:$0xf]
      %v387 = vld [vmem:[%s209 + $0x28c] sm:$0xf]
      %v388 = vld [vmem:[%s209 + $0x290] sm:$0xf]
      %v389 = vld [vmem:[%s209 + $0x294] sm:$0xf]
      %v390 = vld [vmem:[%s209 + $0x298] sm:$0xf]
      %v391 = vld [vmem:[%s209 + $0x29c] sm:$0xf]
      %v392 = vld [vmem:[%s209 + $0x2a0] sm:$0xf]
      %v393 = vld [vmem:[%s209 + $0x2a4] sm:$0xf]
      %v394 = vld [vmem:[%s209 + $0x2a8] sm:$0xf]
      %v395 = vld [vmem:[%s209 + $0x2ac] sm:$0xf]
      %v396 = vld [vmem:[%s209 + $0x2b0] sm:$0xf]
      %v397 = vld [vmem:[%s209 + $0x2b4] sm:$0xf]
      %v398 = vld [vmem:[%s209 + $0x2b8] sm:$0xf]
      %v399 = vld [vmem:[%s209 + $0x2bc] sm:$0xf]
      %v400 = vld [vmem:[%s209 + $0x2c0] sm:$0xf]
      %v401 = vld [vmem:[%s209 + $0x2c4] sm:$0xf]
      %v402 = vld [vmem:[%s209 + $0x2c8] sm:$0xf]
      %v403 = vld [vmem:[%s209 + $0x2cc] sm:$0xf]
      %v404 = vld [vmem:[%s209 + $0x2d0] sm:$0xf]
      %v405 = vld [vmem:[%s209 + $0x2d4] sm:$0xf]
      %v406 = vld [vmem:[%s209 + $0x2d8] sm:$0xf]
      %v407 = vld [vmem:[%s209 + $0x2dc] sm:$0xf]
      %v408 = vld [vmem:[%s209 + $0x2e0] sm:$0xf]
      %v409 = vld [vmem:[%s209 + $0x2e4] sm:$0xf]
      %v410 = vld [vmem:[%s209 + $0x2e8] sm:$0xf]
      %v411 = vld [vmem:[%s209 + $0x2ec] sm:$0xf]
      %v412 = vld [vmem:[%s209 + $0x2f0] sm:$0xf]
      %v413 = vld [vmem:[%s209 + $0x2f4] sm:$0xf]
      %v414 = vld [vmem:[%s209 + $0x2f8] sm:$0xf]
      %v415 = vld [vmem:[%s209 + $0x2fc] sm:$0xf]
      %v416 = vld [vmem:[%s209 + $0x300] sm:$0xf]
      %v417 = vld [vmem:[%s209 + $0x304] sm:$0xf]
      %v418 = vld [vmem:[%s209 + $0x308] sm:$0xf]
      %v419 = vld [vmem:[%s209 + $0x30c] sm:$0xf]
      %v420 = vld [vmem:[%s209 + $0x310] sm:$0xf]
      %v421 = vld [vmem:[%s209 + $0x314] sm:$0xf]
      %v422 = vld [vmem:[%s209 + $0x318] sm:$0xf]
      %v423 = vld [vmem:[%s209 + $0x31c] sm:$0xf]
      %v424 = vld [vmem:[%s209 + $0x320] sm:$0xf]
      %v425 = vld [vmem:[%s209 + $0x324] sm:$0xf]
      %v426 = vld [vmem:[%s209 + $0x328] sm:$0xf]
      %v427 = vld [vmem:[%s209 + $0x32c] sm:$0xf]
      %v428 = vld [vmem:[%s209 + $0x330] sm:$0xf]
      %v429 = vld [vmem:[%s209 + $0x334] sm:$0xf]
      %v430 = vld [vmem:[%s209 + $0x338] sm:$0xf]
      %v431 = vld [vmem:[%s209 + $0x33c] sm:$0xf]
      %v432 = vld [vmem:[%s209 + $0x340] sm:$0xf]
      %v433 = vld [vmem:[%s209 + $0x344] sm:$0xf]
      %v434 = vld [vmem:[%s209 + $0x348] sm:$0xf]
      %v435 = vld [vmem:[%s209 + $0x34c] sm:$0xf]
      %v436 = vld [vmem:[%s209 + $0x350] sm:$0xf]
      %v437 = vld [vmem:[%s209 + $0x354] sm:$0xf]
      %v438 = vld [vmem:[%s209 + $0x358] sm:$0xf]
      %v439 = vld [vmem:[%s209 + $0x35c] sm:$0xf]
      %v440 = vld [vmem:[%s209 + $0x360] sm:$0xf]
      %v441 = vld [vmem:[%s209 + $0x364] sm:$0xf]
      %v442 = vld [vmem:[%s209 + $0x368] sm:$0xf]
      %v443 = vld [vmem:[%s209 + $0x36c] sm:$0xf]
      %v444 = vld [vmem:[%s209 + $0x370] sm:$0xf]
      %v445 = vld [vmem:[%s209 + $0x374] sm:$0xf]
      %v446 = vld [vmem:[%s209 + $0x378] sm:$0xf]
      %v447 = vld [vmem:[%s209 + $0x37c] sm:$0xf]
      %v448 = vld [vmem:[%s209 + $0x380] sm:$0xf]
      %v449 = vld [vmem:[%s209 + $0x384] sm:$0xf]
      %v450 = vld [vmem:[%s209 + $0x388] sm:$0xf]
      %v451 = vld [vmem:[%s209 + $0x38c] sm:$0xf]
      %v452 = vld [vmem:[%s209 + $0x390] sm:$0xf]
      %v453 = vld [vmem:[%s209 + $0x394] sm:$0xf]
      %v454 = vld [vmem:[%s209 + $0x398] sm:$0xf]
      %v455 = vld [vmem:[%s209 + $0x39c] sm:$0xf]
      %v456 = vld [vmem:[%s209 + $0x3a0] sm:$0xf]
      %v457 = vld [vmem:[%s209 + $0x3a4] sm:$0xf]
      %v458 = vld [vmem:[%s209 + $0x3a8] sm:$0xf]
      %v459 = vld [vmem:[%s209 + $0x3ac] sm:$0xf]
      %v460 = vld [vmem:[%s209 + $0x3b0] sm:$0xf]
      %v461 = vld [vmem:[%s209 + $0x3b4] sm:$0xf]
      %v462 = vld [vmem:[%s209 + $0x3b8] sm:$0xf]
      %v463 = vld [vmem:[%s209 + $0x3bc] sm:$0xf]
      %v464 = vld [vmem:[%s209 + $0x3c0] sm:$0xf]
      %v465 = vld [vmem:[%s209 + $0x3c4] sm:$0xf]
      %v466 = vld [vmem:[%s209 + $0x3c8] sm:$0xf]
      %v467 = vld [vmem:[%s209 + $0x3cc] sm:$0xf]
      %v468 = vld [vmem:[%s209 + $0x3d0] sm:$0xf]
      %v469 = vld [vmem:[%s209 + $0x3d4] sm:$0xf]
      %v470 = vld [vmem:[%s209 + $0x3d8] sm:$0xf]
      %v471 = vld [vmem:[%s209 + $0x3dc] sm:$0xf]
      %v472 = vld [vmem:[%s209 + $0x3e0] sm:$0xf]
      %v473 = vld [vmem:[%s209 + $0x3e4] sm:$0xf]
      %v474 = vld [vmem:[%s209 + $0x3e8] sm:$0xf]
      %v475 = vld [vmem:[%s209 + $0x3ec] sm:$0xf]
      %v476 = vld [vmem:[%s209 + $0x3f0] sm:$0xf]
      %v477 = vld [vmem:[%s209 + $0x3f4] sm:$0xf]
      %v478 = vld [vmem:[%s209 + $0x3f8] sm:$0xf]
      %v479 = vld [vmem:[%s209 + $0x3fc] sm:$0xf]
      %v480 = vld [vmem:[%s1] sm:$0xf]
      %v481 = vld [vmem:[%s1 + $0x4] sm:$0xf]
      %v482 = vld [vmem:[%s1 + $0x8] sm:$0xf]
      %v483 = vld [vmem:[%s1 + $0xc] sm:$0xf]
      %v484 = vld [vmem:[%s1 + $0x10] sm:$0xf]
      %v485 = vld [vmem:[%s1 + $0x14] sm:$0xf]
      %v486 = vld [vmem:[%s1 + $0x18] sm:$0xf]
      %v487 = vld [vmem:[%s1 + $0x1c] sm:$0xf]
      %v488 = vld [vmem:[%s1 + $0x20] sm:$0xf]
      %v489 = vld [vmem:[%s1 + $0x24] sm:$0xf]
      %v490 = vld [vmem:[%s1 + $0x28] sm:$0xf]
      %v491 = vld [vmem:[%s1 + $0x2c] sm:$0xf]
      %v492 = vld [vmem:[%s1 + $0x30] sm:$0xf]
      %v493 = vld [vmem:[%s1 + $0x34] sm:$0x3]
      %v494 = vld [vmem:[%s2] sm:$0x1]
      %v496 = vperm.slane %v494, 0
      %v754 = vunpack.c.l.b16 %v224
      %v755 = vunpack.c.l.b16 %v225
      %v756 = vunpack.c.l.b16 %v226
      %v757 = vunpack.c.l.b16 %v227
      %v758 = vunpack.c.l.b16 %v228
      %v759 = vunpack.c.l.b16 %v229
      %v760 = vunpack.c.l.b16 %v230
      %v761 = vunpack.c.l.b16 %v231
      %v762 = vunpack.c.l.b16 %v232
      %v763 = vunpack.c.l.b16 %v233
      %v764 = vunpack.c.l.b16 %v234
      %v765 = vunpack.c.l.b16 %v235
      %v766 = vunpack.c.l.b16 %v236
      %v767 = vunpack.c.l.b16 %v237
      %v768 = vunpack.c.l.b16 %v238
      %v769 = vunpack.c.l.b16 %v239
      %v770 = vunpack.c.l.b16 %v240
      %v771 = vunpack.c.l.b16 %v241
      %v772 = vunpack.c.l.b16 %v242
      %v773 = vunpack.c.l.b16 %v243
      %v774 = vunpack.c.l.b16 %v244
      %v775 = vunpack.c.l.b16 %v245
      %v776 = vunpack.c.l.b16 %v246
      %v777 = vunpack.c.l.b16 %v247
      %v778 = vunpack.c.l.b16 %v248
      %v779 = vunpack.c.l.b16 %v249
      %v780 = vunpack.c.l.b16 %v250
      %v781 = vunpack.c.l.b16 %v251
      %v782 = vunpack.c.l.b16 %v252
      %v783 = vunpack.c.l.b16 %v253
      %v784 = vunpack.c.l.b16 %v254
      %v785 = vunpack.c.l.b16 %v255
      %v786 = vunpack.c.l.b16 %v256
      %v787 = vunpack.c.l.b16 %v257
      %v788 = vunpack.c.l.b16 %v258
      %v789 = vunpack.c.l.b16 %v259
      %v790 = vunpack.c.l.b16 %v260
      %v791 = vunpack.c.l.b16 %v261
      %v792 = vunpack.c.l.b16 %v262
      %v793 = vunpack.c.l.b16 %v263
      %v794 = vunpack.c.l.b16 %v264
      %v795 = vunpack.c.l.b16 %v265
      %v796 = vunpack.c.l.b16 %v266
      %v797 = vunpack.c.l.b16 %v267
      %v798 = vunpack.c.l.b16 %v268
      %v799 = vunpack.c.l.b16 %v269
      %v800 = vunpack.c.l.b16 %v270
      %v801 = vunpack.c.l.b16 %v271
      %v802 = vunpack.c.l.b16 %v272
      %v803 = vunpack.c.l.b16 %v273
      %v804 = vunpack.c.l.b16 %v274
      %v805 = vunpack.c.l.b16 %v275
      %v806 = vunpack.c.l.b16 %v276
      %v807 = vunpack.c.l.b16 %v277
      %v808 = vunpack.c.l.b16 %v278
      %v809 = vunpack.c.l.b16 %v279
      %v810 = vunpack.c.l.b16 %v280
      %v811 = vunpack.c.l.b16 %v281
      %v812 = vunpack.c.l.b16 %v282
      %v813 = vunpack.c.l.b16 %v283
      %v814 = vunpack.c.l.b16 %v284
      %v815 = vunpack.c.l.b16 %v285
      %v816 = vunpack.c.l.b16 %v286
      %v817 = vunpack.c.l.b16 %v287
      %v818 = vunpack.c.l.b16 %v288
      %v819 = vunpack.c.l.b16 %v289
      %v820 = vunpack.c.l.b16 %v290
      %v821 = vunpack.c.l.b16 %v291
      %v822 = vunpack.c.l.b16 %v292
      %v823 = vunpack.c.l.b16 %v293
      %v824 = vunpack.c.l.b16 %v294
      %v825 = vunpack.c.l.b16 %v295
      %v826 = vunpack.c.l.b16 %v296
      %v827 = vunpack.c.l.b16 %v297
      %v828 = vunpack.c.l.b16 %v298
      %v829 = vunpack.c.l.b16 %v299
      %v830 = vunpack.c.l.b16 %v300
      %v831 = vunpack.c.l.b16 %v301
      %v832 = vunpack.c.l.b16 %v302
      %v833 = vunpack.c.l.b16 %v303
      %v834 = vunpack.c.l.b16 %v304
      %v835 = vunpack.c.l.b16 %v305
      %v836 = vunpack.c.l.b16 %v306
      %v837 = vunpack.c.l.b16 %v307
      %v838 = vunpack.c.l.b16 %v308
      %v839 = vunpack.c.l.b16 %v309
      %v840 = vunpack.c.l.b16 %v310
      %v841 = vunpack.c.l.b16 %v311
      %v842 = vunpack.c.l.b16 %v312
      %v843 = vunpack.c.l.b16 %v313
      %v844 = vunpack.c.l.b16 %v314
      %v845 = vunpack.c.l.b16 %v315
      %v846 = vunpack.c.l.b16 %v316
      %v847 = vunpack.c.l.b16 %v317
      %v848 = vunpack.c.l.b16 %v318
      %v849 = vunpack.c.l.b16 %v319
      %v850 = vunpack.c.l.b16 %v320
      %v851 = vunpack.c.l.b16 %v321
      %v852 = vunpack.c.l.b16 %v322
      %v853 = vunpack.c.l.b16 %v323
      %v854 = vunpack.c.l.b16 %v324
      %v855 = vunpack.c.l.b16 %v325
      %v856 = vunpack.c.l.b16 %v326
      %v857 = vunpack.c.l.b16 %v327
      %v858 = vunpack.c.l.b16 %v328
      %v859 = vunpack.c.l.b16 %v329
      %v860 = vunpack.c.l.b16 %v330
      %v861 = vunpack.c.l.b16 %v331
      %v862 = vunpack.c.l.b16 %v332
      %v863 = vunpack.c.l.b16 %v333
      %v864 = vunpack.c.l.b16 %v334
      %v865 = vunpack.c.l.b16 %v335
      %v866 = vunpack.c.l.b16 %v336
      %v867 = vunpack.c.l.b16 %v337
      %v868 = vunpack.c.l.b16 %v338
      %v869 = vunpack.c.l.b16 %v339
      %v870 = vunpack.c.l.b16 %v340
      %v871 = vunpack.c.l.b16 %v341
      %v872 = vunpack.c.l.b16 %v342
      %v873 = vunpack.c.l.b16 %v343
      %v874 = vunpack.c.l.b16 %v344
      %v875 = vunpack.c.l.b16 %v345
      %v876 = vunpack.c.l.b16 %v346
      %v877 = vunpack.c.l.b16 %v347
      %v878 = vunpack.c.l.b16 %v348
      %v879 = vunpack.c.l.b16 %v349
      %v880 = vunpack.c.l.b16 %v350
      %v881 = vunpack.c.l.b16 %v351
      %v882 = vunpack.c.l.b16 %v352
      %v883 = vunpack.c.l.b16 %v353
      %v884 = vunpack.c.l.b16 %v354
      %v885 = vunpack.c.l.b16 %v355
      %v886 = vunpack.c.l.b16 %v356
      %v887 = vunpack.c.l.b16 %v357
      %v888 = vunpack.c.l.b16 %v358
      %v889 = vunpack.c.l.b16 %v359
      %v890 = vunpack.c.l.b16 %v360
      %v891 = vunpack.c.l.b16 %v361
      %v892 = vunpack.c.l.b16 %v362
      %v893 = vunpack.c.l.b16 %v363
      %v894 = vunpack.c.l.b16 %v364
      %v895 = vunpack.c.l.b16 %v365
      %v896 = vunpack.c.l.b16 %v366
      %v897 = vunpack.c.l.b16 %v367
      %v898 = vunpack.c.l.b16 %v368
      %v899 = vunpack.c.l.b16 %v369
      %v900 = vunpack.c.l.b16 %v370
      %v901 = vunpack.c.l.b16 %v371
      %v902 = vunpack.c.l.b16 %v372
      %v903 = vunpack.c.l.b16 %v373
      %v904 = vunpack.c.l.b16 %v374
      %v905 = vunpack.c.l.b16 %v375
      %v906 = vunpack.c.l.b16 %v376
      %v907 = vunpack.c.l.b16 %v377
      %v908 = vunpack.c.l.b16 %v378
      %v909 = vunpack.c.l.b16 %v379
      %v910 = vunpack.c.l.b16 %v380
      %v911 = vunpack.c.l.b16 %v381
      %v912 = vunpack.c.l.b16 %v382
      %v913 = vunpack.c.l.b16 %v383
      %v914 = vunpack.c.l.b16 %v384
      %v915 = vunpack.c.l.b16 %v385
      %v916 = vunpack.c.l.b16 %v386
      %v917 = vunpack.c.l.b16 %v387
      %v918 = vunpack.c.l.b16 %v388
      %v919 = vunpack.c.l.b16 %v389
      %v920 = vunpack.c.l.b16 %v390
      %v921 = vunpack.c.l.b16 %v391
      %v922 = vunpack.c.l.b16 %v392
      %v923 = vunpack.c.l.b16 %v393
      %v924 = vunpack.c.l.b16 %v394
      %v925 = vunpack.c.l.b16 %v395
      %v926 = vunpack.c.l.b16 %v396
      %v927 = vunpack.c.l.b16 %v397
      %v928 = vunpack.c.l.b16 %v398
      %v929 = vunpack.c.l.b16 %v399
      %v930 = vunpack.c.l.b16 %v400
      %v931 = vunpack.c.l.b16 %v401
      %v932 = vunpack.c.l.b16 %v402
      %v933 = vunpack.c.l.b16 %v403
      %v934 = vunpack.c.l.b16 %v404
      %v935 = vunpack.c.l.b16 %v405
      %v936 = vunpack.c.l.b16 %v406
      %v937 = vunpack.c.l.b16 %v407
      %v938 = vunpack.c.l.b16 %v408
      %v939 = vunpack.c.l.b16 %v409
      %v940 = vunpack.c.l.b16 %v410
      %v941 = vunpack.c.l.b16 %v411
      %v942 = vunpack.c.l.b16 %v412
      %v943 = vunpack.c.l.b16 %v413
      %v944 = vunpack.c.l.b16 %v414
      %v945 = vunpack.c.l.b16 %v415
      %v946 = vunpack.c.l.b16 %v416
      %v947 = vunpack.c.l.b16 %v417
      %v948 = vunpack.c.l.b16 %v418
      %v949 = vunpack.c.l.b16 %v419
      %v950 = vunpack.c.l.b16 %v420
      %v951 = vunpack.c.l.b16 %v421
      %v952 = vunpack.c.l.b16 %v422
      %v953 = vunpack.c.l.b16 %v423
      %v954 = vunpack.c.l.b16 %v424
      %v955 = vunpack.c.l.b16 %v425
      %v956 = vunpack.c.l.b16 %v426
      %v957 = vunpack.c.l.b16 %v427
      %v958 = vunpack.c.l.b16 %v428
      %v959 = vunpack.c.l.b16 %v429
      %v960 = vunpack.c.l.b16 %v430
      %v961 = vunpack.c.l.b16 %v431
      %v962 = vunpack.c.l.b16 %v432
      %v963 = vunpack.c.l.b16 %v433
      %v964 = vunpack.c.l.b16 %v434
      %v965 = vunpack.c.l.b16 %v435
      %v966 = vunpack.c.l.b16 %v436
      %v967 = vunpack.c.l.b16 %v437
      %v968 = vunpack.c.l.b16 %v438
      %v969 = vunpack.c.l.b16 %v439
      %v970 = vunpack.c.l.b16 %v440
      %v971 = vunpack.c.l.b16 %v441
      %v972 = vunpack.c.l.b16 %v442
      %v973 = vunpack.c.l.b16 %v443
      %v974 = vunpack.c.l.b16 %v444
      %v975 = vunpack.c.l.b16 %v445
      %v976 = vunpack.c.l.b16 %v446
      %v977 = vunpack.c.l.b16 %v447
      %v978 = vunpack.c.l.b16 %v448
      %v979 = vunpack.c.l.b16 %v449
      %v980 = vunpack.c.l.b16 %v450
      %v981 = vunpack.c.l.b16 %v451
      %v982 = vunpack.c.l.b16 %v452
      %v983 = vunpack.c.l.b16 %v453
      %v984 = vunpack.c.l.b16 %v454
      %v985 = vunpack.c.l.b16 %v455
      %v986 = vunpack.c.l.b16 %v456
      %v987 = vunpack.c.l.b16 %v457
      %v988 = vunpack.c.l.b16 %v458
      %v989 = vunpack.c.l.b16 %v459
      %v990 = vunpack.c.l.b16 %v460
      %v991 = vunpack.c.l.b16 %v461
      %v992 = vunpack.c.l.b16 %v462
      %v993 = vunpack.c.l.b16 %v463
      %v994 = vunpack.c.l.b16 %v464
      %v995 = vunpack.c.l.b16 %v465
      %v996 = vunpack.c.l.b16 %v466
      %v997 = vunpack.c.l.b16 %v467
      %v998 = vunpack.c.l.b16 %v468
      %v999 = vunpack.c.l.b16 %v469
      %v1000 = vunpack.c.l.b16 %v470
      %v1001 = vunpack.c.l.b16 %v471
      %v1002 = vunpack.c.l.b16 %v472
      %v1003 = vunpack.c.l.b16 %v473
      %v1004 = vunpack.c.l.b16 %v474
      %v1005 = vunpack.c.l.b16 %v475
      %v1006 = vunpack.c.l.b16 %v476
      %v1007 = vunpack.c.l.b16 %v477
      %v1008 = vunpack.c.l.b16 %v478
      %v1009 = vunpack.c.l.b16 %v479
      %v1010 = vpack.c.b16 %v755, %v754
      %v1011 = vpack.c.b16 %v757, %v756
      %v1012 = vpack.c.b16 %v759, %v758
      %v1013 = vpack.c.b16 %v761, %v760
      %v1014 = vpack.c.b16 %v763, %v762
      %v1015 = vpack.c.b16 %v765, %v764
      %v1016 = vpack.c.b16 %v767, %v766
      %v1017 = vpack.c.b16 %v769, %v768
      %v1018 = vpack.c.b16 %v771, %v770
      %v1019 = vpack.c.b16 %v773, %v772
      %v1020 = vpack.c.b16 %v775, %v774
      %v1021 = vpack.c.b16 %v777, %v776
      %v1022 = vpack.c.b16 %v779, %v778
      %v1023 = vpack.c.b16 %v781, %v780
      %v1024 = vpack.c.b16 %v783, %v782
      %v1025 = vpack.c.b16 %v785, %v784
      %v1026 = vpack.c.b16 %v787, %v786
      %v1027 = vpack.c.b16 %v789, %v788
      %v1028 = vpack.c.b16 %v791, %v790
      %v1029 = vpack.c.b16 %v793, %v792
      %v1030 = vpack.c.b16 %v795, %v794
      %v1031 = vpack.c.b16 %v797, %v796
      %v1032 = vpack.c.b16 %v799, %v798
      %v1033 = vpack.c.b16 %v801, %v800
      %v1034 = vpack.c.b16 %v803, %v802
      %v1035 = vpack.c.b16 %v805, %v804
      %v1036 = vpack.c.b16 %v807, %v806
      %v1037 = vpack.c.b16 %v809, %v808
      %v1038 = vpack.c.b16 %v811, %v810
      %v1039 = vpack.c.b16 %v813, %v812
      %v1040 = vpack.c.b16 %v815, %v814
      %v1041 = vpack.c.b16 %v817, %v816
      %v1042 = vpack.c.b16 %v819, %v818
      %v1043 = vpack.c.b16 %v821, %v820
      %v1044 = vpack.c.b16 %v823, %v822
      %v1045 = vpack.c.b16 %v825, %v824
      %v1046 = vpack.c.b16 %v827, %v826
      %v1047 = vpack.c.b16 %v829, %v828
      %v1048 = vpack.c.b16 %v831, %v830
      %v1049 = vpack.c.b16 %v833, %v832
      %v1050 = vpack.c.b16 %v835, %v834
      %v1051 = vpack.c.b16 %v837, %v836
      %v1052 = vpack.c.b16 %v839, %v838
      %v1053 = vpack.c.b16 %v841, %v840
      %v1054 = vpack.c.b16 %v843, %v842
      %v1055 = vpack.c.b16 %v845, %v844
      %v1056 = vpack.c.b16 %v847, %v846
      %v1057 = vpack.c.b16 %v849, %v848
      %v1058 = vpack.c.b16 %v851, %v850
      %v1059 = vpack.c.b16 %v853, %v852
      %v1060 = vpack.c.b16 %v855, %v854
      %v1061 = vpack.c.b16 %v857, %v856
      %v1062 = vpack.c.b16 %v859, %v858
      %v1063 = vpack.c.b16 %v861, %v860
      %v1064 = vpack.c.b16 %v863, %v862
      %v1065 = vpack.c.b16 %v865, %v864
      %v1066 = vpack.c.b16 %v867, %v866
      %v1067 = vpack.c.b16 %v869, %v868
      %v1068 = vpack.c.b16 %v871, %v870
      %v1069 = vpack.c.b16 %v873, %v872
      %v1070 = vpack.c.b16 %v875, %v874
      %v1071 = vpack.c.b16 %v877, %v876
      %v1072 = vpack.c.b16 %v879, %v878
      %v1073 = vpack.c.b16 %v881, %v880
      %v1074 = vpack.c.b16 %v883, %v882
      %v1075 = vpack.c.b16 %v885, %v884
      %v1076 = vpack.c.b16 %v887, %v886
      %v1077 = vpack.c.b16 %v889, %v888
      %v1078 = vpack.c.b16 %v891, %v890
      %v1079 = vpack.c.b16 %v893, %v892
      %v1080 = vpack.c.b16 %v895, %v894
      %v1081 = vpack.c.b16 %v897, %v896
      %v1082 = vpack.c.b16 %v899, %v898
      %v1083 = vpack.c.b16 %v901, %v900
      %v1084 = vpack.c.b16 %v903, %v902
      %v1085 = vpack.c.b16 %v905, %v904
      %v1086 = vpack.c.b16 %v907, %v906
      %v1087 = vpack.c.b16 %v909, %v908
      %v1088 = vpack.c.b16 %v911, %v910
      %v1089 = vpack.c.b16 %v913, %v912
      %v1090 = vpack.c.b16 %v915, %v914
      %v1091 = vpack.c.b16 %v917, %v916
      %v1092 = vpack.c.b16 %v919, %v918
      %v1093 = vpack.c.b16 %v921, %v920
      %v1094 = vpack.c.b16 %v923, %v922
      %v1095 = vpack.c.b16 %v925, %v924
      %v1096 = vpack.c.b16 %v927, %v926
      %v1097 = vpack.c.b16 %v929, %v928
      %v1098 = vpack.c.b16 %v931, %v930
      %v1099 = vpack.c.b16 %v933, %v932
      %v1100 = vpack.c.b16 %v935, %v934
      %v1101 = vpack.c.b16 %v937, %v936
      %v1102 = vpack.c.b16 %v939, %v938
      %v1103 = vpack.c.b16 %v941, %v940
      %v1104 = vpack.c.b16 %v943, %v942
      %v1105 = vpack.c.b16 %v945, %v944
      %v1106 = vpack.c.b16 %v947, %v946
      %v1107 = vpack.c.b16 %v949, %v948
      %v1108 = vpack.c.b16 %v951, %v950
      %v1109 = vpack.c.b16 %v953, %v952
      %v1110 = vpack.c.b16 %v955, %v954
      %v1111 = vpack.c.b16 %v957, %v956
      %v1112 = vpack.c.b16 %v959, %v958
      %v1113 = vpack.c.b16 %v961, %v960
      %v1114 = vpack.c.b16 %v963, %v962
      %v1115 = vpack.c.b16 %v965, %v964
      %v1116 = vpack.c.b16 %v967, %v966
      %v1117 = vpack.c.b16 %v969, %v968
      %v1118 = vpack.c.b16 %v971, %v970
      %v1119 = vpack.c.b16 %v973, %v972
      %v1120 = vpack.c.b16 %v975, %v974
      %v1121 = vpack.c.b16 %v977, %v976
      %v1122 = vpack.c.b16 %v979, %v978
      %v1123 = vpack.c.b16 %v981, %v980
      %v1124 = vpack.c.b16 %v983, %v982
      %v1125 = vpack.c.b16 %v985, %v984
      %v1126 = vpack.c.b16 %v987, %v986
      %v1127 = vpack.c.b16 %v989, %v988
      %v1128 = vpack.c.b16 %v991, %v990
      %v1129 = vpack.c.b16 %v993, %v992
      %v1130 = vpack.c.b16 %v995, %v994
      %v1131 = vpack.c.b16 %v997, %v996
      %v1132 = vpack.c.b16 %v999, %v998
      %v1133 = vpack.c.b16 %v1001, %v1000
      %v1134 = vpack.c.b16 %v1003, %v1002
      %v1135 = vpack.c.b16 %v1005, %v1004
      %v1136 = vpack.c.b16 %v1007, %v1006
      %v1137 = vpack.c.b16 %v1009, %v1008
      %v1152 = vunpack.c.l.b16 %v480
      %v1153 = vunpack.c.l.b16 %v481
      %v1154 = vunpack.c.l.b16 %v482
      %v1155 = vunpack.c.l.b16 %v483
      %v1156 = vunpack.c.l.b16 %v484
      %v1157 = vunpack.c.l.b16 %v485
      %v1158 = vunpack.c.l.b16 %v486
      %v1159 = vunpack.c.l.b16 %v487
      %v1160 = vunpack.c.l.b16 %v488
      %v1161 = vunpack.c.l.b16 %v489
      %v1162 = vunpack.c.l.b16 %v490
      %v1163 = vunpack.c.l.b16 %v491
      %v1164 = vunpack.c.l.b16 %v492
      %v1165 = vunpack.c.l.b16 %v493
      %v1166 = vpack.c.b16 %v1153, %v1152
      %v1167 = vpack.c.b16 %v1155, %v1154
      %v1168 = vpack.c.b16 %v1157, %v1156
      %v1169 = vpack.c.b16 %v1159, %v1158
      %v1170 = vpack.c.b16 %v1161, %v1160
      %v1171 = vpack.c.b16 %v1163, %v1162
      %v1172 = vpack.c.b16 %v1165, %v1164
      %vm1179 = vcmask 883712
      %v1181 = vsel %vm1179, %v1010, 0
      %v1184 = vsel %vm1179, %v1011, 0
      %v1187 = vsel %vm1179, %v1012, 0
      %v1190 = vsel %vm1179, %v1013, 0
      %v1193 = vsel %vm1179, %v1014, 0
      %v1196 = vsel %vm1179, %v1015, 0
      %v1199 = vsel %vm1179, %v1016, 0
      %v1202 = vsel %vm1179, %v1017, 0
      %v1205 = vsel %vm1179, %v1018, 0
      %v1208 = vsel %vm1179, %v1019, 0
      %v1211 = vsel %vm1179, %v1020, 0
      %v1214 = vsel %vm1179, %v1021, 0
      %v1217 = vsel %vm1179, %v1022, 0
      %v1220 = vsel %vm1179, %v1023, 0
      %v1223 = vsel %vm1179, %v1024, 0
      %v1226 = vsel %vm1179, %v1025, 0
      %v1229 = vsel %vm1179, %v1026, 0
      %v1232 = vsel %vm1179, %v1027, 0
      %v1235 = vsel %vm1179, %v1028, 0
      %v1238 = vsel %vm1179, %v1029, 0
      %v1241 = vsel %vm1179, %v1030, 0
      %v1244 = vsel %vm1179, %v1031, 0
      %v1247 = vsel %vm1179, %v1032, 0
      %v1250 = vsel %vm1179, %v1033, 0
      %v1253 = vsel %vm1179, %v1034, 0
      %v1256 = vsel %vm1179, %v1035, 0
      %v1259 = vsel %vm1179, %v1036, 0
      %v1262 = vsel %vm1179, %v1037, 0
      %v1265 = vsel %vm1179, %v1038, 0
      %v1268 = vsel %vm1179, %v1039, 0
      %v1271 = vsel %vm1179, %v1040, 0
      %v1274 = vsel %vm1179, %v1041, 0
      %v1277 = vsel %vm1179, %v1042, 0
      %v1280 = vsel %vm1179, %v1043, 0
      %v1283 = vsel %vm1179, %v1044, 0
      %v1286 = vsel %vm1179, %v1045, 0
      %v1289 = vsel %vm1179, %v1046, 0
      %v1292 = vsel %vm1179, %v1047, 0
      %v1295 = vsel %vm1179, %v1048, 0
      %v1298 = vsel %vm1179, %v1049, 0
      %v1301 = vsel %vm1179, %v1050, 0
      %v1304 = vsel %vm1179, %v1051, 0
      %v1307 = vsel %vm1179, %v1052, 0
      %v1310 = vsel %vm1179, %v1053, 0
      %v1313 = vsel %vm1179, %v1054, 0
      %v1316 = vsel %vm1179, %v1055, 0
      %v1319 = vsel %vm1179, %v1056, 0
      %v1322 = vsel %vm1179, %v1057, 0
      %v1325 = vsel %vm1179, %v1058, 0
      %v1328 = vsel %vm1179, %v1059, 0
      %v1331 = vsel %vm1179, %v1060, 0
      %v1334 = vsel %vm1179, %v1061, 0
      %v1337 = vsel %vm1179, %v1062, 0
      %v1340 = vsel %vm1179, %v1063, 0
      %v1343 = vsel %vm1179, %v1064, 0
      %v1346 = vsel %vm1179, %v1065, 0
      %v1349 = vsel %vm1179, %v1066, 0
      %v1352 = vsel %vm1179, %v1067, 0
      %v1355 = vsel %vm1179, %v1068, 0
      %v1358 = vsel %vm1179, %v1069, 0
      %v1361 = vsel %vm1179, %v1070, 0
      %v1364 = vsel %vm1179, %v1071, 0
      %v1367 = vsel %vm1179, %v1072, 0
      %v1370 = vsel %vm1179, %v1073, 0
      %v1373 = vsel %vm1179, %v1074, 0
      %v1376 = vsel %vm1179, %v1075, 0
      %v1379 = vsel %vm1179, %v1076, 0
      %v1382 = vsel %vm1179, %v1077, 0
      %v1385 = vsel %vm1179, %v1078, 0
      %v1388 = vsel %vm1179, %v1079, 0
      %v1391 = vsel %vm1179, %v1080, 0
      %v1394 = vsel %vm1179, %v1081, 0
      %v1397 = vsel %vm1179, %v1082, 0
      %v1400 = vsel %vm1179, %v1083, 0
      %v1403 = vsel %vm1179, %v1084, 0
      %v1406 = vsel %vm1179, %v1085, 0
      %v1409 = vsel %vm1179, %v1086, 0
      %v1412 = vsel %vm1179, %v1087, 0
      %v1415 = vsel %vm1179, %v1088, 0
      %v1418 = vsel %vm1179, %v1089, 0
      %v1421 = vsel %vm1179, %v1090, 0
      %v1424 = vsel %vm1179, %v1091, 0
      %v1427 = vsel %vm1179, %v1092, 0
      %v1430 = vsel %vm1179, %v1093, 0
      %v1433 = vsel %vm1179, %v1094, 0
      %v1436 = vsel %vm1179, %v1095, 0
      %v1439 = vsel %vm1179, %v1096, 0
      %v1442 = vsel %vm1179, %v1097, 0
      %v1445 = vsel %vm1179, %v1098, 0
      %v1448 = vsel %vm1179, %v1099, 0
      %v1451 = vsel %vm1179, %v1100, 0
      %v1454 = vsel %vm1179, %v1101, 0
      %v1457 = vsel %vm1179, %v1102, 0
      %v1460 = vsel %vm1179, %v1103, 0
      %v1463 = vsel %vm1179, %v1104, 0
      %v1466 = vsel %vm1179, %v1105, 0
      %v1469 = vsel %vm1179, %v1106, 0
      %v1472 = vsel %vm1179, %v1107, 0
      %v1475 = vsel %vm1179, %v1108, 0
      %v1478 = vsel %vm1179, %v1109, 0
      %v1481 = vsel %vm1179, %v1110, 0
      %v1484 = vsel %vm1179, %v1111, 0
      %v1487 = vsel %vm1179, %v1112, 0
      %v1490 = vsel %vm1179, %v1113, 0
      %v1493 = vsel %vm1179, %v1114, 0
      %v1496 = vsel %vm1179, %v1115, 0
      %v1499 = vsel %vm1179, %v1116, 0
      %v1502 = vsel %vm1179, %v1117, 0
      %v1505 = vsel %vm1179, %v1118, 0
      %v1508 = vsel %vm1179, %v1119, 0
      %v1511 = vsel %vm1179, %v1120, 0
      %v1514 = vsel %vm1179, %v1121, 0
      %v1517 = vsel %vm1179, %v1122, 0
      %v1520 = vsel %vm1179, %v1123, 0
      %v1523 = vsel %vm1179, %v1124, 0
      %v1526 = vsel %vm1179, %v1125, 0
      %v1529 = vsel %vm1179, %v1126, 0
      %v1532 = vsel %vm1179, %v1127, 0
      %v1535 = vsel %vm1179, %v1128, 0
      %v1538 = vsel %vm1179, %v1129, 0
      %v1541 = vsel %vm1179, %v1130, 0
      %v1544 = vsel %vm1179, %v1131, 0
      %v1547 = vsel %vm1179, %v1132, 0
      %v1550 = vsel %vm1179, %v1133, 0
      %v1553 = vsel %vm1179, %v1134, 0
      %v1556 = vsel %vm1179, %v1135, 0
      %v1559 = vsel %vm1179, %v1136, 0
      %v1562 = vsel %vm1179, %v1137, 0
      %vm1564 = vcmask 1045504
      %v1566 = vsel %vm1564, %v1172, 0
      %1568 = vmatpush.bf16.msra.mxu0 0
      %1569 = vmatpush.bf16.msra.mxu0 %v1566
      %1570 = vmatpush.bf16.msra.mxu0 %v1171
      %1571 = vmatpush.bf16.msra.mxu0 %v1170
      %1572 = vmatpush.bf16.msra.mxu0 %v1169
      %1573 = vmatpush.bf16.msra.mxu0 %v1168
      %1574 = vmatpush.bf16.msra.mxu0 %v1167
      %1575 = vmatpush.bf16.msra.mxu0 %v1166
      %1576 = vmatmul.bf16.gmra.mxu0 %v1181
      %v1577 = vpop.f32.mrf.mxu0
      %v1578 = vadd.f32 %v496, %v1577
      %v1579 = vpop.f32.mrf.mxu0
      %v1580 = vadd.f32 %v496, %v1579
      %1581 = vmatmul.bf16.gmra.mxu0 %v1184
      %v1582 = vpop.f32.mrf.mxu0
      %v1583 = vadd.f32 %v496, %v1582
      %v1584 = vpop.f32.mrf.mxu0
      %v1585 = vadd.f32 %v496, %v1584
      %1586 = vmatmul.bf16.gmra.mxu0 %v1187
      %v1587 = vpop.f32.mrf.mxu0
      %v1588 = vadd.f32 %v496, %v1587
      %v1589 = vpop.f32.mrf.mxu0
      %v1590 = vadd.f32 %v496, %v1589
      %1591 = vmatmul.bf16.gmra.mxu0 %v1190
      %v1592 = vpop.f32.mrf.mxu0
      %v1593 = vadd.f32 %v496, %v1592
      %v1594 = vpop.f32.mrf.mxu0
      %v1595 = vadd.f32 %v496, %v1594
      %1596 = vmatmul.bf16.gmra.mxu0 %v1193
      %v1597 = vpop.f32.mrf.mxu0
      %v1598 = vadd.f32 %v496, %v1597
      %v1599 = vpop.f32.mrf.mxu0
      %v1600 = vadd.f32 %v496, %v1599
      %1601 = vmatmul.bf16.gmra.mxu0 %v1196
      %v1602 = vpop.f32.mrf.mxu0
      %v1603 = vadd.f32 %v496, %v1602
      %v1604 = vpop.f32.mrf.mxu0
      %v1605 = vadd.f32 %v496, %v1604
      %1606 = vmatmul.bf16.gmra.mxu0 %v1199
      %v1607 = vpop.f32.mrf.mxu0
      %v1608 = vadd.f32 %v496, %v1607
      %v1609 = vpop.f32.mrf.mxu0
      %v1610 = vadd.f32 %v496, %v1609
      %1611 = vmatmul.bf16.gmra.mxu0 %v1202
      %v1612 = vpop.f32.mrf.mxu0
      %v1613 = vadd.f32 %v496, %v1612
      %v1614 = vpop.f32.mrf.mxu0
      %v1615 = vadd.f32 %v496, %v1614
      %1616 = vmatmul.bf16.gmra.mxu0 %v1205
      %v1617 = vpop.f32.mrf.mxu0
      %v1618 = vadd.f32 %v496, %v1617
      %v1619 = vpop.f32.mrf.mxu0
      %v1620 = vadd.f32 %v496, %v1619
      %1621 = vmatmul.bf16.gmra.mxu0 %v1208
      %v1622 = vpop.f32.mrf.mxu0
      %v1623 = vadd.f32 %v496, %v1622
      %v1624 = vpop.f32.mrf.mxu0
      %v1625 = vadd.f32 %v496, %v1624
      %1626 = vmatmul.bf16.gmra.mxu0 %v1211
      %v1627 = vpop.f32.mrf.mxu0
      %v1628 = vadd.f32 %v496, %v1627
      %v1629 = vpop.f32.mrf.mxu0
      %v1630 = vadd.f32 %v496, %v1629
      %1631 = vmatmul.bf16.gmra.mxu0 %v1214
      %v1632 = vpop.f32.mrf.mxu0
      %v1633 = vadd.f32 %v496, %v1632
      %v1634 = vpop.f32.mrf.mxu0
      %v1635 = vadd.f32 %v496, %v1634
      %1636 = vmatmul.bf16.gmra.mxu0 %v1217
      %v1637 = vpop.f32.mrf.mxu0
      %v1638 = vadd.f32 %v496, %v1637
      %v1639 = vpop.f32.mrf.mxu0
      %v1640 = vadd.f32 %v496, %v1639
      %1641 = vmatmul.bf16.gmra.mxu0 %v1220
      %v1642 = vpop.f32.mrf.mxu0
      %v1643 = vadd.f32 %v496, %v1642
      %v1644 = vpop.f32.mrf.mxu0
      %v1645 = vadd.f32 %v496, %v1644
      %1646 = vmatmul.bf16.gmra.mxu0 %v1223
      %v1647 = vpop.f32.mrf.mxu0
      %v1648 = vadd.f32 %v496, %v1647
      %v1649 = vpop.f32.mrf.mxu0
      %v1650 = vadd.f32 %v496, %v1649
      %1651 = vmatmul.bf16.gmra.mxu0 %v1226
      %v1652 = vpop.f32.mrf.mxu0
      %v1653 = vadd.f32 %v496, %v1652
      %v1654 = vpop.f32.mrf.mxu0
      %v1655 = vadd.f32 %v496, %v1654
      %1656 = vmatmul.bf16.gmra.mxu0 %v1229
      %v1657 = vpop.f32.mrf.mxu0
      %v1658 = vadd.f32 %v496, %v1657
      %v1659 = vpop.f32.mrf.mxu0
      %v1660 = vadd.f32 %v496, %v1659
      %1661 = vmatmul.bf16.gmra.mxu0 %v1232
      %v1662 = vpop.f32.mrf.mxu0
      %v1663 = vadd.f32 %v496, %v1662
      %v1664 = vpop.f32.mrf.mxu0
      %v1665 = vadd.f32 %v496, %v1664
      %1666 = vmatmul.bf16.gmra.mxu0 %v1235
      %v1667 = vpop.f32.mrf.mxu0
      %v1668 = vadd.f32 %v496, %v1667
      %v1669 = vpop.f32.mrf.mxu0
      %v1670 = vadd.f32 %v496, %v1669
      %1671 = vmatmul.bf16.gmra.mxu0 %v1238
      %v1672 = vpop.f32.mrf.mxu0
      %v1673 = vadd.f32 %v496, %v1672
      %v1674 = vpop.f32.mrf.mxu0
      %v1675 = vadd.f32 %v496, %v1674
      %1676 = vmatmul.bf16.gmra.mxu0 %v1241
      %v1677 = vpop.f32.mrf.mxu0
      %v1678 = vadd.f32 %v496, %v1677
      %v1679 = vpop.f32.mrf.mxu0
      %v1680 = vadd.f32 %v496, %v1679
      %1681 = vmatmul.bf16.gmra.mxu0 %v1244
      %v1682 = vpop.f32.mrf.mxu0
      %v1683 = vadd.f32 %v496, %v1682
      %v1684 = vpop.f32.mrf.mxu0
      %v1685 = vadd.f32 %v496, %v1684
      %1686 = vmatmul.bf16.gmra.mxu0 %v1247
      %v1687 = vpop.f32.mrf.mxu0
      %v1688 = vadd.f32 %v496, %v1687
      %v1689 = vpop.f32.mrf.mxu0
      %v1690 = vadd.f32 %v496, %v1689
      %1691 = vmatmul.bf16.gmra.mxu0 %v1250
      %v1692 = vpop.f32.mrf.mxu0
      %v1693 = vadd.f32 %v496, %v1692
      %v1694 = vpop.f32.mrf.mxu0
      %v1695 = vadd.f32 %v496, %v1694
      %1696 = vmatmul.bf16.gmra.mxu0 %v1253
      %v1697 = vpop.f32.mrf.mxu0
      %v1698 = vadd.f32 %v496, %v1697
      %v1699 = vpop.f32.mrf.mxu0
      %v1700 = vadd.f32 %v496, %v1699
      %1701 = vmatmul.bf16.gmra.mxu0 %v1256
      %v1702 = vpop.f32.mrf.mxu0
      %v1703 = vadd.f32 %v496, %v1702
      %v1704 = vpop.f32.mrf.mxu0
      %v1705 = vadd.f32 %v496, %v1704
      %1706 = vmatmul.bf16.gmra.mxu0 %v1259
      %v1707 = vpop.f32.mrf.mxu0
      %v1708 = vadd.f32 %v496, %v1707
      %v1709 = vpop.f32.mrf.mxu0
      %v1710 = vadd.f32 %v496, %v1709
      %1711 = vmatmul.bf16.gmra.mxu0 %v1262
      %v1712 = vpop.f32.mrf.mxu0
      %v1713 = vadd.f32 %v496, %v1712
      %v1714 = vpop.f32.mrf.mxu0
      %v1715 = vadd.f32 %v496, %v1714
      %1716 = vmatmul.bf16.gmra.mxu0 %v1265
      %v1717 = vpop.f32.mrf.mxu0
      %v1718 = vadd.f32 %v496, %v1717
      %v1719 = vpop.f32.mrf.mxu0
      %v1720 = vadd.f32 %v496, %v1719
      %1721 = vmatmul.bf16.gmra.mxu0 %v1268
      %v1722 = vpop.f32.mrf.mxu0
      %v1723 = vadd.f32 %v496, %v1722
      %v1724 = vpop.f32.mrf.mxu0
      %v1725 = vadd.f32 %v496, %v1724
      %1726 = vmatmul.bf16.gmra.mxu0 %v1271
      %v1727 = vpop.f32.mrf.mxu0
      %v1728 = vadd.f32 %v496, %v1727
      %v1729 = vpop.f32.mrf.mxu0
      %v1730 = vadd.f32 %v496, %v1729
      %1731 = vmatmul.bf16.gmra.mxu0 %v1274
      %v1732 = vpop.f32.mrf.mxu0
      %v1733 = vadd.f32 %v496, %v1732
      %v1734 = vpop.f32.mrf.mxu0
      %v1735 = vadd.f32 %v496, %v1734
      %1736 = vmatmul.bf16.gmra.mxu0 %v1277
      %v1737 = vpop.f32.mrf.mxu0
      %v1738 = vadd.f32 %v496, %v1737
      %v1739 = vpop.f32.mrf.mxu0
      %v1740 = vadd.f32 %v496, %v1739
      %1741 = vmatmul.bf16.gmra.mxu0 %v1280
      %v1742 = vpop.f32.mrf.mxu0
      %v1743 = vadd.f32 %v496, %v1742
      %v1744 = vpop.f32.mrf.mxu0
      %v1745 = vadd.f32 %v496, %v1744
      %1746 = vmatmul.bf16.gmra.mxu0 %v1283
      %v1747 = vpop.f32.mrf.mxu0
      %v1748 = vadd.f32 %v496, %v1747
      %v1749 = vpop.f32.mrf.mxu0
      %v1750 = vadd.f32 %v496, %v1749
      %1751 = vmatmul.bf16.gmra.mxu0 %v1286
      %v1752 = vpop.f32.mrf.mxu0
      %v1753 = vadd.f32 %v496, %v1752
      %v1754 = vpop.f32.mrf.mxu0
      %v1755 = vadd.f32 %v496, %v1754
      %1756 = vmatmul.bf16.gmra.mxu0 %v1289
      %v1757 = vpop.f32.mrf.mxu0
      %v1758 = vadd.f32 %v496, %v1757
      %v1759 = vpop.f32.mrf.mxu0
      %v1760 = vadd.f32 %v496, %v1759
      %1761 = vmatmul.bf16.gmra.mxu0 %v1292
      %v1762 = vpop.f32.mrf.mxu0
      %v1763 = vadd.f32 %v496, %v1762
      %v1764 = vpop.f32.mrf.mxu0
      %v1765 = vadd.f32 %v496, %v1764
      %1766 = vmatmul.bf16.gmra.mxu0 %v1295
      %v1767 = vpop.f32.mrf.mxu0
      %v1768 = vadd.f32 %v496, %v1767
      %v1769 = vpop.f32.mrf.mxu0
      %v1770 = vadd.f32 %v496, %v1769
      %1771 = vmatmul.bf16.gmra.mxu0 %v1298
      %v1772 = vpop.f32.mrf.mxu0
      %v1773 = vadd.f32 %v496, %v1772
      %v1774 = vpop.f32.mrf.mxu0
      %v1775 = vadd.f32 %v496, %v1774
      %1776 = vmatmul.bf16.gmra.mxu0 %v1301
      %v1777 = vpop.f32.mrf.mxu0
      %v1778 = vadd.f32 %v496, %v1777
      %v1779 = vpop.f32.mrf.mxu0
      %v1780 = vadd.f32 %v496, %v1779
      %1781 = vmatmul.bf16.gmra.mxu0 %v1304
      %v1782 = vpop.f32.mrf.mxu0
      %v1783 = vadd.f32 %v496, %v1782
      %v1784 = vpop.f32.mrf.mxu0
      %v1785 = vadd.f32 %v496, %v1784
      %1786 = vmatmul.bf16.gmra.mxu0 %v1307
      %v1787 = vpop.f32.mrf.mxu0
      %v1788 = vadd.f32 %v496, %v1787
      %v1789 = vpop.f32.mrf.mxu0
      %v1790 = vadd.f32 %v496, %v1789
      %1791 = vmatmul.bf16.gmra.mxu0 %v1310
      %v1792 = vpop.f32.mrf.mxu0
      %v1793 = vadd.f32 %v496, %v1792
      %v1794 = vpop.f32.mrf.mxu0
      %v1795 = vadd.f32 %v496, %v1794
      %1796 = vmatmul.bf16.gmra.mxu0 %v1313
      %v1797 = vpop.f32.mrf.mxu0
      %v1798 = vadd.f32 %v496, %v1797
      %v1799 = vpop.f32.mrf.mxu0
      %v1800 = vadd.f32 %v496, %v1799
      %1801 = vmatmul.bf16.gmra.mxu0 %v1316
      %v1802 = vpop.f32.mrf.mxu0
      %v1803 = vadd.f32 %v496, %v1802
      %v1804 = vpop.f32.mrf.mxu0
      %v1805 = vadd.f32 %v496, %v1804
      %1806 = vmatmul.bf16.gmra.mxu0 %v1319
      %v1807 = vpop.f32.mrf.mxu0
      %v1808 = vadd.f32 %v496, %v1807
      %v1809 = vpop.f32.mrf.mxu0
      %v1810 = vadd.f32 %v496, %v1809
      %1811 = vmatmul.bf16.gmra.mxu0 %v1322
      %v1812 = vpop.f32.mrf.mxu0
      %v1813 = vadd.f32 %v496, %v1812
      %v1814 = vpop.f32.mrf.mxu0
      %v1815 = vadd.f32 %v496, %v1814
      %1816 = vmatmul.bf16.gmra.mxu0 %v1325
      %v1817 = vpop.f32.mrf.mxu0
      %v1818 = vadd.f32 %v496, %v1817
      %v1819 = vpop.f32.mrf.mxu0
      %v1820 = vadd.f32 %v496, %v1819
      %1821 = vmatmul.bf16.gmra.mxu0 %v1328
      %v1822 = vpop.f32.mrf.mxu0
      %v1823 = vadd.f32 %v496, %v1822
      %v1824 = vpop.f32.mrf.mxu0
      %v1825 = vadd.f32 %v496, %v1824
      %1826 = vmatmul.bf16.gmra.mxu0 %v1331
      %v1827 = vpop.f32.mrf.mxu0
      %v1828 = vadd.f32 %v496, %v1827
      %v1829 = vpop.f32.mrf.mxu0
      %v1830 = vadd.f32 %v496, %v1829
      %1831 = vmatmul.bf16.gmra.mxu0 %v1334
      %v1832 = vpop.f32.mrf.mxu0
      %v1833 = vadd.f32 %v496, %v1832
      %v1834 = vpop.f32.mrf.mxu0
      %v1835 = vadd.f32 %v496, %v1834
      %1836 = vmatmul.bf16.gmra.mxu0 %v1337
      %v1837 = vpop.f32.mrf.mxu0
      %v1838 = vadd.f32 %v496, %v1837
      %v1839 = vpop.f32.mrf.mxu0
      %v1840 = vadd.f32 %v496, %v1839
      %1841 = vmatmul.bf16.gmra.mxu0 %v1340
      %v1842 = vpop.f32.mrf.mxu0
      %v1843 = vadd.f32 %v496, %v1842
      %v1844 = vpop.f32.mrf.mxu0
      %v1845 = vadd.f32 %v496, %v1844
      %1846 = vmatmul.bf16.gmra.mxu0 %v1343
      %v1847 = vpop.f32.mrf.mxu0
      %v1848 = vadd.f32 %v496, %v1847
      %v1849 = vpop.f32.mrf.mxu0
      %v1850 = vadd.f32 %v496, %v1849
      %1851 = vmatmul.bf16.gmra.mxu0 %v1346
      %v1852 = vpop.f32.mrf.mxu0
      %v1853 = vadd.f32 %v496, %v1852
      %v1854 = vpop.f32.mrf.mxu0
      %v1855 = vadd.f32 %v496, %v1854
      %1856 = vmatmul.bf16.gmra.mxu0 %v1349
      %v1857 = vpop.f32.mrf.mxu0
      %v1858 = vadd.f32 %v496, %v1857
      %v1859 = vpop.f32.mrf.mxu0
      %v1860 = vadd.f32 %v496, %v1859
      %1861 = vmatmul.bf16.gmra.mxu0 %v1352
      %v1862 = vpop.f32.mrf.mxu0
      %v1863 = vadd.f32 %v496, %v1862
      %v1864 = vpop.f32.mrf.mxu0
      %v1865 = vadd.f32 %v496, %v1864
      %1866 = vmatmul.bf16.gmra.mxu0 %v1355
      %v1867 = vpop.f32.mrf.mxu0
      %v1868 = vadd.f32 %v496, %v1867
      %v1869 = vpop.f32.mrf.mxu0
      %v1870 = vadd.f32 %v496, %v1869
      %1871 = vmatmul.bf16.gmra.mxu0 %v1358
      %v1872 = vpop.f32.mrf.mxu0
      %v1873 = vadd.f32 %v496, %v1872
      %v1874 = vpop.f32.mrf.mxu0
      %v1875 = vadd.f32 %v496, %v1874
      %1876 = vmatmul.bf16.gmra.mxu0 %v1361
      %v1877 = vpop.f32.mrf.mxu0
      %v1878 = vadd.f32 %v496, %v1877
      %v1879 = vpop.f32.mrf.mxu0
      %v1880 = vadd.f32 %v496, %v1879
      %1881 = vmatmul.bf16.gmra.mxu0 %v1364
      %v1882 = vpop.f32.mrf.mxu0
      %v1883 = vadd.f32 %v496, %v1882
      %v1884 = vpop.f32.mrf.mxu0
      %v1885 = vadd.f32 %v496, %v1884
      %1886 = vmatmul.bf16.gmra.mxu0 %v1367
      %v1887 = vpop.f32.mrf.mxu0
      %v1888 = vadd.f32 %v496, %v1887
      %v1889 = vpop.f32.mrf.mxu0
      %v1890 = vadd.f32 %v496, %v1889
      %1891 = vmatmul.bf16.gmra.mxu0 %v1370
      %v1892 = vpop.f32.mrf.mxu0
      %v1893 = vadd.f32 %v496, %v1892
      %v1894 = vpop.f32.mrf.mxu0
      %v1895 = vadd.f32 %v496, %v1894
      %1896 = vmatmul.bf16.gmra.mxu0 %v1373
      %v1897 = vpop.f32.mrf.mxu0
      %v1898 = vadd.f32 %v496, %v1897
      %v1899 = vpop.f32.mrf.mxu0
      %v1900 = vadd.f32 %v496, %v1899
      %1901 = vmatmul.bf16.gmra.mxu0 %v1376
      %v1902 = vpop.f32.mrf.mxu0
      %v1903 = vadd.f32 %v496, %v1902
      %v1904 = vpop.f32.mrf.mxu0
      %v1905 = vadd.f32 %v496, %v1904
      %1906 = vmatmul.bf16.gmra.mxu0 %v1379
      %v1907 = vpop.f32.mrf.mxu0
      %v1908 = vadd.f32 %v496, %v1907
      %v1909 = vpop.f32.mrf.mxu0
      %v1910 = vadd.f32 %v496, %v1909
      %1911 = vmatmul.bf16.gmra.mxu0 %v1382
      %v1912 = vpop.f32.mrf.mxu0
      %v1913 = vadd.f32 %v496, %v1912
      %v1914 = vpop.f32.mrf.mxu0
      %v1915 = vadd.f32 %v496, %v1914
      %1916 = vmatmul.bf16.gmra.mxu0 %v1385
      %v1917 = vpop.f32.mrf.mxu0
      %v1918 = vadd.f32 %v496, %v1917
      %v1919 = vpop.f32.mrf.mxu0
      %v1920 = vadd.f32 %v496, %v1919
      %1921 = vmatmul.bf16.gmra.mxu0 %v1388
      %v1922 = vpop.f32.mrf.mxu0
      %v1923 = vadd.f32 %v496, %v1922
      %v1924 = vpop.f32.mrf.mxu0
      %v1925 = vadd.f32 %v496, %v1924
      %1926 = vmatmul.bf16.gmra.mxu0 %v1391
      %v1927 = vpop.f32.mrf.mxu0
      %v1928 = vadd.f32 %v496, %v1927
      %v1929 = vpop.f32.mrf.mxu0
      %v1930 = vadd.f32 %v496, %v1929
      %1931 = vmatmul.bf16.gmra.mxu0 %v1394
      %v1932 = vpop.f32.mrf.mxu0
      %v1933 = vadd.f32 %v496, %v1932
      %v1934 = vpop.f32.mrf.mxu0
      %v1935 = vadd.f32 %v496, %v1934
      %1936 = vmatmul.bf16.gmra.mxu0 %v1397
      %v1937 = vpop.f32.mrf.mxu0
      %v1938 = vadd.f32 %v496, %v1937
      %v1939 = vpop.f32.mrf.mxu0
      %v1940 = vadd.f32 %v496, %v1939
      %1941 = vmatmul.bf16.gmra.mxu0 %v1400
      %v1942 = vpop.f32.mrf.mxu0
      %v1943 = vadd.f32 %v496, %v1942
      %v1944 = vpop.f32.mrf.mxu0
      %v1945 = vadd.f32 %v496, %v1944
      %1946 = vmatmul.bf16.gmra.mxu0 %v1403
      %v1947 = vpop.f32.mrf.mxu0
      %v1948 = vadd.f32 %v496, %v1947
      %v1949 = vpop.f32.mrf.mxu0
      %v1950 = vadd.f32 %v496, %v1949
      %1951 = vmatmul.bf16.gmra.mxu0 %v1406
      %v1952 = vpop.f32.mrf.mxu0
      %v1953 = vadd.f32 %v496, %v1952
      %v1954 = vpop.f32.mrf.mxu0
      %v1955 = vadd.f32 %v496, %v1954
      %1956 = vmatmul.bf16.gmra.mxu0 %v1409
      %v1957 = vpop.f32.mrf.mxu0
      %v1958 = vadd.f32 %v496, %v1957
      %v1959 = vpop.f32.mrf.mxu0
      %v1960 = vadd.f32 %v496, %v1959
      %1961 = vmatmul.bf16.gmra.mxu0 %v1412
      %v1962 = vpop.f32.mrf.mxu0
      %v1963 = vadd.f32 %v496, %v1962
      %v1964 = vpop.f32.mrf.mxu0
      %v1965 = vadd.f32 %v496, %v1964
      %1966 = vmatmul.bf16.gmra.mxu0 %v1415
      %v1967 = vpop.f32.mrf.mxu0
      %v1968 = vadd.f32 %v496, %v1967
      %v1969 = vpop.f32.mrf.mxu0
      %v1970 = vadd.f32 %v496, %v1969
      %1971 = vmatmul.bf16.gmra.mxu0 %v1418
      %v1972 = vpop.f32.mrf.mxu0
      %v1973 = vadd.f32 %v496, %v1972
      %v1974 = vpop.f32.mrf.mxu0
      %v1975 = vadd.f32 %v496, %v1974
      %1976 = vmatmul.bf16.gmra.mxu0 %v1421
      %v1977 = vpop.f32.mrf.mxu0
      %v1978 = vadd.f32 %v496, %v1977
      %v1979 = vpop.f32.mrf.mxu0
      %v1980 = vadd.f32 %v496, %v1979
      %1981 = vmatmul.bf16.gmra.mxu0 %v1424
      %v1982 = vpop.f32.mrf.mxu0
      %v1983 = vadd.f32 %v496, %v1982
      %v1984 = vpop.f32.mrf.mxu0
      %v1985 = vadd.f32 %v496, %v1984
      %1986 = vmatmul.bf16.gmra.mxu0 %v1427
      %v1987 = vpop.f32.mrf.mxu0
      %v1988 = vadd.f32 %v496, %v1987
      %v1989 = vpop.f32.mrf.mxu0
      %v1990 = vadd.f32 %v496, %v1989
      %1991 = vmatmul.bf16.gmra.mxu0 %v1430
      %v1992 = vpop.f32.mrf.mxu0
      %v1993 = vadd.f32 %v496, %v1992
      %v1994 = vpop.f32.mrf.mxu0
      %v1995 = vadd.f32 %v496, %v1994
      %1996 = vmatmul.bf16.gmra.mxu0 %v1433
      %v1997 = vpop.f32.mrf.mxu0
      %v1998 = vadd.f32 %v496, %v1997
      %v1999 = vpop.f32.mrf.mxu0
      %v2000 = vadd.f32 %v496, %v1999
      %2001 = vmatmul.bf16.gmra.mxu0 %v1436
      %v2002 = vpop.f32.mrf.mxu0
      %v2003 = vadd.f32 %v496, %v2002
      %v2004 = vpop.f32.mrf.mxu0
      %v2005 = vadd.f32 %v496, %v2004
      %2006 = vmatmul.bf16.gmra.mxu0 %v1439
      %v2007 = vpop.f32.mrf.mxu0
      %v2008 = vadd.f32 %v496, %v2007
      %v2009 = vpop.f32.mrf.mxu0
      %v2010 = vadd.f32 %v496, %v2009
      %2011 = vmatmul.bf16.gmra.mxu0 %v1442
      %v2012 = vpop.f32.mrf.mxu0
      %v2013 = vadd.f32 %v496, %v2012
      %v2014 = vpop.f32.mrf.mxu0
      %v2015 = vadd.f32 %v496, %v2014
      %2016 = vmatmul.bf16.gmra.mxu0 %v1445
      %v2017 = vpop.f32.mrf.mxu0
      %v2018 = vadd.f32 %v496, %v2017
      %v2019 = vpop.f32.mrf.mxu0
      %v2020 = vadd.f32 %v496, %v2019
      %2021 = vmatmul.bf16.gmra.mxu0 %v1448
      %v2022 = vpop.f32.mrf.mxu0
      %v2023 = vadd.f32 %v496, %v2022
      %v2024 = vpop.f32.mrf.mxu0
      %v2025 = vadd.f32 %v496, %v2024
      %2026 = vmatmul.bf16.gmra.mxu0 %v1451
      %v2027 = vpop.f32.mrf.mxu0
      %v2028 = vadd.f32 %v496, %v2027
      %v2029 = vpop.f32.mrf.mxu0
      %v2030 = vadd.f32 %v496, %v2029
      %2031 = vmatmul.bf16.gmra.mxu0 %v1454
      %v2032 = vpop.f32.mrf.mxu0
      %v2033 = vadd.f32 %v496, %v2032
      %v2034 = vpop.f32.mrf.mxu0
      %v2035 = vadd.f32 %v496, %v2034
      %2036 = vmatmul.bf16.gmra.mxu0 %v1457
      %v2037 = vpop.f32.mrf.mxu0
      %v2038 = vadd.f32 %v496, %v2037
      %v2039 = vpop.f32.mrf.mxu0
      %v2040 = vadd.f32 %v496, %v2039
      %2041 = vmatmul.bf16.gmra.mxu0 %v1460
      %v2042 = vpop.f32.mrf.mxu0
      %v2043 = vadd.f32 %v496, %v2042
      %v2044 = vpop.f32.mrf.mxu0
      %v2045 = vadd.f32 %v496, %v2044
      %2046 = vmatmul.bf16.gmra.mxu0 %v1463
      %v2047 = vpop.f32.mrf.mxu0
      %v2048 = vadd.f32 %v496, %v2047
      %v2049 = vpop.f32.mrf.mxu0
      %v2050 = vadd.f32 %v496, %v2049
      %2051 = vmatmul.bf16.gmra.mxu0 %v1466
      %v2052 = vpop.f32.mrf.mxu0
      %v2053 = vadd.f32 %v496, %v2052
      %v2054 = vpop.f32.mrf.mxu0
      %v2055 = vadd.f32 %v496, %v2054
      %2056 = vmatmul.bf16.gmra.mxu0 %v1469
      %v2057 = vpop.f32.mrf.mxu0
      %v2058 = vadd.f32 %v496, %v2057
      %v2059 = vpop.f32.mrf.mxu0
      %v2060 = vadd.f32 %v496, %v2059
      %2061 = vmatmul.bf16.gmra.mxu0 %v1472
      %v2062 = vpop.f32.mrf.mxu0
      %v2063 = vadd.f32 %v496, %v2062
      %v2064 = vpop.f32.mrf.mxu0
      %v2065 = vadd.f32 %v496, %v2064
      %2066 = vmatmul.bf16.gmra.mxu0 %v1475
      %v2067 = vpop.f32.mrf.mxu0
      %v2068 = vadd.f32 %v496, %v2067
      %v2069 = vpop.f32.mrf.mxu0
      %v2070 = vadd.f32 %v496, %v2069
      %2071 = vmatmul.bf16.gmra.mxu0 %v1478
      %v2072 = vpop.f32.mrf.mxu0
      %v2073 = vadd.f32 %v496, %v2072
      %v2074 = vpop.f32.mrf.mxu0
      %v2075 = vadd.f32 %v496, %v2074
      %2076 = vmatmul.bf16.gmra.mxu0 %v1481
      %v2077 = vpop.f32.mrf.mxu0
      %v2078 = vadd.f32 %v496, %v2077
      %v2079 = vpop.f32.mrf.mxu0
      %v2080 = vadd.f32 %v496, %v2079
      %2081 = vmatmul.bf16.gmra.mxu0 %v1484
      %v2082 = vpop.f32.mrf.mxu0
      %v2083 = vadd.f32 %v496, %v2082
      %v2084 = vpop.f32.mrf.mxu0
      %v2085 = vadd.f32 %v496, %v2084
      %2086 = vmatmul.bf16.gmra.mxu0 %v1487
      %v2087 = vpop.f32.mrf.mxu0
      %v2088 = vadd.f32 %v496, %v2087
      %v2089 = vpop.f32.mrf.mxu0
      %v2090 = vadd.f32 %v496, %v2089
      %2091 = vmatmul.bf16.gmra.mxu0 %v1490
      %v2092 = vpop.f32.mrf.mxu0
      %v2093 = vadd.f32 %v496, %v2092
      %v2094 = vpop.f32.mrf.mxu0
      %v2095 = vadd.f32 %v496, %v2094
      %2096 = vmatmul.bf16.gmra.mxu0 %v1493
      %v2097 = vpop.f32.mrf.mxu0
      %v2098 = vadd.f32 %v496, %v2097
      %v2099 = vpop.f32.mrf.mxu0
      %v2100 = vadd.f32 %v496, %v2099
      %2101 = vmatmul.bf16.gmra.mxu0 %v1496
      %v2102 = vpop.f32.mrf.mxu0
      %v2103 = vadd.f32 %v496, %v2102
      %v2104 = vpop.f32.mrf.mxu0
      %v2105 = vadd.f32 %v496, %v2104
      %2106 = vmatmul.bf16.gmra.mxu0 %v1499
      %v2107 = vpop.f32.mrf.mxu0
      %v2108 = vadd.f32 %v496, %v2107
      %v2109 = vpop.f32.mrf.mxu0
      %v2110 = vadd.f32 %v496, %v2109
      %2111 = vmatmul.bf16.gmra.mxu0 %v1502
      %v2112 = vpop.f32.mrf.mxu0
      %v2113 = vadd.f32 %v496, %v2112
      %v2114 = vpop.f32.mrf.mxu0
      %v2115 = vadd.f32 %v496, %v2114
      %2116 = vmatmul.bf16.gmra.mxu0 %v1505
      %v2117 = vpop.f32.mrf.mxu0
      %v2118 = vadd.f32 %v496, %v2117
      %v2119 = vpop.f32.mrf.mxu0
      %v2120 = vadd.f32 %v496, %v2119
      %2121 = vmatmul.bf16.gmra.mxu0 %v1508
      %v2122 = vpop.f32.mrf.mxu0
      %v2123 = vadd.f32 %v496, %v2122
      %v2124 = vpop.f32.mrf.mxu0
      %v2125 = vadd.f32 %v496, %v2124
      %2126 = vmatmul.bf16.gmra.mxu0 %v1511
      %v2127 = vpop.f32.mrf.mxu0
      %v2128 = vadd.f32 %v496, %v2127
      %v2129 = vpop.f32.mrf.mxu0
      %v2130 = vadd.f32 %v496, %v2129
      %2131 = vmatmul.bf16.gmra.mxu0 %v1514
      %v2132 = vpop.f32.mrf.mxu0
      %v2133 = vadd.f32 %v496, %v2132
      %v2134 = vpop.f32.mrf.mxu0
      %v2135 = vadd.f32 %v496, %v2134
      %2136 = vmatmul.bf16.gmra.mxu0 %v1517
      %v2137 = vpop.f32.mrf.mxu0
      %v2138 = vadd.f32 %v496, %v2137
      %v2139 = vpop.f32.mrf.mxu0
      %v2140 = vadd.f32 %v496, %v2139
      %2141 = vmatmul.bf16.gmra.mxu0 %v1520
      %v2142 = vpop.f32.mrf.mxu0
      %v2143 = vadd.f32 %v496, %v2142
      %v2144 = vpop.f32.mrf.mxu0
      %v2145 = vadd.f32 %v496, %v2144
      %2146 = vmatmul.bf16.gmra.mxu0 %v1523
      %v2147 = vpop.f32.mrf.mxu0
      %v2148 = vadd.f32 %v496, %v2147
      %v2149 = vpop.f32.mrf.mxu0
      %v2150 = vadd.f32 %v496, %v2149
      %2151 = vmatmul.bf16.gmra.mxu0 %v1526
      %v2152 = vpop.f32.mrf.mxu0
      %v2153 = vadd.f32 %v496, %v2152
      %v2154 = vpop.f32.mrf.mxu0
      %v2155 = vadd.f32 %v496, %v2154
      %2156 = vmatmul.bf16.gmra.mxu0 %v1529
      %v2157 = vpop.f32.mrf.mxu0
      %v2158 = vadd.f32 %v496, %v2157
      %v2159 = vpop.f32.mrf.mxu0
      %v2160 = vadd.f32 %v496, %v2159
      %2161 = vmatmul.bf16.gmra.mxu0 %v1532
      %v2162 = vpop.f32.mrf.mxu0
      %v2163 = vadd.f32 %v496, %v2162
      %v2164 = vpop.f32.mrf.mxu0
      %v2165 = vadd.f32 %v496, %v2164
      %2166 = vmatmul.bf16.gmra.mxu0 %v1535
      %v2167 = vpop.f32.mrf.mxu0
      %v2168 = vadd.f32 %v496, %v2167
      %v2169 = vpop.f32.mrf.mxu0
      %v2170 = vadd.f32 %v496, %v2169
      %2171 = vmatmul.bf16.gmra.mxu0 %v1538
      %v2172 = vpop.f32.mrf.mxu0
      %v2173 = vadd.f32 %v496, %v2172
      %v2174 = vpop.f32.mrf.mxu0
      %v2175 = vadd.f32 %v496, %v2174
      %2176 = vmatmul.bf16.gmra.mxu0 %v1541
      %v2177 = vpop.f32.mrf.mxu0
      %v2178 = vadd.f32 %v496, %v2177
      %v2179 = vpop.f32.mrf.mxu0
      %v2180 = vadd.f32 %v496, %v2179
      %2181 = vmatmul.bf16.gmra.mxu0 %v1544
      %v2182 = vpop.f32.mrf.mxu0
      %v2183 = vadd.f32 %v496, %v2182
      %v2184 = vpop.f32.mrf.mxu0
      %v2185 = vadd.f32 %v496, %v2184
      %2186 = vmatmul.bf16.gmra.mxu0 %v1547
      %v2187 = vpop.f32.mrf.mxu0
      %v2188 = vadd.f32 %v496, %v2187
      %v2189 = vpop.f32.mrf.mxu0
      %v2190 = vadd.f32 %v496, %v2189
      %2191 = vmatmul.bf16.gmra.mxu0 %v1550
      %v2192 = vpop.f32.mrf.mxu0
      %v2193 = vadd.f32 %v496, %v2192
      %v2194 = vpop.f32.mrf.mxu0
      %v2195 = vadd.f32 %v496, %v2194
      %2196 = vmatmul.bf16.gmra.mxu0 %v1553
      %v2197 = vpop.f32.mrf.mxu0
      %v2198 = vadd.f32 %v496, %v2197
      %v2199 = vpop.f32.mrf.mxu0
      %v2200 = vadd.f32 %v496, %v2199
      %2201 = vmatmul.bf16.gmra.mxu0 %v1556
      %v2202 = vpop.f32.mrf.mxu0
      %v2203 = vadd.f32 %v496, %v2202
      %v2204 = vpop.f32.mrf.mxu0
      %v2205 = vadd.f32 %v496, %v2204
      %2206 = vmatmul.bf16.gmra.mxu0 %v1559
      %v2207 = vpop.f32.mrf.mxu0
      %v2208 = vadd.f32 %v496, %v2207
      %v2209 = vpop.f32.mrf.mxu0
      %v2210 = vadd.f32 %v496, %v2209
      %2211 = vmatmul.bf16.gmra.mxu0 %v1562
      %v2212 = vpop.f32.mrf.mxu0
      %v2213 = vadd.f32 %v496, %v2212
      %v2214 = vpop.f32.mrf.mxu0
      %v2215 = vadd.f32 %v496, %v2214
      %2216 = vdwg.mxu0
      %v2217 = vmax.f32 %v1578, 0.0
      %v2218 = vmax.f32 %v1580, 0.0
      %v2219 = vmax.f32 %v1583, 0.0
      %v2220 = vmax.f32 %v1585, 0.0
      %v2221 = vmax.f32 %v1588, 0.0
      %v2222 = vmax.f32 %v1590, 0.0
      %v2223 = vmax.f32 %v1593, 0.0
      %v2224 = vmax.f32 %v1595, 0.0
      %v2225 = vmax.f32 %v1598, 0.0
      %v2226 = vmax.f32 %v1600, 0.0
      %v2227 = vmax.f32 %v1603, 0.0
      %v2228 = vmax.f32 %v1605, 0.0
      %v2229 = vmax.f32 %v1608, 0.0
      %v2230 = vmax.f32 %v1610, 0.0
      %v2231 = vmax.f32 %v1613, 0.0
      %v2232 = vmax.f32 %v1615, 0.0
      %v2233 = vmax.f32 %v1618, 0.0
      %v2234 = vmax.f32 %v1620, 0.0
      %v2235 = vmax.f32 %v1623, 0.0
      %v2236 = vmax.f32 %v1625, 0.0
      %v2237 = vmax.f32 %v1628, 0.0
      %v2238 = vmax.f32 %v1630, 0.0
      %v2239 = vmax.f32 %v1633, 0.0
      %v2240 = vmax.f32 %v1635, 0.0
      %v2241 = vmax.f32 %v1638, 0.0
      %v2242 = vmax.f32 %v1640, 0.0
      %v2243 = vmax.f32 %v1643, 0.0
      %v2244 = vmax.f32 %v1645, 0.0
      %v2245 = vmax.f32 %v1648, 0.0
      %v2246 = vmax.f32 %v1650, 0.0
      %v2247 = vmax.f32 %v1653, 0.0
      %v2248 = vmax.f32 %v1655, 0.0
      %v2249 = vmax.f32 %v1658, 0.0
      %v2250 = vmax.f32 %v1660, 0.0
      %v2251 = vmax.f32 %v1663, 0.0
      %v2252 = vmax.f32 %v1665, 0.0
      %v2253 = vmax.f32 %v1668, 0.0
      %v2254 = vmax.f32 %v1670, 0.0
      %v2255 = vmax.f32 %v1673, 0.0
      %v2256 = vmax.f32 %v1675, 0.0
      %v2257 = vmax.f32 %v1678, 0.0
      %v2258 = vmax.f32 %v1680, 0.0
      %v2259 = vmax.f32 %v1683, 0.0
      %v2260 = vmax.f32 %v1685, 0.0
      %v2261 = vmax.f32 %v1688, 0.0
      %v2262 = vmax.f32 %v1690, 0.0
      %v2263 = vmax.f32 %v1693, 0.0
      %v2264 = vmax.f32 %v1695, 0.0
      %v2265 = vmax.f32 %v1698, 0.0
      %v2266 = vmax.f32 %v1700, 0.0
      %v2267 = vmax.f32 %v1703, 0.0
      %v2268 = vmax.f32 %v1705, 0.0
      %v2269 = vmax.f32 %v1708, 0.0
      %v2270 = vmax.f32 %v1710, 0.0
      %v2271 = vmax.f32 %v1713, 0.0
      %v2272 = vmax.f32 %v1715, 0.0
      %v2273 = vmax.f32 %v1718, 0.0
      %v2274 = vmax.f32 %v1720, 0.0
      %v2275 = vmax.f32 %v1723, 0.0
      %v2276 = vmax.f32 %v1725, 0.0
      %v2277 = vmax.f32 %v1728, 0.0
      %v2278 = vmax.f32 %v1730, 0.0
      %v2279 = vmax.f32 %v1733, 0.0
      %v2280 = vmax.f32 %v1735, 0.0
      %v2281 = vmax.f32 %v1738, 0.0
      %v2282 = vmax.f32 %v1740, 0.0
      %v2283 = vmax.f32 %v1743, 0.0
      %v2284 = vmax.f32 %v1745, 0.0
      %v2285 = vmax.f32 %v1748, 0.0
      %v2286 = vmax.f32 %v1750, 0.0
      %v2287 = vmax.f32 %v1753, 0.0
      %v2288 = vmax.f32 %v1755, 0.0
      %v2289 = vmax.f32 %v1758, 0.0
      %v2290 = vmax.f32 %v1760, 0.0
      %v2291 = vmax.f32 %v1763, 0.0
      %v2292 = vmax.f32 %v1765, 0.0
      %v2293 = vmax.f32 %v1768, 0.0
      %v2294 = vmax.f32 %v1770, 0.0
      %v2295 = vmax.f32 %v1773, 0.0
      %v2296 = vmax.f32 %v1775, 0.0
      %v2297 = vmax.f32 %v1778, 0.0
      %v2298 = vmax.f32 %v1780, 0.0
      %v2299 = vmax.f32 %v1783, 0.0
      %v2300 = vmax.f32 %v1785, 0.0
      %v2301 = vmax.f32 %v1788, 0.0
      %v2302 = vmax.f32 %v1790, 0.0
      %v2303 = vmax.f32 %v1793, 0.0
      %v2304 = vmax.f32 %v1795, 0.0
      %v2305 = vmax.f32 %v1798, 0.0
      %v2306 = vmax.f32 %v1800, 0.0
      %v2307 = vmax.f32 %v1803, 0.0
      %v2308 = vmax.f32 %v1805, 0.0
      %v2309 = vmax.f32 %v1808, 0.0
      %v2310 = vmax.f32 %v1810, 0.0
      %v2311 = vmax.f32 %v1813, 0.0
      %v2312 = vmax.f32 %v1815, 0.0
      %v2313 = vmax.f32 %v1818, 0.0
      %v2314 = vmax.f32 %v1820, 0.0
      %v2315 = vmax.f32 %v1823, 0.0
      %v2316 = vmax.f32 %v1825, 0.0
      %v2317 = vmax.f32 %v1828, 0.0
      %v2318 = vmax.f32 %v1830, 0.0
      %v2319 = vmax.f32 %v1833, 0.0
      %v2320 = vmax.f32 %v1835, 0.0
      %v2321 = vmax.f32 %v1838, 0.0
      %v2322 = vmax.f32 %v1840, 0.0
      %v2323 = vmax.f32 %v1843, 0.0
      %v2324 = vmax.f32 %v1845, 0.0
      %v2325 = vmax.f32 %v1848, 0.0
      %v2326 = vmax.f32 %v1850, 0.0
      %v2327 = vmax.f32 %v1853, 0.0
      %v2328 = vmax.f32 %v1855, 0.0
      %v2329 = vmax.f32 %v1858, 0.0
      %v2330 = vmax.f32 %v1860, 0.0
      %v2331 = vmax.f32 %v1863, 0.0
      %v2332 = vmax.f32 %v1865, 0.0
      %v2333 = vmax.f32 %v1868, 0.0
      %v2334 = vmax.f32 %v1870, 0.0
      %v2335 = vmax.f32 %v1873, 0.0
      %v2336 = vmax.f32 %v1875, 0.0
      %v2337 = vmax.f32 %v1878, 0.0
      %v2338 = vmax.f32 %v1880, 0.0
      %v2339 = vmax.f32 %v1883, 0.0
      %v2340 = vmax.f32 %v1885, 0.0
      %v2341 = vmax.f32 %v1888, 0.0
      %v2342 = vmax.f32 %v1890, 0.0
      %v2343 = vmax.f32 %v1893, 0.0
      %v2344 = vmax.f32 %v1895, 0.0
      %v2345 = vmax.f32 %v1898, 0.0
      %v2346 = vmax.f32 %v1900, 0.0
      %v2347 = vmax.f32 %v1903, 0.0
      %v2348 = vmax.f32 %v1905, 0.0
      %v2349 = vmax.f32 %v1908, 0.0
      %v2350 = vmax.f32 %v1910, 0.0
      %v2351 = vmax.f32 %v1913, 0.0
      %v2352 = vmax.f32 %v1915, 0.0
      %v2353 = vmax.f32 %v1918, 0.0
      %v2354 = vmax.f32 %v1920, 0.0
      %v2355 = vmax.f32 %v1923, 0.0
      %v2356 = vmax.f32 %v1925, 0.0
      %v2357 = vmax.f32 %v1928, 0.0
      %v2358 = vmax.f32 %v1930, 0.0
      %v2359 = vmax.f32 %v1933, 0.0
      %v2360 = vmax.f32 %v1935, 0.0
      %v2361 = vmax.f32 %v1938, 0.0
      %v2362 = vmax.f32 %v1940, 0.0
      %v2363 = vmax.f32 %v1943, 0.0
      %v2364 = vmax.f32 %v1945, 0.0
      %v2365 = vmax.f32 %v1948, 0.0
      %v2366 = vmax.f32 %v1950, 0.0
      %v2367 = vmax.f32 %v1953, 0.0
      %v2368 = vmax.f32 %v1955, 0.0
      %v2369 = vmax.f32 %v1958, 0.0
      %v2370 = vmax.f32 %v1960, 0.0
      %v2371 = vmax.f32 %v1963, 0.0
      %v2372 = vmax.f32 %v1965, 0.0
      %v2373 = vmax.f32 %v1968, 0.0
      %v2374 = vmax.f32 %v1970, 0.0
      %v2375 = vmax.f32 %v1973, 0.0
      %v2376 = vmax.f32 %v1975, 0.0
      %v2377 = vmax.f32 %v1978, 0.0
      %v2378 = vmax.f32 %v1980, 0.0
      %v2379 = vmax.f32 %v1983, 0.0
      %v2380 = vmax.f32 %v1985, 0.0
      %v2381 = vmax.f32 %v1988, 0.0
      %v2382 = vmax.f32 %v1990, 0.0
      %v2383 = vmax.f32 %v1993, 0.0
      %v2384 = vmax.f32 %v1995, 0.0
      %v2385 = vmax.f32 %v1998, 0.0
      %v2386 = vmax.f32 %v2000, 0.0
      %v2387 = vmax.f32 %v2003, 0.0
      %v2388 = vmax.f32 %v2005, 0.0
      %v2389 = vmax.f32 %v2008, 0.0
      %v2390 = vmax.f32 %v2010, 0.0
      %v2391 = vmax.f32 %v2013, 0.0
      %v2392 = vmax.f32 %v2015, 0.0
      %v2393 = vmax.f32 %v2018, 0.0
      %v2394 = vmax.f32 %v2020, 0.0
      %v2395 = vmax.f32 %v2023, 0.0
      %v2396 = vmax.f32 %v2025, 0.0
      %v2397 = vmax.f32 %v2028, 0.0
      %v2398 = vmax.f32 %v2030, 0.0
      %v2399 = vmax.f32 %v2033, 0.0
      %v2400 = vmax.f32 %v2035, 0.0
      %v2401 = vmax.f32 %v2038, 0.0
      %v2402 = vmax.f32 %v2040, 0.0
      %v2403 = vmax.f32 %v2043, 0.0
      %v2404 = vmax.f32 %v2045, 0.0
      %v2405 = vmax.f32 %v2048, 0.0
      %v2406 = vmax.f32 %v2050, 0.0
      %v2407 = vmax.f32 %v2053, 0.0
      %v2408 = vmax.f32 %v2055, 0.0
      %v2409 = vmax.f32 %v2058, 0.0
      %v2410 = vmax.f32 %v2060, 0.0
      %v2411 = vmax.f32 %v2063, 0.0
      %v2412 = vmax.f32 %v2065, 0.0
      %v2413 = vmax.f32 %v2068, 0.0
      %v2414 = vmax.f32 %v2070, 0.0
      %v2415 = vmax.f32 %v2073, 0.0
      %v2416 = vmax.f32 %v2075, 0.0
      %v2417 = vmax.f32 %v2078, 0.0
      %v2418 = vmax.f32 %v2080, 0.0
      %v2419 = vmax.f32 %v2083, 0.0
      %v2420 = vmax.f32 %v2085, 0.0
      %v2421 = vmax.f32 %v2088, 0.0
      %v2422 = vmax.f32 %v2090, 0.0
      %v2423 = vmax.f32 %v2093, 0.0
      %v2424 = vmax.f32 %v2095, 0.0
      %v2425 = vmax.f32 %v2098, 0.0
      %v2426 = vmax.f32 %v2100, 0.0
      %v2427 = vmax.f32 %v2103, 0.0
      %v2428 = vmax.f32 %v2105, 0.0
      %v2429 = vmax.f32 %v2108, 0.0
      %v2430 = vmax.f32 %v2110, 0.0
      %v2431 = vmax.f32 %v2113, 0.0
      %v2432 = vmax.f32 %v2115, 0.0
      %v2433 = vmax.f32 %v2118, 0.0
      %v2434 = vmax.f32 %v2120, 0.0
      %v2435 = vmax.f32 %v2123, 0.0
      %v2436 = vmax.f32 %v2125, 0.0
      %v2437 = vmax.f32 %v2128, 0.0
      %v2438 = vmax.f32 %v2130, 0.0
      %v2439 = vmax.f32 %v2133, 0.0
      %v2440 = vmax.f32 %v2135, 0.0
      %v2441 = vmax.f32 %v2138, 0.0
      %v2442 = vmax.f32 %v2140, 0.0
      %v2443 = vmax.f32 %v2143, 0.0
      %v2444 = vmax.f32 %v2145, 0.0
      %v2445 = vmax.f32 %v2148, 0.0
      %v2446 = vmax.f32 %v2150, 0.0
      %v2447 = vmax.f32 %v2153, 0.0
      %v2448 = vmax.f32 %v2155, 0.0
      %v2449 = vmax.f32 %v2158, 0.0
      %v2450 = vmax.f32 %v2160, 0.0
      %v2451 = vmax.f32 %v2163, 0.0
      %v2452 = vmax.f32 %v2165, 0.0
      %v2453 = vmax.f32 %v2168, 0.0
      %v2454 = vmax.f32 %v2170, 0.0
      %v2455 = vmax.f32 %v2173, 0.0
      %v2456 = vmax.f32 %v2175, 0.0
      %v2457 = vmax.f32 %v2178, 0.0
      %v2458 = vmax.f32 %v2180, 0.0
      %v2459 = vmax.f32 %v2183, 0.0
      %v2460 = vmax.f32 %v2185, 0.0
      %v2461 = vmax.f32 %v2188, 0.0
      %v2462 = vmax.f32 %v2190, 0.0
      %v2463 = vmax.f32 %v2193, 0.0
      %v2464 = vmax.f32 %v2195, 0.0
      %v2465 = vmax.f32 %v2198, 0.0
      %v2466 = vmax.f32 %v2200, 0.0
      %v2467 = vmax.f32 %v2203, 0.0
      %v2468 = vmax.f32 %v2205, 0.0
      %v2469 = vmax.f32 %v2208, 0.0
      %v2470 = vmax.f32 %v2210, 0.0
      %v2471 = vmax.f32 %v2213, 0.0
      %v2472 = vmax.f32 %v2215, 0.0
      %v2473 = vld [vmem:[%s215] sm:$0xff]
      %v2474 = vld [vmem:[%s215 + $0x8] sm:$0xff]
      %v2475 = vld [vmem:[%s215 + $0x10] sm:$0xff]
      %v2476 = vld [vmem:[%s215 + $0x18] sm:$0xff]
      %v2477 = vld [vmem:[%s215 + $0x20] sm:$0xff]
      %v2478 = vld [vmem:[%s215 + $0x28] sm:$0xff]
      %v2479 = vld [vmem:[%s215 + $0x30] sm:$0xff]
      %v2480 = vld [vmem:[%s215 + $0x38] sm:$0xff]
      %v2481 = vld [vmem:[%s215 + $0x40] sm:$0xff]
      %v2482 = vld [vmem:[%s215 + $0x48] sm:$0xff]
      %v2483 = vld [vmem:[%s215 + $0x50] sm:$0xff]
      %v2484 = vld [vmem:[%s215 + $0x58] sm:$0xff]
      %v2485 = vld [vmem:[%s215 + $0x60] sm:$0xff]
      %v2486 = vld [vmem:[%s215 + $0x68] sm:$0xff]
      %v2487 = vld [vmem:[%s215 + $0x70] sm:$0xff]
      %v2488 = vld [vmem:[%s215 + $0x78] sm:$0xff]
      %v2489 = vld [vmem:[%s215 + $0x80] sm:$0xff]
      %v2490 = vld [vmem:[%s215 + $0x88] sm:$0xff]
      %v2491 = vld [vmem:[%s215 + $0x90] sm:$0xff]
      %v2492 = vld [vmem:[%s215 + $0x98] sm:$0xff]
      %v2493 = vld [vmem:[%s215 + $0xa0] sm:$0xff]
      %v2494 = vld [vmem:[%s215 + $0xa8] sm:$0xff]
      %v2495 = vld [vmem:[%s215 + $0xb0] sm:$0xff]
      %v2496 = vld [vmem:[%s215 + $0xb8] sm:$0xff]
      %v2497 = vld [vmem:[%s215 + $0xc0] sm:$0xff]
      %v2498 = vld [vmem:[%s215 + $0xc8] sm:$0xff]
      %v2499 = vld [vmem:[%s215 + $0xd0] sm:$0xff]
      %v2500 = vld [vmem:[%s215 + $0xd8] sm:$0xff]
      %v2501 = vld [vmem:[%s215 + $0xe0] sm:$0xff]
      %v2502 = vld [vmem:[%s215 + $0xe8] sm:$0xff]
      %v2503 = vld [vmem:[%s215 + $0xf0] sm:$0xff]
      %v2504 = vld [vmem:[%s215 + $0xf8] sm:$0xff]
      %v2505 = vld [vmem:[%s215 + $0x100] sm:$0xff]
      %v2506 = vld [vmem:[%s215 + $0x108] sm:$0xff]
      %v2507 = vld [vmem:[%s215 + $0x110] sm:$0xff]
      %v2508 = vld [vmem:[%s215 + $0x118] sm:$0xff]
      %v2509 = vld [vmem:[%s215 + $0x120] sm:$0xff]
      %v2510 = vld [vmem:[%s215 + $0x128] sm:$0xff]
      %v2511 = vld [vmem:[%s215 + $0x130] sm:$0xff]
      %v2512 = vld [vmem:[%s215 + $0x138] sm:$0xff]
      %v2513 = vld [vmem:[%s215 + $0x140] sm:$0xff]
      %v2514 = vld [vmem:[%s215 + $0x148] sm:$0xff]
      %v2515 = vld [vmem:[%s215 + $0x150] sm:$0xff]
      %v2516 = vld [vmem:[%s215 + $0x158] sm:$0xff]
      %v2517 = vld [vmem:[%s215 + $0x160] sm:$0xff]
      %v2518 = vld [vmem:[%s215 + $0x168] sm:$0xff]
      %v2519 = vld [vmem:[%s215 + $0x170] sm:$0xff]
      %v2520 = vld [vmem:[%s215 + $0x178] sm:$0xff]
      %v2521 = vld [vmem:[%s215 + $0x180] sm:$0xff]
      %v2522 = vld [vmem:[%s215 + $0x188] sm:$0xff]
      %v2523 = vld [vmem:[%s215 + $0x190] sm:$0xff]
      %v2524 = vld [vmem:[%s215 + $0x198] sm:$0xff]
      %v2525 = vld [vmem:[%s215 + $0x1a0] sm:$0xff]
      %v2526 = vld [vmem:[%s215 + $0x1a8] sm:$0xff]
      %v2527 = vld [vmem:[%s215 + $0x1b0] sm:$0xff]
      %v2528 = vld [vmem:[%s215 + $0x1b8] sm:$0xff]
      %v2529 = vld [vmem:[%s215 + $0x1c0] sm:$0xff]
      %v2530 = vld [vmem:[%s215 + $0x1c8] sm:$0xff]
      %v2531 = vld [vmem:[%s215 + $0x1d0] sm:$0xff]
      %v2532 = vld [vmem:[%s215 + $0x1d8] sm:$0xff]
      %v2533 = vld [vmem:[%s215 + $0x1e0] sm:$0xff]
      %v2534 = vld [vmem:[%s215 + $0x1e8] sm:$0xff]
      %v2535 = vld [vmem:[%s215 + $0x1f0] sm:$0xff]
      %v2536 = vld [vmem:[%s215 + $0x1f8] sm:$0xff]
      %v2537 = vld [vmem:[%s215 + $0x200] sm:$0xff]
      %v2538 = vld [vmem:[%s215 + $0x208] sm:$0xff]
      %v2539 = vld [vmem:[%s215 + $0x210] sm:$0xff]
      %v2540 = vld [vmem:[%s215 + $0x218] sm:$0xff]
      %v2541 = vld [vmem:[%s215 + $0x220] sm:$0xff]
      %v2542 = vld [vmem:[%s215 + $0x228] sm:$0xff]
      %v2543 = vld [vmem:[%s215 + $0x230] sm:$0xff]
      %v2544 = vld [vmem:[%s215 + $0x238] sm:$0xff]
      %v2545 = vld [vmem:[%s215 + $0x240] sm:$0xff]
      %v2546 = vld [vmem:[%s215 + $0x248] sm:$0xff]
      %v2547 = vld [vmem:[%s215 + $0x250] sm:$0xff]
      %v2548 = vld [vmem:[%s215 + $0x258] sm:$0xff]
      %v2549 = vld [vmem:[%s215 + $0x260] sm:$0xff]
      %v2550 = vld [vmem:[%s215 + $0x268] sm:$0xff]
      %v2551 = vld [vmem:[%s215 + $0x270] sm:$0xff]
      %v2552 = vld [vmem:[%s215 + $0x278] sm:$0xff]
      %v2553 = vld [vmem:[%s215 + $0x280] sm:$0xff]
      %v2554 = vld [vmem:[%s215 + $0x288] sm:$0xff]
      %v2555 = vld [vmem:[%s215 + $0x290] sm:$0xff]
      %v2556 = vld [vmem:[%s215 + $0x298] sm:$0xff]
      %v2557 = vld [vmem:[%s215 + $0x2a0] sm:$0xff]
      %v2558 = vld [vmem:[%s215 + $0x2a8] sm:$0xff]
      %v2559 = vld [vmem:[%s215 + $0x2b0] sm:$0xff]
      %v2560 = vld [vmem:[%s215 + $0x2b8] sm:$0xff]
      %v2561 = vld [vmem:[%s215 + $0x2c0] sm:$0xff]
      %v2562 = vld [vmem:[%s215 + $0x2c8] sm:$0xff]
      %v2563 = vld [vmem:[%s215 + $0x2d0] sm:$0xff]
      %v2564 = vld [vmem:[%s215 + $0x2d8] sm:$0xff]
      %v2565 = vld [vmem:[%s215 + $0x2e0] sm:$0xff]
      %v2566 = vld [vmem:[%s215 + $0x2e8] sm:$0xff]
      %v2567 = vld [vmem:[%s215 + $0x2f0] sm:$0xff]
      %v2568 = vld [vmem:[%s215 + $0x2f8] sm:$0xff]
      %v2569 = vld [vmem:[%s215 + $0x300] sm:$0xff]
      %v2570 = vld [vmem:[%s215 + $0x308] sm:$0xff]
      %v2571 = vld [vmem:[%s215 + $0x310] sm:$0xff]
      %v2572 = vld [vmem:[%s215 + $0x318] sm:$0xff]
      %v2573 = vld [vmem:[%s215 + $0x320] sm:$0xff]
      %v2574 = vld [vmem:[%s215 + $0x328] sm:$0xff]
      %v2575 = vld [vmem:[%s215 + $0x330] sm:$0xff]
      %v2576 = vld [vmem:[%s215 + $0x338] sm:$0xff]
      %v2577 = vld [vmem:[%s215 + $0x340] sm:$0xff]
      %v2578 = vld [vmem:[%s215 + $0x348] sm:$0xff]
      %v2579 = vld [vmem:[%s215 + $0x350] sm:$0xff]
      %v2580 = vld [vmem:[%s215 + $0x358] sm:$0xff]
      %v2581 = vld [vmem:[%s215 + $0x360] sm:$0xff]
      %v2582 = vld [vmem:[%s215 + $0x368] sm:$0xff]
      %v2583 = vld [vmem:[%s215 + $0x370] sm:$0xff]
      %v2584 = vld [vmem:[%s215 + $0x378] sm:$0xff]
      %v2585 = vld [vmem:[%s215 + $0x380] sm:$0xff]
      %v2586 = vld [vmem:[%s215 + $0x388] sm:$0xff]
      %v2587 = vld [vmem:[%s215 + $0x390] sm:$0xff]
      %v2588 = vld [vmem:[%s215 + $0x398] sm:$0xff]
      %v2589 = vld [vmem:[%s215 + $0x3a0] sm:$0xff]
      %v2590 = vld [vmem:[%s215 + $0x3a8] sm:$0xff]
      %v2591 = vld [vmem:[%s215 + $0x3b0] sm:$0xff]
      %v2592 = vld [vmem:[%s215 + $0x3b8] sm:$0xff]
      %v2593 = vld [vmem:[%s215 + $0x3c0] sm:$0xff]
      %v2594 = vld [vmem:[%s215 + $0x3c8] sm:$0xff]
      %v2595 = vld [vmem:[%s215 + $0x3d0] sm:$0xff]
      %v2596 = vld [vmem:[%s215 + $0x3d8] sm:$0xff]
      %v2597 = vld [vmem:[%s215 + $0x3e0] sm:$0xff]
      %v2598 = vld [vmem:[%s215 + $0x3e8] sm:$0xff]
      %v2599 = vld [vmem:[%s215 + $0x3f0] sm:$0xff]
      %v2600 = vld [vmem:[%s215 + $0x3f8] sm:$0xff]
      %v2601 = vld [vmem:[%s215 + $0x400] sm:$0xff]
      %v2602 = vld [vmem:[%s215 + $0x408] sm:$0xff]
      %v2603 = vld [vmem:[%s215 + $0x410] sm:$0xff]
      %v2604 = vld [vmem:[%s215 + $0x418] sm:$0xff]
      %v2605 = vld [vmem:[%s215 + $0x420] sm:$0xff]
      %v2606 = vld [vmem:[%s215 + $0x428] sm:$0xff]
      %v2607 = vld [vmem:[%s215 + $0x430] sm:$0xff]
      %v2608 = vld [vmem:[%s215 + $0x438] sm:$0xff]
      %v2609 = vld [vmem:[%s215 + $0x440] sm:$0xff]
      %v2610 = vld [vmem:[%s215 + $0x448] sm:$0xff]
      %v2611 = vld [vmem:[%s215 + $0x450] sm:$0xff]
      %v2612 = vld [vmem:[%s215 + $0x458] sm:$0xff]
      %v2613 = vld [vmem:[%s215 + $0x460] sm:$0xff]
      %v2614 = vld [vmem:[%s215 + $0x468] sm:$0xff]
      %v2615 = vld [vmem:[%s215 + $0x470] sm:$0xff]
      %v2616 = vld [vmem:[%s215 + $0x478] sm:$0xff]
      %v2617 = vld [vmem:[%s215 + $0x480] sm:$0xff]
      %v2618 = vld [vmem:[%s215 + $0x488] sm:$0xff]
      %v2619 = vld [vmem:[%s215 + $0x490] sm:$0xff]
      %v2620 = vld [vmem:[%s215 + $0x498] sm:$0xff]
      %v2621 = vld [vmem:[%s215 + $0x4a0] sm:$0xff]
      %v2622 = vld [vmem:[%s215 + $0x4a8] sm:$0xff]
      %v2623 = vld [vmem:[%s215 + $0x4b0] sm:$0xff]
      %v2624 = vld [vmem:[%s215 + $0x4b8] sm:$0xff]
      %v2625 = vld [vmem:[%s215 + $0x4c0] sm:$0xff]
      %v2626 = vld [vmem:[%s215 + $0x4c8] sm:$0xff]
      %v2627 = vld [vmem:[%s215 + $0x4d0] sm:$0xff]
      %v2628 = vld [vmem:[%s215 + $0x4d8] sm:$0xff]
      %v2629 = vld [vmem:[%s215 + $0x4e0] sm:$0xff]
      %v2630 = vld [vmem:[%s215 + $0x4e8] sm:$0xff]
      %v2631 = vld [vmem:[%s215 + $0x4f0] sm:$0xff]
      %v2632 = vld [vmem:[%s215 + $0x4f8] sm:$0xff]
      %v2633 = vld [vmem:[%s215 + $0x500] sm:$0xff]
      %v2634 = vld [vmem:[%s215 + $0x508] sm:$0xff]
      %v2635 = vld [vmem:[%s215 + $0x510] sm:$0xff]
      %v2636 = vld [vmem:[%s215 + $0x518] sm:$0xff]
      %v2637 = vld [vmem:[%s215 + $0x520] sm:$0xff]
      %v2638 = vld [vmem:[%s215 + $0x528] sm:$0xff]
      %v2639 = vld [vmem:[%s215 + $0x530] sm:$0xff]
      %v2640 = vld [vmem:[%s215 + $0x538] sm:$0xff]
      %v2641 = vld [vmem:[%s215 + $0x540] sm:$0xff]
      %v2642 = vld [vmem:[%s215 + $0x548] sm:$0xff]
      %v2643 = vld [vmem:[%s215 + $0x550] sm:$0xff]
      %v2644 = vld [vmem:[%s215 + $0x558] sm:$0xff]
      %v2645 = vld [vmem:[%s215 + $0x560] sm:$0xff]
      %v2646 = vld [vmem:[%s215 + $0x568] sm:$0xff]
      %v2647 = vld [vmem:[%s215 + $0x570] sm:$0xff]
      %v2648 = vld [vmem:[%s215 + $0x578] sm:$0xff]
      %v2649 = vld [vmem:[%s215 + $0x580] sm:$0xff]
      %v2650 = vld [vmem:[%s215 + $0x588] sm:$0xff]
      %v2651 = vld [vmem:[%s215 + $0x590] sm:$0xff]
      %v2652 = vld [vmem:[%s215 + $0x598] sm:$0xff]
      %v2653 = vld [vmem:[%s215 + $0x5a0] sm:$0xff]
      %v2654 = vld [vmem:[%s215 + $0x5a8] sm:$0xff]
      %v2655 = vld [vmem:[%s215 + $0x5b0] sm:$0xff]
      %v2656 = vld [vmem:[%s215 + $0x5b8] sm:$0xff]
      %v2657 = vld [vmem:[%s215 + $0x5c0] sm:$0xff]
      %v2658 = vld [vmem:[%s215 + $0x5c8] sm:$0xff]
      %v2659 = vld [vmem:[%s215 + $0x5d0] sm:$0xff]
      %v2660 = vld [vmem:[%s215 + $0x5d8] sm:$0xff]
      %v2661 = vld [vmem:[%s215 + $0x5e0] sm:$0xff]
      %v2662 = vld [vmem:[%s215 + $0x5e8] sm:$0xff]
      %v2663 = vld [vmem:[%s215 + $0x5f0] sm:$0xff]
      %v2664 = vld [vmem:[%s215 + $0x5f8] sm:$0xff]
      %v2665 = vld [vmem:[%s215 + $0x600] sm:$0xff]
      %v2666 = vld [vmem:[%s215 + $0x608] sm:$0xff]
      %v2667 = vld [vmem:[%s215 + $0x610] sm:$0xff]
      %v2668 = vld [vmem:[%s215 + $0x618] sm:$0xff]
      %v2669 = vld [vmem:[%s215 + $0x620] sm:$0xff]
      %v2670 = vld [vmem:[%s215 + $0x628] sm:$0xff]
      %v2671 = vld [vmem:[%s215 + $0x630] sm:$0xff]
      %v2672 = vld [vmem:[%s215 + $0x638] sm:$0xff]
      %v2673 = vld [vmem:[%s215 + $0x640] sm:$0xff]
      %v2674 = vld [vmem:[%s215 + $0x648] sm:$0xff]
      %v2675 = vld [vmem:[%s215 + $0x650] sm:$0xff]
      %v2676 = vld [vmem:[%s215 + $0x658] sm:$0xff]
      %v2677 = vld [vmem:[%s215 + $0x660] sm:$0xff]
      %v2678 = vld [vmem:[%s215 + $0x668] sm:$0xff]
      %v2679 = vld [vmem:[%s215 + $0x670] sm:$0xff]
      %v2680 = vld [vmem:[%s215 + $0x678] sm:$0xff]
      %v2681 = vld [vmem:[%s215 + $0x680] sm:$0xff]
      %v2682 = vld [vmem:[%s215 + $0x688] sm:$0xff]
      %v2683 = vld [vmem:[%s215 + $0x690] sm:$0xff]
      %v2684 = vld [vmem:[%s215 + $0x698] sm:$0xff]
      %v2685 = vld [vmem:[%s215 + $0x6a0] sm:$0xff]
      %v2686 = vld [vmem:[%s215 + $0x6a8] sm:$0xff]
      %v2687 = vld [vmem:[%s215 + $0x6b0] sm:$0xff]
      %v2688 = vld [vmem:[%s215 + $0x6b8] sm:$0xff]
      %v2689 = vld [vmem:[%s215 + $0x6c0] sm:$0xff]
      %v2690 = vld [vmem:[%s215 + $0x6c8] sm:$0xff]
      %v2691 = vld [vmem:[%s215 + $0x6d0] sm:$0xff]
      %v2692 = vld [vmem:[%s215 + $0x6d8] sm:$0xff]
      %v2693 = vld [vmem:[%s215 + $0x6e0] sm:$0xff]
      %v2694 = vld [vmem:[%s215 + $0x6e8] sm:$0xff]
      %v2695 = vld [vmem:[%s215 + $0x6f0] sm:$0xff]
      %v2696 = vld [vmem:[%s215 + $0x6f8] sm:$0xff]
      %v2697 = vld [vmem:[%s215 + $0x700] sm:$0xff]
      %v2698 = vld [vmem:[%s215 + $0x708] sm:$0xff]
      %v2699 = vld [vmem:[%s215 + $0x710] sm:$0xff]
      %v2700 = vld [vmem:[%s215 + $0x718] sm:$0xff]
      %v2701 = vld [vmem:[%s215 + $0x720] sm:$0xff]
      %v2702 = vld [vmem:[%s215 + $0x728] sm:$0xff]
      %v2703 = vld [vmem:[%s215 + $0x730] sm:$0xff]
      %v2704 = vld [vmem:[%s215 + $0x738] sm:$0xff]
      %v2705 = vld [vmem:[%s215 + $0x740] sm:$0xff]
      %v2706 = vld [vmem:[%s215 + $0x748] sm:$0xff]
      %v2707 = vld [vmem:[%s215 + $0x750] sm:$0xff]
      %v2708 = vld [vmem:[%s215 + $0x758] sm:$0xff]
      %v2709 = vld [vmem:[%s215 + $0x760] sm:$0xff]
      %v2710 = vld [vmem:[%s215 + $0x768] sm:$0xff]
      %v2711 = vld [vmem:[%s215 + $0x770] sm:$0xff]
      %v2712 = vld [vmem:[%s215 + $0x778] sm:$0xff]
      %v2713 = vld [vmem:[%s215 + $0x780] sm:$0xff]
      %v2714 = vld [vmem:[%s215 + $0x788] sm:$0xff]
      %v2715 = vld [vmem:[%s215 + $0x790] sm:$0xff]
      %v2716 = vld [vmem:[%s215 + $0x798] sm:$0xff]
      %v2717 = vld [vmem:[%s215 + $0x7a0] sm:$0xff]
      %v2718 = vld [vmem:[%s215 + $0x7a8] sm:$0xff]
      %v2719 = vld [vmem:[%s215 + $0x7b0] sm:$0xff]
      %v2720 = vld [vmem:[%s215 + $0x7b8] sm:$0xff]
      %v2721 = vld [vmem:[%s215 + $0x7c0] sm:$0xff]
      %v2722 = vld [vmem:[%s215 + $0x7c8] sm:$0xff]
      %v2723 = vld [vmem:[%s215 + $0x7d0] sm:$0xff]
      %v2724 = vld [vmem:[%s215 + $0x7d8] sm:$0xff]
      %v2725 = vld [vmem:[%s215 + $0x7e0] sm:$0xff]
      %v2726 = vld [vmem:[%s215 + $0x7e8] sm:$0xff]
      %v2727 = vld [vmem:[%s215 + $0x7f0] sm:$0xff]
      %v2728 = vld [vmem:[%s215 + $0x7f8] sm:$0xff]
      %2730 = vset.pattern.permute.xlu0 0
      %2731 = vperm.xlu0 %2730, %v2473
      %v2732 = vpop.permute.xlu0 %2731
      %2735 = vset.pattern.permute.xlu0 0
      %2736 = vperm.xlu0 %2735, %v2474
      %v2737 = vpop.permute.xlu0 %2736
      %2740 = vset.pattern.permute.xlu0 0
      %2741 = vperm.xlu0 %2740, %v2475
      %v2742 = vpop.permute.xlu0 %2741
      %2745 = vset.pattern.permute.xlu0 0
      %2746 = vperm.xlu0 %2745, %v2476
      %v2747 = vpop.permute.xlu0 %2746
      %2750 = vset.pattern.permute.xlu0 0
      %2751 = vperm.xlu0 %2750, %v2477
      %v2752 = vpop.permute.xlu0 %2751
      %2755 = vset.pattern.permute.xlu0 0
      %2756 = vperm.xlu0 %2755, %v2478
      %v2757 = vpop.permute.xlu0 %2756
      %2760 = vset.pattern.permute.xlu0 0
      %2761 = vperm.xlu0 %2760, %v2479
      %v2762 = vpop.permute.xlu0 %2761
      %2765 = vset.pattern.permute.xlu0 0
      %2766 = vperm.xlu0 %2765, %v2480
      %v2767 = vpop.permute.xlu0 %2766
      %2770 = vset.pattern.permute.xlu0 0
      %2771 = vperm.xlu0 %2770, %v2481
      %v2772 = vpop.permute.xlu0 %2771
      %2775 = vset.pattern.permute.xlu0 0
      %2776 = vperm.xlu0 %2775, %v2482
      %v2777 = vpop.permute.xlu0 %2776
      %2780 = vset.pattern.permute.xlu0 0
      %2781 = vperm.xlu0 %2780, %v2483
      %v2782 = vpop.permute.xlu0 %2781
      %2785 = vset.pattern.permute.xlu0 0
      %2786 = vperm.xlu0 %2785, %v2484
      %v2787 = vpop.permute.xlu0 %2786
      %2790 = vset.pattern.permute.xlu0 0
      %2791 = vperm.xlu0 %2790, %v2485
      %v2792 = vpop.permute.xlu0 %2791
      %2795 = vset.pattern.permute.xlu0 0
      %2796 = vperm.xlu0 %2795, %v2486
      %v2797 = vpop.permute.xlu0 %2796
      %2800 = vset.pattern.permute.xlu0 0
      %2801 = vperm.xlu0 %2800, %v2487
      %v2802 = vpop.permute.xlu0 %2801
      %2805 = vset.pattern.permute.xlu0 0
      %2806 = vperm.xlu0 %2805, %v2488
      %v2807 = vpop.permute.xlu0 %2806
      %2810 = vset.pattern.permute.xlu0 0
      %2811 = vperm.xlu0 %2810, %v2489
      %v2812 = vpop.permute.xlu0 %2811
      %2815 = vset.pattern.permute.xlu0 0
      %2816 = vperm.xlu0 %2815, %v2490
      %v2817 = vpop.permute.xlu0 %2816
      %2820 = vset.pattern.permute.xlu0 0
      %2821 = vperm.xlu0 %2820, %v2491
      %v2822 = vpop.permute.xlu0 %2821
      %2825 = vset.pattern.permute.xlu0 0
      %2826 = vperm.xlu0 %2825, %v2492
      %v2827 = vpop.permute.xlu0 %2826
      %2830 = vset.pattern.permute.xlu0 0
      %2831 = vperm.xlu0 %2830, %v2493
      %v2832 = vpop.permute.xlu0 %2831
      %2835 = vset.pattern.permute.xlu0 0
      %2836 = vperm.xlu0 %2835, %v2494
      %v2837 = vpop.permute.xlu0 %2836
      %2840 = vset.pattern.permute.xlu0 0
      %2841 = vperm.xlu0 %2840, %v2495
      %v2842 = vpop.permute.xlu0 %2841
      %2845 = vset.pattern.permute.xlu0 0
      %2846 = vperm.xlu0 %2845, %v2496
      %v2847 = vpop.permute.xlu0 %2846
      %2850 = vset.pattern.permute.xlu0 0
      %2851 = vperm.xlu0 %2850, %v2497
      %v2852 = vpop.permute.xlu0 %2851
      %2855 = vset.pattern.permute.xlu0 0
      %2856 = vperm.xlu0 %2855, %v2498
      %v2857 = vpop.permute.xlu0 %2856
      %2860 = vset.pattern.permute.xlu0 0
      %2861 = vperm.xlu0 %2860, %v2499
      %v2862 = vpop.permute.xlu0 %2861
      %2865 = vset.pattern.permute.xlu0 0
      %2866 = vperm.xlu0 %2865, %v2500
      %v2867 = vpop.permute.xlu0 %2866
      %2870 = vset.pattern.permute.xlu0 0
      %2871 = vperm.xlu0 %2870, %v2501
      %v2872 = vpop.permute.xlu0 %2871
      %2875 = vset.pattern.permute.xlu0 0
      %2876 = vperm.xlu0 %2875, %v2502
      %v2877 = vpop.permute.xlu0 %2876
      %2880 = vset.pattern.permute.xlu0 0
      %2881 = vperm.xlu0 %2880, %v2503
      %v2882 = vpop.permute.xlu0 %2881
      %2885 = vset.pattern.permute.xlu0 0
      %2886 = vperm.xlu0 %2885, %v2504
      %v2887 = vpop.permute.xlu0 %2886
      %2890 = vset.pattern.permute.xlu0 0
      %2891 = vperm.xlu0 %2890, %v2505
      %v2892 = vpop.permute.xlu0 %2891
      %2895 = vset.pattern.permute.xlu0 0
      %2896 = vperm.xlu0 %2895, %v2506
      %v2897 = vpop.permute.xlu0 %2896
      %2900 = vset.pattern.permute.xlu0 0
      %2901 = vperm.xlu0 %2900, %v2507
      %v2902 = vpop.permute.xlu0 %2901
      %2905 = vset.pattern.permute.xlu0 0
      %2906 = vperm.xlu0 %2905, %v2508
      %v2907 = vpop.permute.xlu0 %2906
      %2910 = vset.pattern.permute.xlu0 0
      %2911 = vperm.xlu0 %2910, %v2509
      %v2912 = vpop.permute.xlu0 %2911
      %2915 = vset.pattern.permute.xlu0 0
      %2916 = vperm.xlu0 %2915, %v2510
      %v2917 = vpop.permute.xlu0 %2916
      %2920 = vset.pattern.permute.xlu0 0
      %2921 = vperm.xlu0 %2920, %v2511
      %v2922 = vpop.permute.xlu0 %2921
      %2925 = vset.pattern.permute.xlu0 0
      %2926 = vperm.xlu0 %2925, %v2512
      %v2927 = vpop.permute.xlu0 %2926
      %2930 = vset.pattern.permute.xlu0 0
      %2931 = vperm.xlu0 %2930, %v2513
      %v2932 = vpop.permute.xlu0 %2931
      %2935 = vset.pattern.permute.xlu0 0
      %2936 = vperm.xlu0 %2935, %v2514
      %v2937 = vpop.permute.xlu0 %2936
      %2940 = vset.pattern.permute.xlu0 0
      %2941 = vperm.xlu0 %2940, %v2515
      %v2942 = vpop.permute.xlu0 %2941
      %2945 = vset.pattern.permute.xlu0 0
      %2946 = vperm.xlu0 %2945, %v2516
      %v2947 = vpop.permute.xlu0 %2946
      %2950 = vset.pattern.permute.xlu0 0
      %2951 = vperm.xlu0 %2950, %v2517
      %v2952 = vpop.permute.xlu0 %2951
      %2955 = vset.pattern.permute.xlu0 0
      %2956 = vperm.xlu0 %2955, %v2518
      %v2957 = vpop.permute.xlu0 %2956
      %2960 = vset.pattern.permute.xlu0 0
      %2961 = vperm.xlu0 %2960, %v2519
      %v2962 = vpop.permute.xlu0 %2961
      %2965 = vset.pattern.permute.xlu0 0
      %2966 = vperm.xlu0 %2965, %v2520
      %v2967 = vpop.permute.xlu0 %2966
      %2970 = vset.pattern.permute.xlu0 0
      %2971 = vperm.xlu0 %2970, %v2521
      %v2972 = vpop.permute.xlu0 %2971
      %2975 = vset.pattern.permute.xlu0 0
      %2976 = vperm.xlu0 %2975, %v2522
      %v2977 = vpop.permute.xlu0 %2976
      %2980 = vset.pattern.permute.xlu0 0
      %2981 = vperm.xlu0 %2980, %v2523
      %v2982 = vpop.permute.xlu0 %2981
      %2985 = vset.pattern.permute.xlu0 0
      %2986 = vperm.xlu0 %2985, %v2524
      %v2987 = vpop.permute.xlu0 %2986
      %2990 = vset.pattern.permute.xlu0 0
      %2991 = vperm.xlu0 %2990, %v2525
      %v2992 = vpop.permute.xlu0 %2991
      %2995 = vset.pattern.permute.xlu0 0
      %2996 = vperm.xlu0 %2995, %v2526
      %v2997 = vpop.permute.xlu0 %2996
      %3000 = vset.pattern.permute.xlu0 0
      %3001 = vperm.xlu0 %3000, %v2527
      %v3002 = vpop.permute.xlu0 %3001
      %3005 = vset.pattern.permute.xlu0 0
      %3006 = vperm.xlu0 %3005, %v2528
      %v3007 = vpop.permute.xlu0 %3006
      %3010 = vset.pattern.permute.xlu0 0
      %3011 = vperm.xlu0 %3010, %v2529
      %v3012 = vpop.permute.xlu0 %3011
      %3015 = vset.pattern.permute.xlu0 0
      %3016 = vperm.xlu0 %3015, %v2530
      %v3017 = vpop.permute.xlu0 %3016
      %3020 = vset.pattern.permute.xlu0 0
      %3021 = vperm.xlu0 %3020, %v2531
      %v3022 = vpop.permute.xlu0 %3021
      %3025 = vset.pattern.permute.xlu0 0
      %3026 = vperm.xlu0 %3025, %v2532
      %v3027 = vpop.permute.xlu0 %3026
      %3030 = vset.pattern.permute.xlu0 0
      %3031 = vperm.xlu0 %3030, %v2533
      %v3032 = vpop.permute.xlu0 %3031
      %3035 = vset.pattern.permute.xlu0 0
      %3036 = vperm.xlu0 %3035, %v2534
      %v3037 = vpop.permute.xlu0 %3036
      %3040 = vset.pattern.permute.xlu0 0
      %3041 = vperm.xlu0 %3040, %v2535
      %v3042 = vpop.permute.xlu0 %3041
      %3045 = vset.pattern.permute.xlu0 0
      %3046 = vperm.xlu0 %3045, %v2536
      %v3047 = vpop.permute.xlu0 %3046
      %3050 = vset.pattern.permute.xlu0 0
      %3051 = vperm.xlu0 %3050, %v2537
      %v3052 = vpop.permute.xlu0 %3051
      %3055 = vset.pattern.permute.xlu0 0
      %3056 = vperm.xlu0 %3055, %v2538
      %v3057 = vpop.permute.xlu0 %3056
      %3060 = vset.pattern.permute.xlu0 0
      %3061 = vperm.xlu0 %3060, %v2539
      %v3062 = vpop.permute.xlu0 %3061
      %3065 = vset.pattern.permute.xlu0 0
      %3066 = vperm.xlu0 %3065, %v2540
      %v3067 = vpop.permute.xlu0 %3066
      %3070 = vset.pattern.permute.xlu0 0
      %3071 = vperm.xlu0 %3070, %v2541
      %v3072 = vpop.permute.xlu0 %3071
      %3075 = vset.pattern.permute.xlu0 0
      %3076 = vperm.xlu0 %3075, %v2542
      %v3077 = vpop.permute.xlu0 %3076
      %3080 = vset.pattern.permute.xlu0 0
      %3081 = vperm.xlu0 %3080, %v2543
      %v3082 = vpop.permute.xlu0 %3081
      %3085 = vset.pattern.permute.xlu0 0
      %3086 = vperm.xlu0 %3085, %v2544
      %v3087 = vpop.permute.xlu0 %3086
      %3090 = vset.pattern.permute.xlu0 0
      %3091 = vperm.xlu0 %3090, %v2545
      %v3092 = vpop.permute.xlu0 %3091
      %3095 = vset.pattern.permute.xlu0 0
      %3096 = vperm.xlu0 %3095, %v2546
      %v3097 = vpop.permute.xlu0 %3096
      %3100 = vset.pattern.permute.xlu0 0
      %3101 = vperm.xlu0 %3100, %v2547
      %v3102 = vpop.permute.xlu0 %3101
      %3105 = vset.pattern.permute.xlu0 0
      %3106 = vperm.xlu0 %3105, %v2548
      %v3107 = vpop.permute.xlu0 %3106
      %3110 = vset.pattern.permute.xlu0 0
      %3111 = vperm.xlu0 %3110, %v2549
      %v3112 = vpop.permute.xlu0 %3111
      %3115 = vset.pattern.permute.xlu0 0
      %3116 = vperm.xlu0 %3115, %v2550
      %v3117 = vpop.permute.xlu0 %3116
      %3120 = vset.pattern.permute.xlu0 0
      %3121 = vperm.xlu0 %3120, %v2551
      %v3122 = vpop.permute.xlu0 %3121
      %3125 = vset.pattern.permute.xlu0 0
      %3126 = vperm.xlu0 %3125, %v2552
      %v3127 = vpop.permute.xlu0 %3126
      %3130 = vset.pattern.permute.xlu0 0
      %3131 = vperm.xlu0 %3130, %v2553
      %v3132 = vpop.permute.xlu0 %3131
      %3135 = vset.pattern.permute.xlu0 0
      %3136 = vperm.xlu0 %3135, %v2554
      %v3137 = vpop.permute.xlu0 %3136
      %3140 = vset.pattern.permute.xlu0 0
      %3141 = vperm.xlu0 %3140, %v2555
      %v3142 = vpop.permute.xlu0 %3141
      %3145 = vset.pattern.permute.xlu0 0
      %3146 = vperm.xlu0 %3145, %v2556
      %v3147 = vpop.permute.xlu0 %3146
      %3150 = vset.pattern.permute.xlu0 0
      %3151 = vperm.xlu0 %3150, %v2557
      %v3152 = vpop.permute.xlu0 %3151
      %3155 = vset.pattern.permute.xlu0 0
      %3156 = vperm.xlu0 %3155, %v2558
      %v3157 = vpop.permute.xlu0 %3156
      %3160 = vset.pattern.permute.xlu0 0
      %3161 = vperm.xlu0 %3160, %v2559
      %v3162 = vpop.permute.xlu0 %3161
      %3165 = vset.pattern.permute.xlu0 0
      %3166 = vperm.xlu0 %3165, %v2560
      %v3167 = vpop.permute.xlu0 %3166
      %3170 = vset.pattern.permute.xlu0 0
      %3171 = vperm.xlu0 %3170, %v2561
      %v3172 = vpop.permute.xlu0 %3171
      %3175 = vset.pattern.permute.xlu0 0
      %3176 = vperm.xlu0 %3175, %v2562
      %v3177 = vpop.permute.xlu0 %3176
      %3180 = vset.pattern.permute.xlu0 0
      %3181 = vperm.xlu0 %3180, %v2563
      %v3182 = vpop.permute.xlu0 %3181
      %3185 = vset.pattern.permute.xlu0 0
      %3186 = vperm.xlu0 %3185, %v2564
      %v3187 = vpop.permute.xlu0 %3186
      %3190 = vset.pattern.permute.xlu0 0
      %3191 = vperm.xlu0 %3190, %v2565
      %v3192 = vpop.permute.xlu0 %3191
      %3195 = vset.pattern.permute.xlu0 0
      %3196 = vperm.xlu0 %3195, %v2566
      %v3197 = vpop.permute.xlu0 %3196
      %3200 = vset.pattern.permute.xlu0 0
      %3201 = vperm.xlu0 %3200, %v2567
      %v3202 = vpop.permute.xlu0 %3201
      %3205 = vset.pattern.permute.xlu0 0
      %3206 = vperm.xlu0 %3205, %v2568
      %v3207 = vpop.permute.xlu0 %3206
      %3210 = vset.pattern.permute.xlu0 0
      %3211 = vperm.xlu0 %3210, %v2569
      %v3212 = vpop.permute.xlu0 %3211
      %3215 = vset.pattern.permute.xlu0 0
      %3216 = vperm.xlu0 %3215, %v2570
      %v3217 = vpop.permute.xlu0 %3216
      %3220 = vset.pattern.permute.xlu0 0
      %3221 = vperm.xlu0 %3220, %v2571
      %v3222 = vpop.permute.xlu0 %3221
      %3225 = vset.pattern.permute.xlu0 0
      %3226 = vperm.xlu0 %3225, %v2572
      %v3227 = vpop.permute.xlu0 %3226
      %3230 = vset.pattern.permute.xlu0 0
      %3231 = vperm.xlu0 %3230, %v2573
      %v3232 = vpop.permute.xlu0 %3231
      %3235 = vset.pattern.permute.xlu0 0
      %3236 = vperm.xlu0 %3235, %v2574
      %v3237 = vpop.permute.xlu0 %3236
      %3240 = vset.pattern.permute.xlu0 0
      %3241 = vperm.xlu0 %3240, %v2575
      %v3242 = vpop.permute.xlu0 %3241
      %3245 = vset.pattern.permute.xlu0 0
      %3246 = vperm.xlu0 %3245, %v2576
      %v3247 = vpop.permute.xlu0 %3246
      %3250 = vset.pattern.permute.xlu0 0
      %3251 = vperm.xlu0 %3250, %v2577
      %v3252 = vpop.permute.xlu0 %3251
      %3255 = vset.pattern.permute.xlu0 0
      %3256 = vperm.xlu0 %3255, %v2578
      %v3257 = vpop.permute.xlu0 %3256
      %3260 = vset.pattern.permute.xlu0 0
      %3261 = vperm.xlu0 %3260, %v2579
      %v3262 = vpop.permute.xlu0 %3261
      %3265 = vset.pattern.permute.xlu0 0
      %3266 = vperm.xlu0 %3265, %v2580
      %v3267 = vpop.permute.xlu0 %3266
      %3270 = vset.pattern.permute.xlu0 0
      %3271 = vperm.xlu0 %3270, %v2581
      %v3272 = vpop.permute.xlu0 %3271
      %3275 = vset.pattern.permute.xlu0 0
      %3276 = vperm.xlu0 %3275, %v2582
      %v3277 = vpop.permute.xlu0 %3276
      %3280 = vset.pattern.permute.xlu0 0
      %3281 = vperm.xlu0 %3280, %v2583
      %v3282 = vpop.permute.xlu0 %3281
      %3285 = vset.pattern.permute.xlu0 0
      %3286 = vperm.xlu0 %3285, %v2584
      %v3287 = vpop.permute.xlu0 %3286
      %3290 = vset.pattern.permute.xlu0 0
      %3291 = vperm.xlu0 %3290, %v2585
      %v3292 = vpop.permute.xlu0 %3291
      %3295 = vset.pattern.permute.xlu0 0
      %3296 = vperm.xlu0 %3295, %v2586
      %v3297 = vpop.permute.xlu0 %3296
      %3300 = vset.pattern.permute.xlu0 0
      %3301 = vperm.xlu0 %3300, %v2587
      %v3302 = vpop.permute.xlu0 %3301
      %3305 = vset.pattern.permute.xlu0 0
      %3306 = vperm.xlu0 %3305, %v2588
      %v3307 = vpop.permute.xlu0 %3306
      %3310 = vset.pattern.permute.xlu0 0
      %3311 = vperm.xlu0 %3310, %v2589
      %v3312 = vpop.permute.xlu0 %3311
      %3315 = vset.pattern.permute.xlu0 0
      %3316 = vperm.xlu0 %3315, %v2590
      %v3317 = vpop.permute.xlu0 %3316
      %3320 = vset.pattern.permute.xlu0 0
      %3321 = vperm.xlu0 %3320, %v2591
      %v3322 = vpop.permute.xlu0 %3321
      %3325 = vset.pattern.permute.xlu0 0
      %3326 = vperm.xlu0 %3325, %v2592
      %v3327 = vpop.permute.xlu0 %3326
      %3330 = vset.pattern.permute.xlu0 0
      %3331 = vperm.xlu0 %3330, %v2593
      %v3332 = vpop.permute.xlu0 %3331
      %3335 = vset.pattern.permute.xlu0 0
      %3336 = vperm.xlu0 %3335, %v2594
      %v3337 = vpop.permute.xlu0 %3336
      %3340 = vset.pattern.permute.xlu0 0
      %3341 = vperm.xlu0 %3340, %v2595
      %v3342 = vpop.permute.xlu0 %3341
      %3345 = vset.pattern.permute.xlu0 0
      %3346 = vperm.xlu0 %3345, %v2596
      %v3347 = vpop.permute.xlu0 %3346
      %3350 = vset.pattern.permute.xlu0 0
      %3351 = vperm.xlu0 %3350, %v2597
      %v3352 = vpop.permute.xlu0 %3351
      %3355 = vset.pattern.permute.xlu0 0
      %3356 = vperm.xlu0 %3355, %v2598
      %v3357 = vpop.permute.xlu0 %3356
      %3360 = vset.pattern.permute.xlu0 0
      %3361 = vperm.xlu0 %3360, %v2599
      %v3362 = vpop.permute.xlu0 %3361
      %3365 = vset.pattern.permute.xlu0 0
      %3366 = vperm.xlu0 %3365, %v2600
      %v3367 = vpop.permute.xlu0 %3366
      %3370 = vset.pattern.permute.xlu0 0
      %3371 = vperm.xlu0 %3370, %v2601
      %v3372 = vpop.permute.xlu0 %3371
      %3375 = vset.pattern.permute.xlu0 0
      %3376 = vperm.xlu0 %3375, %v2602
      %v3377 = vpop.permute.xlu0 %3376
      %3380 = vset.pattern.permute.xlu0 0
      %3381 = vperm.xlu0 %3380, %v2603
      %v3382 = vpop.permute.xlu0 %3381
      %3385 = vset.pattern.permute.xlu0 0
      %3386 = vperm.xlu0 %3385, %v2604
      %v3387 = vpop.permute.xlu0 %3386
      %3390 = vset.pattern.permute.xlu0 0
      %3391 = vperm.xlu0 %3390, %v2605
      %v3392 = vpop.permute.xlu0 %3391
      %3395 = vset.pattern.permute.xlu0 0
      %3396 = vperm.xlu0 %3395, %v2606
      %v3397 = vpop.permute.xlu0 %3396
      %3400 = vset.pattern.permute.xlu0 0
      %3401 = vperm.xlu0 %3400, %v2607
      %v3402 = vpop.permute.xlu0 %3401
      %3405 = vset.pattern.permute.xlu0 0
      %3406 = vperm.xlu0 %3405, %v2608
      %v3407 = vpop.permute.xlu0 %3406
      %3410 = vset.pattern.permute.xlu0 0
      %3411 = vperm.xlu0 %3410, %v2609
      %v3412 = vpop.permute.xlu0 %3411
      %3415 = vset.pattern.permute.xlu0 0
      %3416 = vperm.xlu0 %3415, %v2610
      %v3417 = vpop.permute.xlu0 %3416
      %3420 = vset.pattern.permute.xlu0 0
      %3421 = vperm.xlu0 %3420, %v2611
      %v3422 = vpop.permute.xlu0 %3421
      %3425 = vset.pattern.permute.xlu0 0
      %3426 = vperm.xlu0 %3425, %v2612
      %v3427 = vpop.permute.xlu0 %3426
      %3430 = vset.pattern.permute.xlu0 0
      %3431 = vperm.xlu0 %3430, %v2613
      %v3432 = vpop.permute.xlu0 %3431
      %3435 = vset.pattern.permute.xlu0 0
      %3436 = vperm.xlu0 %3435, %v2614
      %v3437 = vpop.permute.xlu0 %3436
      %3440 = vset.pattern.permute.xlu0 0
      %3441 = vperm.xlu0 %3440, %v2615
      %v3442 = vpop.permute.xlu0 %3441
      %3445 = vset.pattern.permute.xlu0 0
      %3446 = vperm.xlu0 %3445, %v2616
      %v3447 = vpop.permute.xlu0 %3446
      %3450 = vset.pattern.permute.xlu0 0
      %3451 = vperm.xlu0 %3450, %v2617
      %v3452 = vpop.permute.xlu0 %3451
      %3455 = vset.pattern.permute.xlu0 0
      %3456 = vperm.xlu0 %3455, %v2618
      %v3457 = vpop.permute.xlu0 %3456
      %3460 = vset.pattern.permute.xlu0 0
      %3461 = vperm.xlu0 %3460, %v2619
      %v3462 = vpop.permute.xlu0 %3461
      %3465 = vset.pattern.permute.xlu0 0
      %3466 = vperm.xlu0 %3465, %v2620
      %v3467 = vpop.permute.xlu0 %3466
      %3470 = vset.pattern.permute.xlu0 0
      %3471 = vperm.xlu0 %3470, %v2621
      %v3472 = vpop.permute.xlu0 %3471
      %3475 = vset.pattern.permute.xlu0 0
      %3476 = vperm.xlu0 %3475, %v2622
      %v3477 = vpop.permute.xlu0 %3476
      %3480 = vset.pattern.permute.xlu0 0
      %3481 = vperm.xlu0 %3480, %v2623
      %v3482 = vpop.permute.xlu0 %3481
      %3485 = vset.pattern.permute.xlu0 0
      %3486 = vperm.xlu0 %3485, %v2624
      %v3487 = vpop.permute.xlu0 %3486
      %3490 = vset.pattern.permute.xlu0 0
      %3491 = vperm.xlu0 %3490, %v2625
      %v3492 = vpop.permute.xlu0 %3491
      %3495 = vset.pattern.permute.xlu0 0
      %3496 = vperm.xlu0 %3495, %v2626
      %v3497 = vpop.permute.xlu0 %3496
      %3500 = vset.pattern.permute.xlu0 0
      %3501 = vperm.xlu0 %3500, %v2627
      %v3502 = vpop.permute.xlu0 %3501
      %3505 = vset.pattern.permute.xlu0 0
      %3506 = vperm.xlu0 %3505, %v2628
      %v3507 = vpop.permute.xlu0 %3506
      %3510 = vset.pattern.permute.xlu0 0
      %3511 = vperm.xlu0 %3510, %v2629
      %v3512 = vpop.permute.xlu0 %3511
      %3515 = vset.pattern.permute.xlu0 0
      %3516 = vperm.xlu0 %3515, %v2630
      %v3517 = vpop.permute.xlu0 %3516
      %3520 = vset.pattern.permute.xlu0 0
      %3521 = vperm.xlu0 %3520, %v2631
      %v3522 = vpop.permute.xlu0 %3521
      %3525 = vset.pattern.permute.xlu0 0
      %3526 = vperm.xlu0 %3525, %v2632
      %v3527 = vpop.permute.xlu0 %3526
      %3530 = vset.pattern.permute.xlu0 0
      %3531 = vperm.xlu0 %3530, %v2633
      %v3532 = vpop.permute.xlu0 %3531
      %3535 = vset.pattern.permute.xlu0 0
      %3536 = vperm.xlu0 %3535, %v2634
      %v3537 = vpop.permute.xlu0 %3536
      %3540 = vset.pattern.permute.xlu0 0
      %3541 = vperm.xlu0 %3540, %v2635
      %v3542 = vpop.permute.xlu0 %3541
      %3545 = vset.pattern.permute.xlu0 0
      %3546 = vperm.xlu0 %3545, %v2636
      %v3547 = vpop.permute.xlu0 %3546
      %3550 = vset.pattern.permute.xlu0 0
      %3551 = vperm.xlu0 %3550, %v2637
      %v3552 = vpop.permute.xlu0 %3551
      %3555 = vset.pattern.permute.xlu0 0
      %3556 = vperm.xlu0 %3555, %v2638
      %v3557 = vpop.permute.xlu0 %3556
      %3560 = vset.pattern.permute.xlu0 0
      %3561 = vperm.xlu0 %3560, %v2639
      %v3562 = vpop.permute.xlu0 %3561
      %3565 = vset.pattern.permute.xlu0 0
      %3566 = vperm.xlu0 %3565, %v2640
      %v3567 = vpop.permute.xlu0 %3566
      %3570 = vset.pattern.permute.xlu0 0
      %3571 = vperm.xlu0 %3570, %v2641
      %v3572 = vpop.permute.xlu0 %3571
      %3575 = vset.pattern.permute.xlu0 0
      %3576 = vperm.xlu0 %3575, %v2642
      %v3577 = vpop.permute.xlu0 %3576
      %3580 = vset.pattern.permute.xlu0 0
      %3581 = vperm.xlu0 %3580, %v2643
      %v3582 = vpop.permute.xlu0 %3581
      %3585 = vset.pattern.permute.xlu0 0
      %3586 = vperm.xlu0 %3585, %v2644
      %v3587 = vpop.permute.xlu0 %3586
      %3590 = vset.pattern.permute.xlu0 0
      %3591 = vperm.xlu0 %3590, %v2645
      %v3592 = vpop.permute.xlu0 %3591
      %3595 = vset.pattern.permute.xlu0 0
      %3596 = vperm.xlu0 %3595, %v2646
      %v3597 = vpop.permute.xlu0 %3596
      %3600 = vset.pattern.permute.xlu0 0
      %3601 = vperm.xlu0 %3600, %v2647
      %v3602 = vpop.permute.xlu0 %3601
      %3605 = vset.pattern.permute.xlu0 0
      %3606 = vperm.xlu0 %3605, %v2648
      %v3607 = vpop.permute.xlu0 %3606
      %3610 = vset.pattern.permute.xlu0 0
      %3611 = vperm.xlu0 %3610, %v2649
      %v3612 = vpop.permute.xlu0 %3611
      %3615 = vset.pattern.permute.xlu0 0
      %3616 = vperm.xlu0 %3615, %v2650
      %v3617 = vpop.permute.xlu0 %3616
      %3620 = vset.pattern.permute.xlu0 0
      %3621 = vperm.xlu0 %3620, %v2651
      %v3622 = vpop.permute.xlu0 %3621
      %3625 = vset.pattern.permute.xlu0 0
      %3626 = vperm.xlu0 %3625, %v2652
      %v3627 = vpop.permute.xlu0 %3626
      %3630 = vset.pattern.permute.xlu0 0
      %3631 = vperm.xlu0 %3630, %v2653
      %v3632 = vpop.permute.xlu0 %3631
      %3635 = vset.pattern.permute.xlu0 0
      %3636 = vperm.xlu0 %3635, %v2654
      %v3637 = vpop.permute.xlu0 %3636
      %3640 = vset.pattern.permute.xlu0 0
      %3641 = vperm.xlu0 %3640, %v2655
      %v3642 = vpop.permute.xlu0 %3641
      %3645 = vset.pattern.permute.xlu0 0
      %3646 = vperm.xlu0 %3645, %v2656
      %v3647 = vpop.permute.xlu0 %3646
      %3650 = vset.pattern.permute.xlu0 0
      %3651 = vperm.xlu0 %3650, %v2657
      %v3652 = vpop.permute.xlu0 %3651
      %3655 = vset.pattern.permute.xlu0 0
      %3656 = vperm.xlu0 %3655, %v2658
      %v3657 = vpop.permute.xlu0 %3656
      %3660 = vset.pattern.permute.xlu0 0
      %3661 = vperm.xlu0 %3660, %v2659
      %v3662 = vpop.permute.xlu0 %3661
      %3665 = vset.pattern.permute.xlu0 0
      %3666 = vperm.xlu0 %3665, %v2660
      %v3667 = vpop.permute.xlu0 %3666
      %3670 = vset.pattern.permute.xlu0 0
      %3671 = vperm.xlu0 %3670, %v2661
      %v3672 = vpop.permute.xlu0 %3671
      %3675 = vset.pattern.permute.xlu0 0
      %3676 = vperm.xlu0 %3675, %v2662
      %v3677 = vpop.permute.xlu0 %3676
      %3680 = vset.pattern.permute.xlu0 0
      %3681 = vperm.xlu0 %3680, %v2663
      %v3682 = vpop.permute.xlu0 %3681
      %3685 = vset.pattern.permute.xlu0 0
      %3686 = vperm.xlu0 %3685, %v2664
      %v3687 = vpop.permute.xlu0 %3686
      %3690 = vset.pattern.permute.xlu0 0
      %3691 = vperm.xlu0 %3690, %v2665
      %v3692 = vpop.permute.xlu0 %3691
      %3695 = vset.pattern.permute.xlu0 0
      %3696 = vperm.xlu0 %3695, %v2666
      %v3697 = vpop.permute.xlu0 %3696
      %3700 = vset.pattern.permute.xlu0 0
      %3701 = vperm.xlu0 %3700, %v2667
      %v3702 = vpop.permute.xlu0 %3701
      %3705 = vset.pattern.permute.xlu0 0
      %3706 = vperm.xlu0 %3705, %v2668
      %v3707 = vpop.permute.xlu0 %3706
      %3710 = vset.pattern.permute.xlu0 0
      %3711 = vperm.xlu0 %3710, %v2669
      %v3712 = vpop.permute.xlu0 %3711
      %3715 = vset.pattern.permute.xlu0 0
      %3716 = vperm.xlu0 %3715, %v2670
      %v3717 = vpop.permute.xlu0 %3716
      %3720 = vset.pattern.permute.xlu0 0
      %3721 = vperm.xlu0 %3720, %v2671
      %v3722 = vpop.permute.xlu0 %3721
      %3725 = vset.pattern.permute.xlu0 0
      %3726 = vperm.xlu0 %3725, %v2672
      %v3727 = vpop.permute.xlu0 %3726
      %3730 = vset.pattern.permute.xlu0 0
      %3731 = vperm.xlu0 %3730, %v2673
      %v3732 = vpop.permute.xlu0 %3731
      %3735 = vset.pattern.permute.xlu0 0
      %3736 = vperm.xlu0 %3735, %v2674
      %v3737 = vpop.permute.xlu0 %3736
      %3740 = vset.pattern.permute.xlu0 0
      %3741 = vperm.xlu0 %3740, %v2675
      %v3742 = vpop.permute.xlu0 %3741
      %3745 = vset.pattern.permute.xlu0 0
      %3746 = vperm.xlu0 %3745, %v2676
      %v3747 = vpop.permute.xlu0 %3746
      %3750 = vset.pattern.permute.xlu0 0
      %3751 = vperm.xlu0 %3750, %v2677
      %v3752 = vpop.permute.xlu0 %3751
      %3755 = vset.pattern.permute.xlu0 0
      %3756 = vperm.xlu0 %3755, %v2678
      %v3757 = vpop.permute.xlu0 %3756
      %3760 = vset.pattern.permute.xlu0 0
      %3761 = vperm.xlu0 %3760, %v2679
      %v3762 = vpop.permute.xlu0 %3761
      %3765 = vset.pattern.permute.xlu0 0
      %3766 = vperm.xlu0 %3765, %v2680
      %v3767 = vpop.permute.xlu0 %3766
      %3770 = vset.pattern.permute.xlu0 0
      %3771 = vperm.xlu0 %3770, %v2681
      %v3772 = vpop.permute.xlu0 %3771
      %3775 = vset.pattern.permute.xlu0 0
      %3776 = vperm.xlu0 %3775, %v2682
      %v3777 = vpop.permute.xlu0 %3776
      %3780 = vset.pattern.permute.xlu0 0
      %3781 = vperm.xlu0 %3780, %v2683
      %v3782 = vpop.permute.xlu0 %3781
      %3785 = vset.pattern.permute.xlu0 0
      %3786 = vperm.xlu0 %3785, %v2684
      %v3787 = vpop.permute.xlu0 %3786
      %3790 = vset.pattern.permute.xlu0 0
      %3791 = vperm.xlu0 %3790, %v2685
      %v3792 = vpop.permute.xlu0 %3791
      %3795 = vset.pattern.permute.xlu0 0
      %3796 = vperm.xlu0 %3795, %v2686
      %v3797 = vpop.permute.xlu0 %3796
      %3800 = vset.pattern.permute.xlu0 0
      %3801 = vperm.xlu0 %3800, %v2687
      %v3802 = vpop.permute.xlu0 %3801
      %3805 = vset.pattern.permute.xlu0 0
      %3806 = vperm.xlu0 %3805, %v2688
      %v3807 = vpop.permute.xlu0 %3806
      %3810 = vset.pattern.permute.xlu0 0
      %3811 = vperm.xlu0 %3810, %v2689
      %v3812 = vpop.permute.xlu0 %3811
      %3815 = vset.pattern.permute.xlu0 0
      %3816 = vperm.xlu0 %3815, %v2690
      %v3817 = vpop.permute.xlu0 %3816
      %3820 = vset.pattern.permute.xlu0 0
      %3821 = vperm.xlu0 %3820, %v2691
      %v3822 = vpop.permute.xlu0 %3821
      %3825 = vset.pattern.permute.xlu0 0
      %3826 = vperm.xlu0 %3825, %v2692
      %v3827 = vpop.permute.xlu0 %3826
      %3830 = vset.pattern.permute.xlu0 0
      %3831 = vperm.xlu0 %3830, %v2693
      %v3832 = vpop.permute.xlu0 %3831
      %3835 = vset.pattern.permute.xlu0 0
      %3836 = vperm.xlu0 %3835, %v2694
      %v3837 = vpop.permute.xlu0 %3836
      %3840 = vset.pattern.permute.xlu0 0
      %3841 = vperm.xlu0 %3840, %v2695
      %v3842 = vpop.permute.xlu0 %3841
      %3845 = vset.pattern.permute.xlu0 0
      %3846 = vperm.xlu0 %3845, %v2696
      %v3847 = vpop.permute.xlu0 %3846
      %3850 = vset.pattern.permute.xlu0 0
      %3851 = vperm.xlu0 %3850, %v2697
      %v3852 = vpop.permute.xlu0 %3851
      %3855 = vset.pattern.permute.xlu0 0
      %3856 = vperm.xlu0 %3855, %v2698
      %v3857 = vpop.permute.xlu0 %3856
      %3860 = vset.pattern.permute.xlu0 0
      %3861 = vperm.xlu0 %3860, %v2699
      %v3862 = vpop.permute.xlu0 %3861
      %3865 = vset.pattern.permute.xlu0 0
      %3866 = vperm.xlu0 %3865, %v2700
      %v3867 = vpop.permute.xlu0 %3866
      %3870 = vset.pattern.permute.xlu0 0
      %3871 = vperm.xlu0 %3870, %v2701
      %v3872 = vpop.permute.xlu0 %3871
      %3875 = vset.pattern.permute.xlu0 0
      %3876 = vperm.xlu0 %3875, %v2702
      %v3877 = vpop.permute.xlu0 %3876
      %3880 = vset.pattern.permute.xlu0 0
      %3881 = vperm.xlu0 %3880, %v2703
      %v3882 = vpop.permute.xlu0 %3881
      %3885 = vset.pattern.permute.xlu0 0
      %3886 = vperm.xlu0 %3885, %v2704
      %v3887 = vpop.permute.xlu0 %3886
      %3890 = vset.pattern.permute.xlu0 0
      %3891 = vperm.xlu0 %3890, %v2705
      %v3892 = vpop.permute.xlu0 %3891
      %3895 = vset.pattern.permute.xlu0 0
      %3896 = vperm.xlu0 %3895, %v2706
      %v3897 = vpop.permute.xlu0 %3896
      %3900 = vset.pattern.permute.xlu0 0
      %3901 = vperm.xlu0 %3900, %v2707
      %v3902 = vpop.permute.xlu0 %3901
      %3905 = vset.pattern.permute.xlu0 0
      %3906 = vperm.xlu0 %3905, %v2708
      %v3907 = vpop.permute.xlu0 %3906
      %3910 = vset.pattern.permute.xlu0 0
      %3911 = vperm.xlu0 %3910, %v2709
      %v3912 = vpop.permute.xlu0 %3911
      %3915 = vset.pattern.permute.xlu0 0
      %3916 = vperm.xlu0 %3915, %v2710
      %v3917 = vpop.permute.xlu0 %3916
      %3920 = vset.pattern.permute.xlu0 0
      %3921 = vperm.xlu0 %3920, %v2711
      %v3922 = vpop.permute.xlu0 %3921
      %3925 = vset.pattern.permute.xlu0 0
      %3926 = vperm.xlu0 %3925, %v2712
      %v3927 = vpop.permute.xlu0 %3926
      %3930 = vset.pattern.permute.xlu0 0
      %3931 = vperm.xlu0 %3930, %v2713
      %v3932 = vpop.permute.xlu0 %3931
      %3935 = vset.pattern.permute.xlu0 0
      %3936 = vperm.xlu0 %3935, %v2714
      %v3937 = vpop.permute.xlu0 %3936
      %3940 = vset.pattern.permute.xlu0 0
      %3941 = vperm.xlu0 %3940, %v2715
      %v3942 = vpop.permute.xlu0 %3941
      %3945 = vset.pattern.permute.xlu0 0
      %3946 = vperm.xlu0 %3945, %v2716
      %v3947 = vpop.permute.xlu0 %3946
      %3950 = vset.pattern.permute.xlu0 0
      %3951 = vperm.xlu0 %3950, %v2717
      %v3952 = vpop.permute.xlu0 %3951
      %3955 = vset.pattern.permute.xlu0 0
      %3956 = vperm.xlu0 %3955, %v2718
      %v3957 = vpop.permute.xlu0 %3956
      %3960 = vset.pattern.permute.xlu0 0
      %3961 = vperm.xlu0 %3960, %v2719
      %v3962 = vpop.permute.xlu0 %3961
      %3965 = vset.pattern.permute.xlu0 0
      %3966 = vperm.xlu0 %3965, %v2720
      %v3967 = vpop.permute.xlu0 %3966
      %3970 = vset.pattern.permute.xlu0 0
      %3971 = vperm.xlu0 %3970, %v2721
      %v3972 = vpop.permute.xlu0 %3971
      %3975 = vset.pattern.permute.xlu0 0
      %3976 = vperm.xlu0 %3975, %v2722
      %v3977 = vpop.permute.xlu0 %3976
      %3980 = vset.pattern.permute.xlu0 0
      %3981 = vperm.xlu0 %3980, %v2723
      %v3982 = vpop.permute.xlu0 %3981
      %3985 = vset.pattern.permute.xlu0 0
      %3986 = vperm.xlu0 %3985, %v2724
      %v3987 = vpop.permute.xlu0 %3986
      %3990 = vset.pattern.permute.xlu0 0
      %3991 = vperm.xlu0 %3990, %v2725
      %v3992 = vpop.permute.xlu0 %3991
      %3995 = vset.pattern.permute.xlu0 0
      %3996 = vperm.xlu0 %3995, %v2726
      %v3997 = vpop.permute.xlu0 %3996
      %4000 = vset.pattern.permute.xlu0 0
      %4001 = vperm.xlu0 %4000, %v2727
      %v4002 = vpop.permute.xlu0 %4001
      %4005 = vset.pattern.permute.xlu0 0
      %4006 = vperm.xlu0 %4005, %v2728
      %v4007 = vpop.permute.xlu0 %4006
      %v4009 = vmul.f32 %v2217, %v2732
      %v4010 = vmul.f32 %v2218, %v2737
      %v4011 = vmul.f32 %v2219, %v2742
      %v4012 = vmul.f32 %v2220, %v2747
      %v4013 = vmul.f32 %v2221, %v2752
      %v4014 = vmul.f32 %v2222, %v2757
      %v4015 = vmul.f32 %v2223, %v2762
      %v4016 = vmul.f32 %v2224, %v2767
      %v4017 = vmul.f32 %v2225, %v2772
      %v4018 = vmul.f32 %v2226, %v2777
      %v4019 = vmul.f32 %v2227, %v2782
      %v4020 = vmul.f32 %v2228, %v2787
      %v4021 = vmul.f32 %v2229, %v2792
      %v4022 = vmul.f32 %v2230, %v2797
      %v4023 = vmul.f32 %v2231, %v2802
      %v4024 = vmul.f32 %v2232, %v2807
      %v4025 = vmul.f32 %v2233, %v2812
      %v4026 = vmul.f32 %v2234, %v2817
      %v4027 = vmul.f32 %v2235, %v2822
      %v4028 = vmul.f32 %v2236, %v2827
      %v4029 = vmul.f32 %v2237, %v2832
      %v4030 = vmul.f32 %v2238, %v2837
      %v4031 = vmul.f32 %v2239, %v2842
      %v4032 = vmul.f32 %v2240, %v2847
      %v4033 = vmul.f32 %v2241, %v2852
      %v4034 = vmul.f32 %v2242, %v2857
      %v4035 = vmul.f32 %v2243, %v2862
      %v4036 = vmul.f32 %v2244, %v2867
      %v4037 = vmul.f32 %v2245, %v2872
      %v4038 = vmul.f32 %v2246, %v2877
      %v4039 = vmul.f32 %v2247, %v2882
      %v4040 = vmul.f32 %v2248, %v2887
      %v4041 = vmul.f32 %v2249, %v2892
      %v4042 = vmul.f32 %v2250, %v2897
      %v4043 = vmul.f32 %v2251, %v2902
      %v4044 = vmul.f32 %v2252, %v2907
      %v4045 = vmul.f32 %v2253, %v2912
      %v4046 = vmul.f32 %v2254, %v2917
      %v4047 = vmul.f32 %v2255, %v2922
      %v4048 = vmul.f32 %v2256, %v2927
      %v4049 = vmul.f32 %v2257, %v2932
      %v4050 = vmul.f32 %v2258, %v2937
      %v4051 = vmul.f32 %v2259, %v2942
      %v4052 = vmul.f32 %v2260, %v2947
      %v4053 = vmul.f32 %v2261, %v2952
      %v4054 = vmul.f32 %v2262, %v2957
      %v4055 = vmul.f32 %v2263, %v2962
      %v4056 = vmul.f32 %v2264, %v2967
      %v4057 = vmul.f32 %v2265, %v2972
      %v4058 = vmul.f32 %v2266, %v2977
      %v4059 = vmul.f32 %v2267, %v2982
      %v4060 = vmul.f32 %v2268, %v2987
      %v4061 = vmul.f32 %v2269, %v2992
      %v4062 = vmul.f32 %v2270, %v2997
      %v4063 = vmul.f32 %v2271, %v3002
      %v4064 = vmul.f32 %v2272, %v3007
      %v4065 = vmul.f32 %v2273, %v3012
      %v4066 = vmul.f32 %v2274, %v3017
      %v4067 = vmul.f32 %v2275, %v3022
      %v4068 = vmul.f32 %v2276, %v3027
      %v4069 = vmul.f32 %v2277, %v3032
      %v4070 = vmul.f32 %v2278, %v3037
      %v4071 = vmul.f32 %v2279, %v3042
      %v4072 = vmul.f32 %v2280, %v3047
      %v4073 = vmul.f32 %v2281, %v3052
      %v4074 = vmul.f32 %v2282, %v3057
      %v4075 = vmul.f32 %v2283, %v3062
      %v4076 = vmul.f32 %v2284, %v3067
      %v4077 = vmul.f32 %v2285, %v3072
      %v4078 = vmul.f32 %v2286, %v3077
      %v4079 = vmul.f32 %v2287, %v3082
      %v4080 = vmul.f32 %v2288, %v3087
      %v4081 = vmul.f32 %v2289, %v3092
      %v4082 = vmul.f32 %v2290, %v3097
      %v4083 = vmul.f32 %v2291, %v3102
      %v4084 = vmul.f32 %v2292, %v3107
      %v4085 = vmul.f32 %v2293, %v3112
      %v4086 = vmul.f32 %v2294, %v3117
      %v4087 = vmul.f32 %v2295, %v3122
      %v4088 = vmul.f32 %v2296, %v3127
      %v4089 = vmul.f32 %v2297, %v3132
      %v4090 = vmul.f32 %v2298, %v3137
      %v4091 = vmul.f32 %v2299, %v3142
      %v4092 = vmul.f32 %v2300, %v3147
      %v4093 = vmul.f32 %v2301, %v3152
      %v4094 = vmul.f32 %v2302, %v3157
      %v4095 = vmul.f32 %v2303, %v3162
      %v4096 = vmul.f32 %v2304, %v3167
      %v4097 = vmul.f32 %v2305, %v3172
      %v4098 = vmul.f32 %v2306, %v3177
      %v4099 = vmul.f32 %v2307, %v3182
      %v4100 = vmul.f32 %v2308, %v3187
      %v4101 = vmul.f32 %v2309, %v3192
      %v4102 = vmul.f32 %v2310, %v3197
      %v4103 = vmul.f32 %v2311, %v3202
      %v4104 = vmul.f32 %v2312, %v3207
      %v4105 = vmul.f32 %v2313, %v3212
      %v4106 = vmul.f32 %v2314, %v3217
      %v4107 = vmul.f32 %v2315, %v3222
      %v4108 = vmul.f32 %v2316, %v3227
      %v4109 = vmul.f32 %v2317, %v3232
      %v4110 = vmul.f32 %v2318, %v3237
      %v4111 = vmul.f32 %v2319, %v3242
      %v4112 = vmul.f32 %v2320, %v3247
      %v4113 = vmul.f32 %v2321, %v3252
      %v4114 = vmul.f32 %v2322, %v3257
      %v4115 = vmul.f32 %v2323, %v3262
      %v4116 = vmul.f32 %v2324, %v3267
      %v4117 = vmul.f32 %v2325, %v3272
      %v4118 = vmul.f32 %v2326, %v3277
      %v4119 = vmul.f32 %v2327, %v3282
      %v4120 = vmul.f32 %v2328, %v3287
      %v4121 = vmul.f32 %v2329, %v3292
      %v4122 = vmul.f32 %v2330, %v3297
      %v4123 = vmul.f32 %v2331, %v3302
      %v4124 = vmul.f32 %v2332, %v3307
      %v4125 = vmul.f32 %v2333, %v3312
      %v4126 = vmul.f32 %v2334, %v3317
      %v4127 = vmul.f32 %v2335, %v3322
      %v4128 = vmul.f32 %v2336, %v3327
      %v4129 = vmul.f32 %v2337, %v3332
      %v4130 = vmul.f32 %v2338, %v3337
      %v4131 = vmul.f32 %v2339, %v3342
      %v4132 = vmul.f32 %v2340, %v3347
      %v4133 = vmul.f32 %v2341, %v3352
      %v4134 = vmul.f32 %v2342, %v3357
      %v4135 = vmul.f32 %v2343, %v3362
      %v4136 = vmul.f32 %v2344, %v3367
      %v4137 = vmul.f32 %v2345, %v3372
      %v4138 = vmul.f32 %v2346, %v3377
      %v4139 = vmul.f32 %v2347, %v3382
      %v4140 = vmul.f32 %v2348, %v3387
      %v4141 = vmul.f32 %v2349, %v3392
      %v4142 = vmul.f32 %v2350, %v3397
      %v4143 = vmul.f32 %v2351, %v3402
      %v4144 = vmul.f32 %v2352, %v3407
      %v4145 = vmul.f32 %v2353, %v3412
      %v4146 = vmul.f32 %v2354, %v3417
      %v4147 = vmul.f32 %v2355, %v3422
      %v4148 = vmul.f32 %v2356, %v3427
      %v4149 = vmul.f32 %v2357, %v3432
      %v4150 = vmul.f32 %v2358, %v3437
      %v4151 = vmul.f32 %v2359, %v3442
      %v4152 = vmul.f32 %v2360, %v3447
      %v4153 = vmul.f32 %v2361, %v3452
      %v4154 = vmul.f32 %v2362, %v3457
      %v4155 = vmul.f32 %v2363, %v3462
      %v4156 = vmul.f32 %v2364, %v3467
      %v4157 = vmul.f32 %v2365, %v3472
      %v4158 = vmul.f32 %v2366, %v3477
      %v4159 = vmul.f32 %v2367, %v3482
      %v4160 = vmul.f32 %v2368, %v3487
      %v4161 = vmul.f32 %v2369, %v3492
      %v4162 = vmul.f32 %v2370, %v3497
      %v4163 = vmul.f32 %v2371, %v3502
      %v4164 = vmul.f32 %v2372, %v3507
      %v4165 = vmul.f32 %v2373, %v3512
      %v4166 = vmul.f32 %v2374, %v3517
      %v4167 = vmul.f32 %v2375, %v3522
      %v4168 = vmul.f32 %v2376, %v3527
      %v4169 = vmul.f32 %v2377, %v3532
      %v4170 = vmul.f32 %v2378, %v3537
      %v4171 = vmul.f32 %v2379, %v3542
      %v4172 = vmul.f32 %v2380, %v3547
      %v4173 = vmul.f32 %v2381, %v3552
      %v4174 = vmul.f32 %v2382, %v3557
      %v4175 = vmul.f32 %v2383, %v3562
      %v4176 = vmul.f32 %v2384, %v3567
      %v4177 = vmul.f32 %v2385, %v3572
      %v4178 = vmul.f32 %v2386, %v3577
      %v4179 = vmul.f32 %v2387, %v3582
      %v4180 = vmul.f32 %v2388, %v3587
      %v4181 = vmul.f32 %v2389, %v3592
      %v4182 = vmul.f32 %v2390, %v3597
      %v4183 = vmul.f32 %v2391, %v3602
      %v4184 = vmul.f32 %v2392, %v3607
      %v4185 = vmul.f32 %v2393, %v3612
      %v4186 = vmul.f32 %v2394, %v3617
      %v4187 = vmul.f32 %v2395, %v3622
      %v4188 = vmul.f32 %v2396, %v3627
      %v4189 = vmul.f32 %v2397, %v3632
      %v4190 = vmul.f32 %v2398, %v3637
      %v4191 = vmul.f32 %v2399, %v3642
      %v4192 = vmul.f32 %v2400, %v3647
      %v4193 = vmul.f32 %v2401, %v3652
      %v4194 = vmul.f32 %v2402, %v3657
      %v4195 = vmul.f32 %v2403, %v3662
      %v4196 = vmul.f32 %v2404, %v3667
      %v4197 = vmul.f32 %v2405, %v3672
      %v4198 = vmul.f32 %v2406, %v3677
      %v4199 = vmul.f32 %v2407, %v3682
      %v4200 = vmul.f32 %v2408, %v3687
      %v4201 = vmul.f32 %v2409, %v3692
      %v4202 = vmul.f32 %v2410, %v3697
      %v4203 = vmul.f32 %v2411, %v3702
      %v4204 = vmul.f32 %v2412, %v3707
      %v4205 = vmul.f32 %v2413, %v3712
      %v4206 = vmul.f32 %v2414, %v3717
      %v4207 = vmul.f32 %v2415, %v3722
      %v4208 = vmul.f32 %v2416, %v3727
      %v4209 = vmul.f32 %v2417, %v3732
      %v4210 = vmul.f32 %v2418, %v3737
      %v4211 = vmul.f32 %v2419, %v3742
      %v4212 = vmul.f32 %v2420, %v3747
      %v4213 = vmul.f32 %v2421, %v3752
      %v4214 = vmul.f32 %v2422, %v3757
      %v4215 = vmul.f32 %v2423, %v3762
      %v4216 = vmul.f32 %v2424, %v3767
      %v4217 = vmul.f32 %v2425, %v3772
      %v4218 = vmul.f32 %v2426, %v3777
      %v4219 = vmul.f32 %v2427, %v3782
      %v4220 = vmul.f32 %v2428, %v3787
      %v4221 = vmul.f32 %v2429, %v3792
      %v4222 = vmul.f32 %v2430, %v3797
      %v4223 = vmul.f32 %v2431, %v3802
      %v4224 = vmul.f32 %v2432, %v3807
      %v4225 = vmul.f32 %v2433, %v3812
      %v4226 = vmul.f32 %v2434, %v3817
      %v4227 = vmul.f32 %v2435, %v3822
      %v4228 = vmul.f32 %v2436, %v3827
      %v4229 = vmul.f32 %v2437, %v3832
      %v4230 = vmul.f32 %v2438, %v3837
      %v4231 = vmul.f32 %v2439, %v3842
      %v4232 = vmul.f32 %v2440, %v3847
      %v4233 = vmul.f32 %v2441, %v3852
      %v4234 = vmul.f32 %v2442, %v3857
      %v4235 = vmul.f32 %v2443, %v3862
      %v4236 = vmul.f32 %v2444, %v3867
      %v4237 = vmul.f32 %v2445, %v3872
      %v4238 = vmul.f32 %v2446, %v3877
      %v4239 = vmul.f32 %v2447, %v3882
      %v4240 = vmul.f32 %v2448, %v3887
      %v4241 = vmul.f32 %v2449, %v3892
      %v4242 = vmul.f32 %v2450, %v3897
      %v4243 = vmul.f32 %v2451, %v3902
      %v4244 = vmul.f32 %v2452, %v3907
      %v4245 = vmul.f32 %v2453, %v3912
      %v4246 = vmul.f32 %v2454, %v3917
      %v4247 = vmul.f32 %v2455, %v3922
      %v4248 = vmul.f32 %v2456, %v3927
      %v4249 = vmul.f32 %v2457, %v3932
      %v4250 = vmul.f32 %v2458, %v3937
      %v4251 = vmul.f32 %v2459, %v3942
      %v4252 = vmul.f32 %v2460, %v3947
      %v4253 = vmul.f32 %v2461, %v3952
      %v4254 = vmul.f32 %v2462, %v3957
      %v4255 = vmul.f32 %v2463, %v3962
      %v4256 = vmul.f32 %v2464, %v3967
      %v4257 = vmul.f32 %v2465, %v3972
      %v4258 = vmul.f32 %v2466, %v3977
      %v4259 = vmul.f32 %v2467, %v3982
      %v4260 = vmul.f32 %v2468, %v3987
      %v4261 = vmul.f32 %v2469, %v3992
      %v4262 = vmul.f32 %v2470, %v3997
      %v4263 = vmul.f32 %v2471, %v4002
      %v4264 = vmul.f32 %v2472, %v4007
      %v4265 = vpack.c.bf16 %v4009, %v4009
      %v4266 = vpack.c.bf16 %v4010, %v4010
      %v4267 = vpack.c.bf16 %v4011, %v4011
      %v4268 = vpack.c.bf16 %v4012, %v4012
      %v4269 = vpack.c.bf16 %v4013, %v4013
      %v4270 = vpack.c.bf16 %v4014, %v4014
      %v4271 = vpack.c.bf16 %v4015, %v4015
      %v4272 = vpack.c.bf16 %v4016, %v4016
      %v4273 = vpack.c.bf16 %v4017, %v4017
      %v4274 = vpack.c.bf16 %v4018, %v4018
      %v4275 = vpack.c.bf16 %v4019, %v4019
      %v4276 = vpack.c.bf16 %v4020, %v4020
      %v4277 = vpack.c.bf16 %v4021, %v4021
      %v4278 = vpack.c.bf16 %v4022, %v4022
      %v4279 = vpack.c.bf16 %v4023, %v4023
      %v4280 = vpack.c.bf16 %v4024, %v4024
      %v4281 = vpack.c.bf16 %v4025, %v4025
      %v4282 = vpack.c.bf16 %v4026, %v4026
      %v4283 = vpack.c.bf16 %v4027, %v4027
      %v4284 = vpack.c.bf16 %v4028, %v4028
      %v4285 = vpack.c.bf16 %v4029, %v4029
      %v4286 = vpack.c.bf16 %v4030, %v4030
      %v4287 = vpack.c.bf16 %v4031, %v4031
      %v4288 = vpack.c.bf16 %v4032, %v4032
      %v4289 = vpack.c.bf16 %v4033, %v4033
      %v4290 = vpack.c.bf16 %v4034, %v4034
      %v4291 = vpack.c.bf16 %v4035, %v4035
      %v4292 = vpack.c.bf16 %v4036, %v4036
      %v4293 = vpack.c.bf16 %v4037, %v4037
      %v4294 = vpack.c.bf16 %v4038, %v4038
      %v4295 = vpack.c.bf16 %v4039, %v4039
      %v4296 = vpack.c.bf16 %v4040, %v4040
      %v4297 = vpack.c.bf16 %v4041, %v4041
      %v4298 = vpack.c.bf16 %v4042, %v4042
      %v4299 = vpack.c.bf16 %v4043, %v4043
      %v4300 = vpack.c.bf16 %v4044, %v4044
      %v4301 = vpack.c.bf16 %v4045, %v4045
      %v4302 = vpack.c.bf16 %v4046, %v4046
      %v4303 = vpack.c.bf16 %v4047, %v4047
      %v4304 = vpack.c.bf16 %v4048, %v4048
      %v4305 = vpack.c.bf16 %v4049, %v4049
      %v4306 = vpack.c.bf16 %v4050, %v4050
      %v4307 = vpack.c.bf16 %v4051, %v4051
      %v4308 = vpack.c.bf16 %v4052, %v4052
      %v4309 = vpack.c.bf16 %v4053, %v4053
      %v4310 = vpack.c.bf16 %v4054, %v4054
      %v4311 = vpack.c.bf16 %v4055, %v4055
      %v4312 = vpack.c.bf16 %v4056, %v4056
      %v4313 = vpack.c.bf16 %v4057, %v4057
      %v4314 = vpack.c.bf16 %v4058, %v4058
      %v4315 = vpack.c.bf16 %v4059, %v4059
      %v4316 = vpack.c.bf16 %v4060, %v4060
      %v4317 = vpack.c.bf16 %v4061, %v4061
      %v4318 = vpack.c.bf16 %v4062, %v4062
      %v4319 = vpack.c.bf16 %v4063, %v4063
      %v4320 = vpack.c.bf16 %v4064, %v4064
      %v4321 = vpack.c.bf16 %v4065, %v4065
      %v4322 = vpack.c.bf16 %v4066, %v4066
      %v4323 = vpack.c.bf16 %v4067, %v4067
      %v4324 = vpack.c.bf16 %v4068, %v4068
      %v4325 = vpack.c.bf16 %v4069, %v4069
      %v4326 = vpack.c.bf16 %v4070, %v4070
      %v4327 = vpack.c.bf16 %v4071, %v4071
      %v4328 = vpack.c.bf16 %v4072, %v4072
      %v4329 = vpack.c.bf16 %v4073, %v4073
      %v4330 = vpack.c.bf16 %v4074, %v4074
      %v4331 = vpack.c.bf16 %v4075, %v4075
      %v4332 = vpack.c.bf16 %v4076, %v4076
      %v4333 = vpack.c.bf16 %v4077, %v4077
      %v4334 = vpack.c.bf16 %v4078, %v4078
      %v4335 = vpack.c.bf16 %v4079, %v4079
      %v4336 = vpack.c.bf16 %v4080, %v4080
      %v4337 = vpack.c.bf16 %v4081, %v4081
      %v4338 = vpack.c.bf16 %v4082, %v4082
      %v4339 = vpack.c.bf16 %v4083, %v4083
      %v4340 = vpack.c.bf16 %v4084, %v4084
      %v4341 = vpack.c.bf16 %v4085, %v4085
      %v4342 = vpack.c.bf16 %v4086, %v4086
      %v4343 = vpack.c.bf16 %v4087, %v4087
      %v4344 = vpack.c.bf16 %v4088, %v4088
      %v4345 = vpack.c.bf16 %v4089, %v4089
      %v4346 = vpack.c.bf16 %v4090, %v4090
      %v4347 = vpack.c.bf16 %v4091, %v4091
      %v4348 = vpack.c.bf16 %v4092, %v4092
      %v4349 = vpack.c.bf16 %v4093, %v4093
      %v4350 = vpack.c.bf16 %v4094, %v4094
      %v4351 = vpack.c.bf16 %v4095, %v4095
      %v4352 = vpack.c.bf16 %v4096, %v4096
      %v4353 = vpack.c.bf16 %v4097, %v4097
      %v4354 = vpack.c.bf16 %v4098, %v4098
      %v4355 = vpack.c.bf16 %v4099, %v4099
      %v4356 = vpack.c.bf16 %v4100, %v4100
      %v4357 = vpack.c.bf16 %v4101, %v4101
      %v4358 = vpack.c.bf16 %v4102, %v4102
      %v4359 = vpack.c.bf16 %v4103, %v4103
      %v4360 = vpack.c.bf16 %v4104, %v4104
      %v4361 = vpack.c.bf16 %v4105, %v4105
      %v4362 = vpack.c.bf16 %v4106, %v4106
      %v4363 = vpack.c.bf16 %v4107, %v4107
      %v4364 = vpack.c.bf16 %v4108, %v4108
      %v4365 = vpack.c.bf16 %v4109, %v4109
      %v4366 = vpack.c.bf16 %v4110, %v4110
      %v4367 = vpack.c.bf16 %v4111, %v4111
      %v4368 = vpack.c.bf16 %v4112, %v4112
      %v4369 = vpack.c.bf16 %v4113, %v4113
      %v4370 = vpack.c.bf16 %v4114, %v4114
      %v4371 = vpack.c.bf16 %v4115, %v4115
      %v4372 = vpack.c.bf16 %v4116, %v4116
      %v4373 = vpack.c.bf16 %v4117, %v4117
      %v4374 = vpack.c.bf16 %v4118, %v4118
      %v4375 = vpack.c.bf16 %v4119, %v4119
      %v4376 = vpack.c.bf16 %v4120, %v4120
      %v4377 = vpack.c.bf16 %v4121, %v4121
      %v4378 = vpack.c.bf16 %v4122, %v4122
      %v4379 = vpack.c.bf16 %v4123, %v4123
      %v4380 = vpack.c.bf16 %v4124, %v4124
      %v4381 = vpack.c.bf16 %v4125, %v4125
      %v4382 = vpack.c.bf16 %v4126, %v4126
      %v4383 = vpack.c.bf16 %v4127, %v4127
      %v4384 = vpack.c.bf16 %v4128, %v4128
      %v4385 = vpack.c.bf16 %v4129, %v4129
      %v4386 = vpack.c.bf16 %v4130, %v4130
      %v4387 = vpack.c.bf16 %v4131, %v4131
      %v4388 = vpack.c.bf16 %v4132, %v4132
      %v4389 = vpack.c.bf16 %v4133, %v4133
      %v4390 = vpack.c.bf16 %v4134, %v4134
      %v4391 = vpack.c.bf16 %v4135, %v4135
      %v4392 = vpack.c.bf16 %v4136, %v4136
      %v4393 = vpack.c.bf16 %v4137, %v4137
      %v4394 = vpack.c.bf16 %v4138, %v4138
      %v4395 = vpack.c.bf16 %v4139, %v4139
      %v4396 = vpack.c.bf16 %v4140, %v4140
      %v4397 = vpack.c.bf16 %v4141, %v4141
      %v4398 = vpack.c.bf16 %v4142, %v4142
      %v4399 = vpack.c.bf16 %v4143, %v4143
      %v4400 = vpack.c.bf16 %v4144, %v4144
      %v4401 = vpack.c.bf16 %v4145, %v4145
      %v4402 = vpack.c.bf16 %v4146, %v4146
      %v4403 = vpack.c.bf16 %v4147, %v4147
      %v4404 = vpack.c.bf16 %v4148, %v4148
      %v4405 = vpack.c.bf16 %v4149, %v4149
      %v4406 = vpack.c.bf16 %v4150, %v4150
      %v4407 = vpack.c.bf16 %v4151, %v4151
      %v4408 = vpack.c.bf16 %v4152, %v4152
      %v4409 = vpack.c.bf16 %v4153, %v4153
      %v4410 = vpack.c.bf16 %v4154, %v4154
      %v4411 = vpack.c.bf16 %v4155, %v4155
      %v4412 = vpack.c.bf16 %v4156, %v4156
      %v4413 = vpack.c.bf16 %v4157, %v4157
      %v4414 = vpack.c.bf16 %v4158, %v4158
      %v4415 = vpack.c.bf16 %v4159, %v4159
      %v4416 = vpack.c.bf16 %v4160, %v4160
      %v4417 = vpack.c.bf16 %v4161, %v4161
      %v4418 = vpack.c.bf16 %v4162, %v4162
      %v4419 = vpack.c.bf16 %v4163, %v4163
      %v4420 = vpack.c.bf16 %v4164, %v4164
      %v4421 = vpack.c.bf16 %v4165, %v4165
      %v4422 = vpack.c.bf16 %v4166, %v4166
      %v4423 = vpack.c.bf16 %v4167, %v4167
      %v4424 = vpack.c.bf16 %v4168, %v4168
      %v4425 = vpack.c.bf16 %v4169, %v4169
      %v4426 = vpack.c.bf16 %v4170, %v4170
      %v4427 = vpack.c.bf16 %v4171, %v4171
      %v4428 = vpack.c.bf16 %v4172, %v4172
      %v4429 = vpack.c.bf16 %v4173, %v4173
      %v4430 = vpack.c.bf16 %v4174, %v4174
      %v4431 = vpack.c.bf16 %v4175, %v4175
      %v4432 = vpack.c.bf16 %v4176, %v4176
      %v4433 = vpack.c.bf16 %v4177, %v4177
      %v4434 = vpack.c.bf16 %v4178, %v4178
      %v4435 = vpack.c.bf16 %v4179, %v4179
      %v4436 = vpack.c.bf16 %v4180, %v4180
      %v4437 = vpack.c.bf16 %v4181, %v4181
      %v4438 = vpack.c.bf16 %v4182, %v4182
      %v4439 = vpack.c.bf16 %v4183, %v4183
      %v4440 = vpack.c.bf16 %v4184, %v4184
      %v4441 = vpack.c.bf16 %v4185, %v4185
      %v4442 = vpack.c.bf16 %v4186, %v4186
      %v4443 = vpack.c.bf16 %v4187, %v4187
      %v4444 = vpack.c.bf16 %v4188, %v4188
      %v4445 = vpack.c.bf16 %v4189, %v4189
      %v4446 = vpack.c.bf16 %v4190, %v4190
      %v4447 = vpack.c.bf16 %v4191, %v4191
      %v4448 = vpack.c.bf16 %v4192, %v4192
      %v4449 = vpack.c.bf16 %v4193, %v4193
      %v4450 = vpack.c.bf16 %v4194, %v4194
      %v4451 = vpack.c.bf16 %v4195, %v4195
      %v4452 = vpack.c.bf16 %v4196, %v4196
      %v4453 = vpack.c.bf16 %v4197, %v4197
      %v4454 = vpack.c.bf16 %v4198, %v4198
      %v4455 = vpack.c.bf16 %v4199, %v4199
      %v4456 = vpack.c.bf16 %v4200, %v4200
      %v4457 = vpack.c.bf16 %v4201, %v4201
      %v4458 = vpack.c.bf16 %v4202, %v4202
      %v4459 = vpack.c.bf16 %v4203, %v4203
      %v4460 = vpack.c.bf16 %v4204, %v4204
      %v4461 = vpack.c.bf16 %v4205, %v4205
      %v4462 = vpack.c.bf16 %v4206, %v4206
      %v4463 = vpack.c.bf16 %v4207, %v4207
      %v4464 = vpack.c.bf16 %v4208, %v4208
      %v4465 = vpack.c.bf16 %v4209, %v4209
      %v4466 = vpack.c.bf16 %v4210, %v4210
      %v4467 = vpack.c.bf16 %v4211, %v4211
      %v4468 = vpack.c.bf16 %v4212, %v4212
      %v4469 = vpack.c.bf16 %v4213, %v4213
      %v4470 = vpack.c.bf16 %v4214, %v4214
      %v4471 = vpack.c.bf16 %v4215, %v4215
      %v4472 = vpack.c.bf16 %v4216, %v4216
      %v4473 = vpack.c.bf16 %v4217, %v4217
      %v4474 = vpack.c.bf16 %v4218, %v4218
      %v4475 = vpack.c.bf16 %v4219, %v4219
      %v4476 = vpack.c.bf16 %v4220, %v4220
      %v4477 = vpack.c.bf16 %v4221, %v4221
      %v4478 = vpack.c.bf16 %v4222, %v4222
      %v4479 = vpack.c.bf16 %v4223, %v4223
      %v4480 = vpack.c.bf16 %v4224, %v4224
      %v4481 = vpack.c.bf16 %v4225, %v4225
      %v4482 = vpack.c.bf16 %v4226, %v4226
      %v4483 = vpack.c.bf16 %v4227, %v4227
      %v4484 = vpack.c.bf16 %v4228, %v4228
      %v4485 = vpack.c.bf16 %v4229, %v4229
      %v4486 = vpack.c.bf16 %v4230, %v4230
      %v4487 = vpack.c.bf16 %v4231, %v4231
      %v4488 = vpack.c.bf16 %v4232, %v4232
      %v4489 = vpack.c.bf16 %v4233, %v4233
      %v4490 = vpack.c.bf16 %v4234, %v4234
      %v4491 = vpack.c.bf16 %v4235, %v4235
      %v4492 = vpack.c.bf16 %v4236, %v4236
      %v4493 = vpack.c.bf16 %v4237, %v4237
      %v4494 = vpack.c.bf16 %v4238, %v4238
      %v4495 = vpack.c.bf16 %v4239, %v4239
      %v4496 = vpack.c.bf16 %v4240, %v4240
      %v4497 = vpack.c.bf16 %v4241, %v4241
      %v4498 = vpack.c.bf16 %v4242, %v4242
      %v4499 = vpack.c.bf16 %v4243, %v4243
      %v4500 = vpack.c.bf16 %v4244, %v4244
      %v4501 = vpack.c.bf16 %v4245, %v4245
      %v4502 = vpack.c.bf16 %v4246, %v4246
      %v4503 = vpack.c.bf16 %v4247, %v4247
      %v4504 = vpack.c.bf16 %v4248, %v4248
      %v4505 = vpack.c.bf16 %v4249, %v4249
      %v4506 = vpack.c.bf16 %v4250, %v4250
      %v4507 = vpack.c.bf16 %v4251, %v4251
      %v4508 = vpack.c.bf16 %v4252, %v4252
      %v4509 = vpack.c.bf16 %v4253, %v4253
      %v4510 = vpack.c.bf16 %v4254, %v4254
      %v4511 = vpack.c.bf16 %v4255, %v4255
      %v4512 = vpack.c.bf16 %v4256, %v4256
      %v4513 = vpack.c.bf16 %v4257, %v4257
      %v4514 = vpack.c.bf16 %v4258, %v4258
      %v4515 = vpack.c.bf16 %v4259, %v4259
      %v4516 = vpack.c.bf16 %v4260, %v4260
      %v4517 = vpack.c.bf16 %v4261, %v4261
      %v4518 = vpack.c.bf16 %v4262, %v4262
      %v4519 = vpack.c.bf16 %v4263, %v4263
      %v4520 = vpack.c.bf16 %v4264, %v4264
      %4521 = vst [vmem:[%s221] sm:$0xf] %v4265
      %4522 = vst [vmem:[%s221 + $0x4] sm:$0xf] %v4266
      %4523 = vst [vmem:[%s221 + $0x8] sm:$0xf] %v4267
      %4524 = vst [vmem:[%s221 + $0xc] sm:$0xf] %v4268
      %4525 = vst [vmem:[%s221 + $0x10] sm:$0xf] %v4269
      %4526 = vst [vmem:[%s221 + $0x14] sm:$0xf] %v4270
      %4527 = vst [vmem:[%s221 + $0x18] sm:$0xf] %v4271
      %4528 = vst [vmem:[%s221 + $0x1c] sm:$0xf] %v4272
      %4529 = vst [vmem:[%s221 + $0x20] sm:$0xf] %v4273
      %4530 = vst [vmem:[%s221 + $0x24] sm:$0xf] %v4274
      %4531 = vst [vmem:[%s221 + $0x28] sm:$0xf] %v4275
      %4532 = vst [vmem:[%s221 + $0x2c] sm:$0xf] %v4276
      %4533 = vst [vmem:[%s221 + $0x30] sm:$0xf] %v4277
      %4534 = vst [vmem:[%s221 + $0x34] sm:$0xf] %v4278
      %4535 = vst [vmem:[%s221 + $0x38] sm:$0xf] %v4279
      %4536 = vst [vmem:[%s221 + $0x3c] sm:$0xf] %v4280
      %4537 = vst [vmem:[%s221 + $0x40] sm:$0xf] %v4281
      %4538 = vst [vmem:[%s221 + $0x44] sm:$0xf] %v4282
      %4539 = vst [vmem:[%s221 + $0x48] sm:$0xf] %v4283
      %4540 = vst [vmem:[%s221 + $0x4c] sm:$0xf] %v4284
      %4541 = vst [vmem:[%s221 + $0x50] sm:$0xf] %v4285
      %4542 = vst [vmem:[%s221 + $0x54] sm:$0xf] %v4286
      %4543 = vst [vmem:[%s221 + $0x58] sm:$0xf] %v4287
      %4544 = vst [vmem:[%s221 + $0x5c] sm:$0xf] %v4288
      %4545 = vst [vmem:[%s221 + $0x60] sm:$0xf] %v4289
      %4546 = vst [vmem:[%s221 + $0x64] sm:$0xf] %v4290
      %4547 = vst [vmem:[%s221 + $0x68] sm:$0xf] %v4291
      %4548 = vst [vmem:[%s221 + $0x6c] sm:$0xf] %v4292
      %4549 = vst [vmem:[%s221 + $0x70] sm:$0xf] %v4293
      %4550 = vst [vmem:[%s221 + $0x74] sm:$0xf] %v4294
      %4551 = vst [vmem:[%s221 + $0x78] sm:$0xf] %v4295
      %4552 = vst [vmem:[%s221 + $0x7c] sm:$0xf] %v4296
      %4553 = vst [vmem:[%s221 + $0x80] sm:$0xf] %v4297
      %4554 = vst [vmem:[%s221 + $0x84] sm:$0xf] %v4298
      %4555 = vst [vmem:[%s221 + $0x88] sm:$0xf] %v4299
      %4556 = vst [vmem:[%s221 + $0x8c] sm:$0xf] %v4300
      %4557 = vst [vmem:[%s221 + $0x90] sm:$0xf] %v4301
      %4558 = vst [vmem:[%s221 + $0x94] sm:$0xf] %v4302
      %4559 = vst [vmem:[%s221 + $0x98] sm:$0xf] %v4303
      %4560 = vst [vmem:[%s221 + $0x9c] sm:$0xf] %v4304
      %4561 = vst [vmem:[%s221 + $0xa0] sm:$0xf] %v4305
      %4562 = vst [vmem:[%s221 + $0xa4] sm:$0xf] %v4306
      %4563 = vst [vmem:[%s221 + $0xa8] sm:$0xf] %v4307
      %4564 = vst [vmem:[%s221 + $0xac] sm:$0xf] %v4308
      %4565 = vst [vmem:[%s221 + $0xb0] sm:$0xf] %v4309
      %4566 = vst [vmem:[%s221 + $0xb4] sm:$0xf] %v4310
      %4567 = vst [vmem:[%s221 + $0xb8] sm:$0xf] %v4311
      %4568 = vst [vmem:[%s221 + $0xbc] sm:$0xf] %v4312
      %4569 = vst [vmem:[%s221 + $0xc0] sm:$0xf] %v4313
      %4570 = vst [vmem:[%s221 + $0xc4] sm:$0xf] %v4314
      %4571 = vst [vmem:[%s221 + $0xc8] sm:$0xf] %v4315
      %4572 = vst [vmem:[%s221 + $0xcc] sm:$0xf] %v4316
      %4573 = vst [vmem:[%s221 + $0xd0] sm:$0xf] %v4317
      %4574 = vst [vmem:[%s221 + $0xd4] sm:$0xf] %v4318
      %4575 = vst [vmem:[%s221 + $0xd8] sm:$0xf] %v4319
      %4576 = vst [vmem:[%s221 + $0xdc] sm:$0xf] %v4320
      %4577 = vst [vmem:[%s221 + $0xe0] sm:$0xf] %v4321
      %4578 = vst [vmem:[%s221 + $0xe4] sm:$0xf] %v4322
      %4579 = vst [vmem:[%s221 + $0xe8] sm:$0xf] %v4323
      %4580 = vst [vmem:[%s221 + $0xec] sm:$0xf] %v4324
      %4581 = vst [vmem:[%s221 + $0xf0] sm:$0xf] %v4325
      %4582 = vst [vmem:[%s221 + $0xf4] sm:$0xf] %v4326
      %4583 = vst [vmem:[%s221 + $0xf8] sm:$0xf] %v4327
      %4584 = vst [vmem:[%s221 + $0xfc] sm:$0xf] %v4328
      %4585 = vst [vmem:[%s221 + $0x100] sm:$0xf] %v4329
      %4586 = vst [vmem:[%s221 + $0x104] sm:$0xf] %v4330
      %4587 = vst [vmem:[%s221 + $0x108] sm:$0xf] %v4331
      %4588 = vst [vmem:[%s221 + $0x10c] sm:$0xf] %v4332
      %4589 = vst [vmem:[%s221 + $0x110] sm:$0xf] %v4333
      %4590 = vst [vmem:[%s221 + $0x114] sm:$0xf] %v4334
      %4591 = vst [vmem:[%s221 + $0x118] sm:$0xf] %v4335
      %4592 = vst [vmem:[%s221 + $0x11c] sm:$0xf] %v4336
      %4593 = vst [vmem:[%s221 + $0x120] sm:$0xf] %v4337
      %4594 = vst [vmem:[%s221 + $0x124] sm:$0xf] %v4338
      %4595 = vst [vmem:[%s221 + $0x128] sm:$0xf] %v4339
      %4596 = vst [vmem:[%s221 + $0x12c] sm:$0xf] %v4340
      %4597 = vst [vmem:[%s221 + $0x130] sm:$0xf] %v4341
      %4598 = vst [vmem:[%s221 + $0x134] sm:$0xf] %v4342
      %4599 = vst [vmem:[%s221 + $0x138] sm:$0xf] %v4343
      %4600 = vst [vmem:[%s221 + $0x13c] sm:$0xf] %v4344
      %4601 = vst [vmem:[%s221 + $0x140] sm:$0xf] %v4345
      %4602 = vst [vmem:[%s221 + $0x144] sm:$0xf] %v4346
      %4603 = vst [vmem:[%s221 + $0x148] sm:$0xf] %v4347
      %4604 = vst [vmem:[%s221 + $0x14c] sm:$0xf] %v4348
      %4605 = vst [vmem:[%s221 + $0x150] sm:$0xf] %v4349
      %4606 = vst [vmem:[%s221 + $0x154] sm:$0xf] %v4350
      %4607 = vst [vmem:[%s221 + $0x158] sm:$0xf] %v4351
      %4608 = vst [vmem:[%s221 + $0x15c] sm:$0xf] %v4352
      %4609 = vst [vmem:[%s221 + $0x160] sm:$0xf] %v4353
      %4610 = vst [vmem:[%s221 + $0x164] sm:$0xf] %v4354
      %4611 = vst [vmem:[%s221 + $0x168] sm:$0xf] %v4355
      %4612 = vst [vmem:[%s221 + $0x16c] sm:$0xf] %v4356
      %4613 = vst [vmem:[%s221 + $0x170] sm:$0xf] %v4357
      %4614 = vst [vmem:[%s221 + $0x174] sm:$0xf] %v4358
      %4615 = vst [vmem:[%s221 + $0x178] sm:$0xf] %v4359
      %4616 = vst [vmem:[%s221 + $0x17c] sm:$0xf] %v4360
      %4617 = vst [vmem:[%s221 + $0x180] sm:$0xf] %v4361
      %4618 = vst [vmem:[%s221 + $0x184] sm:$0xf] %v4362
      %4619 = vst [vmem:[%s221 + $0x188] sm:$0xf] %v4363
      %4620 = vst [vmem:[%s221 + $0x18c] sm:$0xf] %v4364
      %4621 = vst [vmem:[%s221 + $0x190] sm:$0xf] %v4365
      %4622 = vst [vmem:[%s221 + $0x194] sm:$0xf] %v4366
      %4623 = vst [vmem:[%s221 + $0x198] sm:$0xf] %v4367
      %4624 = vst [vmem:[%s221 + $0x19c] sm:$0xf] %v4368
      %4625 = vst [vmem:[%s221 + $0x1a0] sm:$0xf] %v4369
      %4626 = vst [vmem:[%s221 + $0x1a4] sm:$0xf] %v4370
      %4627 = vst [vmem:[%s221 + $0x1a8] sm:$0xf] %v4371
      %4628 = vst [vmem:[%s221 + $0x1ac] sm:$0xf] %v4372
      %4629 = vst [vmem:[%s221 + $0x1b0] sm:$0xf] %v4373
      %4630 = vst [vmem:[%s221 + $0x1b4] sm:$0xf] %v4374
      %4631 = vst [vmem:[%s221 + $0x1b8] sm:$0xf] %v4375
      %4632 = vst [vmem:[%s221 + $0x1bc] sm:$0xf] %v4376
      %4633 = vst [vmem:[%s221 + $0x1c0] sm:$0xf] %v4377
      %4634 = vst [vmem:[%s221 + $0x1c4] sm:$0xf] %v4378
      %4635 = vst [vmem:[%s221 + $0x1c8] sm:$0xf] %v4379
      %4636 = vst [vmem:[%s221 + $0x1cc] sm:$0xf] %v4380
      %4637 = vst [vmem:[%s221 + $0x1d0] sm:$0xf] %v4381
      %4638 = vst [vmem:[%s221 + $0x1d4] sm:$0xf] %v4382
      %4639 = vst [vmem:[%s221 + $0x1d8] sm:$0xf] %v4383
      %4640 = vst [vmem:[%s221 + $0x1dc] sm:$0xf] %v4384
      %4641 = vst [vmem:[%s221 + $0x1e0] sm:$0xf] %v4385
      %4642 = vst [vmem:[%s221 + $0x1e4] sm:$0xf] %v4386
      %4643 = vst [vmem:[%s221 + $0x1e8] sm:$0xf] %v4387
      %4644 = vst [vmem:[%s221 + $0x1ec] sm:$0xf] %v4388
      %4645 = vst [vmem:[%s221 + $0x1f0] sm:$0xf] %v4389
      %4646 = vst [vmem:[%s221 + $0x1f4] sm:$0xf] %v4390
      %4647 = vst [vmem:[%s221 + $0x1f8] sm:$0xf] %v4391
      %4648 = vst [vmem:[%s221 + $0x1fc] sm:$0xf] %v4392
      %4649 = vst [vmem:[%s221 + $0x200] sm:$0xf] %v4393
      %4650 = vst [vmem:[%s221 + $0x204] sm:$0xf] %v4394
      %4651 = vst [vmem:[%s221 + $0x208] sm:$0xf] %v4395
      %4652 = vst [vmem:[%s221 + $0x20c] sm:$0xf] %v4396
      %4653 = vst [vmem:[%s221 + $0x210] sm:$0xf] %v4397
      %4654 = vst [vmem:[%s221 + $0x214] sm:$0xf] %v4398
      %4655 = vst [vmem:[%s221 + $0x218] sm:$0xf] %v4399
      %4656 = vst [vmem:[%s221 + $0x21c] sm:$0xf] %v4400
      %4657 = vst [vmem:[%s221 + $0x220] sm:$0xf] %v4401
      %4658 = vst [vmem:[%s221 + $0x224] sm:$0xf] %v4402
      %4659 = vst [vmem:[%s221 + $0x228] sm:$0xf] %v4403
      %4660 = vst [vmem:[%s221 + $0x22c] sm:$0xf] %v4404
      %4661 = vst [vmem:[%s221 + $0x230] sm:$0xf] %v4405
      %4662 = vst [vmem:[%s221 + $0x234] sm:$0xf] %v4406
      %4663 = vst [vmem:[%s221 + $0x238] sm:$0xf] %v4407
      %4664 = vst [vmem:[%s221 + $0x23c] sm:$0xf] %v4408
      %4665 = vst [vmem:[%s221 + $0x240] sm:$0xf] %v4409
      %4666 = vst [vmem:[%s221 + $0x244] sm:$0xf] %v4410
      %4667 = vst [vmem:[%s221 + $0x248] sm:$0xf] %v4411
      %4668 = vst [vmem:[%s221 + $0x24c] sm:$0xf] %v4412
      %4669 = vst [vmem:[%s221 + $0x250] sm:$0xf] %v4413
      %4670 = vst [vmem:[%s221 + $0x254] sm:$0xf] %v4414
      %4671 = vst [vmem:[%s221 + $0x258] sm:$0xf] %v4415
      %4672 = vst [vmem:[%s221 + $0x25c] sm:$0xf] %v4416
      %4673 = vst [vmem:[%s221 + $0x260] sm:$0xf] %v4417
      %4674 = vst [vmem:[%s221 + $0x264] sm:$0xf] %v4418
      %4675 = vst [vmem:[%s221 + $0x268] sm:$0xf] %v4419
      %4676 = vst [vmem:[%s221 + $0x26c] sm:$0xf] %v4420
      %4677 = vst [vmem:[%s221 + $0x270] sm:$0xf] %v4421
      %4678 = vst [vmem:[%s221 + $0x274] sm:$0xf] %v4422
      %4679 = vst [vmem:[%s221 + $0x278] sm:$0xf] %v4423
      %4680 = vst [vmem:[%s221 + $0x27c] sm:$0xf] %v4424
      %4681 = vst [vmem:[%s221 + $0x280] sm:$0xf] %v4425
      %4682 = vst [vmem:[%s221 + $0x284] sm:$0xf] %v4426
      %4683 = vst [vmem:[%s221 + $0x288] sm:$0xf] %v4427
      %4684 = vst [vmem:[%s221 + $0x28c] sm:$0xf] %v4428
      %4685 = vst [vmem:[%s221 + $0x290] sm:$0xf] %v4429
      %4686 = vst [vmem:[%s221 + $0x294] sm:$0xf] %v4430
      %4687 = vst [vmem:[%s221 + $0x298] sm:$0xf] %v4431
      %4688 = vst [vmem:[%s221 + $0x29c] sm:$0xf] %v4432
      %4689 = vst [vmem:[%s221 + $0x2a0] sm:$0xf] %v4433
      %4690 = vst [vmem:[%s221 + $0x2a4] sm:$0xf] %v4434
      %4691 = vst [vmem:[%s221 + $0x2a8] sm:$0xf] %v4435
      %4692 = vst [vmem:[%s221 + $0x2ac] sm:$0xf] %v4436
      %4693 = vst [vmem:[%s221 + $0x2b0] sm:$0xf] %v4437
      %4694 = vst [vmem:[%s221 + $0x2b4] sm:$0xf] %v4438
      %4695 = vst [vmem:[%s221 + $0x2b8] sm:$0xf] %v4439
      %4696 = vst [vmem:[%s221 + $0x2bc] sm:$0xf] %v4440
      %4697 = vst [vmem:[%s221 + $0x2c0] sm:$0xf] %v4441
      %4698 = vst [vmem:[%s221 + $0x2c4] sm:$0xf] %v4442
      %4699 = vst [vmem:[%s221 + $0x2c8] sm:$0xf] %v4443
      %4700 = vst [vmem:[%s221 + $0x2cc] sm:$0xf] %v4444
      %4701 = vst [vmem:[%s221 + $0x2d0] sm:$0xf] %v4445
      %4702 = vst [vmem:[%s221 + $0x2d4] sm:$0xf] %v4446
      %4703 = vst [vmem:[%s221 + $0x2d8] sm:$0xf] %v4447
      %4704 = vst [vmem:[%s221 + $0x2dc] sm:$0xf] %v4448
      %4705 = vst [vmem:[%s221 + $0x2e0] sm:$0xf] %v4449
      %4706 = vst [vmem:[%s221 + $0x2e4] sm:$0xf] %v4450
      %4707 = vst [vmem:[%s221 + $0x2e8] sm:$0xf] %v4451
      %4708 = vst [vmem:[%s221 + $0x2ec] sm:$0xf] %v4452
      %4709 = vst [vmem:[%s221 + $0x2f0] sm:$0xf] %v4453
      %4710 = vst [vmem:[%s221 + $0x2f4] sm:$0xf] %v4454
      %4711 = vst [vmem:[%s221 + $0x2f8] sm:$0xf] %v4455
      %4712 = vst [vmem:[%s221 + $0x2fc] sm:$0xf] %v4456
      %4713 = vst [vmem:[%s221 + $0x300] sm:$0xf] %v4457
      %4714 = vst [vmem:[%s221 + $0x304] sm:$0xf] %v4458
      %4715 = vst [vmem:[%s221 + $0x308] sm:$0xf] %v4459
      %4716 = vst [vmem:[%s221 + $0x30c] sm:$0xf] %v4460
      %4717 = vst [vmem:[%s221 + $0x310] sm:$0xf] %v4461
      %4718 = vst [vmem:[%s221 + $0x314] sm:$0xf] %v4462
      %4719 = vst [vmem:[%s221 + $0x318] sm:$0xf] %v4463
      %4720 = vst [vmem:[%s221 + $0x31c] sm:$0xf] %v4464
      %4721 = vst [vmem:[%s221 + $0x320] sm:$0xf] %v4465
      %4722 = vst [vmem:[%s221 + $0x324] sm:$0xf] %v4466
      %4723 = vst [vmem:[%s221 + $0x328] sm:$0xf] %v4467
      %4724 = vst [vmem:[%s221 + $0x32c] sm:$0xf] %v4468
      %4725 = vst [vmem:[%s221 + $0x330] sm:$0xf] %v4469
      %4726 = vst [vmem:[%s221 + $0x334] sm:$0xf] %v4470
      %4727 = vst [vmem:[%s221 + $0x338] sm:$0xf] %v4471
      %4728 = vst [vmem:[%s221 + $0x33c] sm:$0xf] %v4472
      %4729 = vst [vmem:[%s221 + $0x340] sm:$0xf] %v4473
      %4730 = vst [vmem:[%s221 + $0x344] sm:$0xf] %v4474
      %4731 = vst [vmem:[%s221 + $0x348] sm:$0xf] %v4475
      %4732 = vst [vmem:[%s221 + $0x34c] sm:$0xf] %v4476
      %4733 = vst [vmem:[%s221 + $0x350] sm:$0xf] %v4477
      %4734 = vst [vmem:[%s221 + $0x354] sm:$0xf] %v4478
      %4735 = vst [vmem:[%s221 + $0x358] sm:$0xf] %v4479
      %4736 = vst [vmem:[%s221 + $0x35c] sm:$0xf] %v4480
      %4737 = vst [vmem:[%s221 + $0x360] sm:$0xf] %v4481
      %4738 = vst [vmem:[%s221 + $0x364] sm:$0xf] %v4482
      %4739 = vst [vmem:[%s221 + $0x368] sm:$0xf] %v4483
      %4740 = vst [vmem:[%s221 + $0x36c] sm:$0xf] %v4484
      %4741 = vst [vmem:[%s221 + $0x370] sm:$0xf] %v4485
      %4742 = vst [vmem:[%s221 + $0x374] sm:$0xf] %v4486
      %4743 = vst [vmem:[%s221 + $0x378] sm:$0xf] %v4487
      %4744 = vst [vmem:[%s221 + $0x37c] sm:$0xf] %v4488
      %4745 = vst [vmem:[%s221 + $0x380] sm:$0xf] %v4489
      %4746 = vst [vmem:[%s221 + $0x384] sm:$0xf] %v4490
      %4747 = vst [vmem:[%s221 + $0x388] sm:$0xf] %v4491
      %4748 = vst [vmem:[%s221 + $0x38c] sm:$0xf] %v4492
      %4749 = vst [vmem:[%s221 + $0x390] sm:$0xf] %v4493
      %4750 = vst [vmem:[%s221 + $0x394] sm:$0xf] %v4494
      %4751 = vst [vmem:[%s221 + $0x398] sm:$0xf] %v4495
      %4752 = vst [vmem:[%s221 + $0x39c] sm:$0xf] %v4496
      %4753 = vst [vmem:[%s221 + $0x3a0] sm:$0xf] %v4497
      %4754 = vst [vmem:[%s221 + $0x3a4] sm:$0xf] %v4498
      %4755 = vst [vmem:[%s221 + $0x3a8] sm:$0xf] %v4499
      %4756 = vst [vmem:[%s221 + $0x3ac] sm:$0xf] %v4500
      %4757 = vst [vmem:[%s221 + $0x3b0] sm:$0xf] %v4501
      %4758 = vst [vmem:[%s221 + $0x3b4] sm:$0xf] %v4502
      %4759 = vst [vmem:[%s221 + $0x3b8] sm:$0xf] %v4503
      %4760 = vst [vmem:[%s221 + $0x3bc] sm:$0xf] %v4504
      %4761 = vst [vmem:[%s221 + $0x3c0] sm:$0xf] %v4505
      %4762 = vst [vmem:[%s221 + $0x3c4] sm:$0xf] %v4506
      %4763 = vst [vmem:[%s221 + $0x3c8] sm:$0xf] %v4507
      %4764 = vst [vmem:[%s221 + $0x3cc] sm:$0xf] %v4508
      %4765 = vst [vmem:[%s221 + $0x3d0] sm:$0xf] %v4509
      %4766 = vst [vmem:[%s221 + $0x3d4] sm:$0xf] %v4510
      %4767 = vst [vmem:[%s221 + $0x3d8] sm:$0xf] %v4511
      %4768 = vst [vmem:[%s221 + $0x3dc] sm:$0xf] %v4512
      %4769 = vst [vmem:[%s221 + $0x3e0] sm:$0xf] %v4513
      %4770 = vst [vmem:[%s221 + $0x3e4] sm:$0xf] %v4514
      %4771 = vst [vmem:[%s221 + $0x3e8] sm:$0xf] %v4515
      %4772 = vst [vmem:[%s221 + $0x3ec] sm:$0xf] %v4516
      %4773 = vst [vmem:[%s221 + $0x3f0] sm:$0xf] %v4517
      %4774 = vst [vmem:[%s221 + $0x3f4] sm:$0xf] %v4518
      %4775 = vst [vmem:[%s221 + $0x3f8] sm:$0xf] %v4519
      %4776 = vst [vmem:[%s221 + $0x3fc] sm:$0xf] %v4520
      %s4777 = smul.u32 256, %s15
      %p4778 = scmp.lt.s32.totalorder %s4777, 511
      %s4779 = scalar_select %p4778, %s4777, 511
      %s4780 = smul.addr %s4779, 4
      %s4781 = scalar_lea.vmem %s4, %s4780
      // Predicated region
      $region37: #{_lambda_.3} parent=35 // pred_check
        %p4782 = pneg %p127
      $region38: #{_lambda_.3} parent=35 // pred_check_branch
        %4784 = sbr.rel (%p4782) target = $region40
      $region39: #{_lambda_.3} parent=35 // pred_region
        %s4785 = smul.u32 256, %s15
      $region40: #{_lambda_.3} parent=35 // pred_fallthru
        _
    $region36: #{_lambda_.3} parent=5 // pred_fallthru
      _
    %p4786 = scmp.le.s32.totalorder 2, %s10
    // Predicated region
    $region41: #{_lambda_.3} parent=5 // pred_check
      %p4787 = pneg %p4786
    $region42: #{_lambda_.3} parent=5 // pred_check_branch
      %4789 = sbr.rel (%p4787) target = $region44
    $region43: #{_lambda_.3} parent=5 // pred_region
      %s4790 = ssub.s32 %s10, 2
      // Predicated region
      $region45: #{_lambda_.3} parent=43 // pred_check
        %p4791 = pneg %p133
      $region46: #{_lambda_.3} parent=43 // pred_check_branch
        %4793 = sbr.rel (%p4791) target = $region48
      $region47: #{_lambda_.3} parent=43 // pred_region
        %s4794 = smul.u32 256, %s16
        %p4795 = scmp.lt.s32.totalorder %s4794, 511
        %s4796 = scalar_select %p4795, %s4794, 511
        %s4797 = smul.addr %s4796, 4
        %s4798 = scalar_lea.vmem %s4, %s4797
      $region48: #{_lambda_.3} parent=43 // pred_fallthru
        _
    $region44: #{_lambda_.3} parent=5 // pred_fallthru
      _
  $region6: #{_lambda_.3} parent=0 // loop_footer
    %s14 = sadd.s32 1, %s10
  $region7: #{_lambda_.3} parent=0 // loop_footer_branch
    %9 = sbr.rel target = $region3
  $region8: #{_lambda_.3} parent=0 // loop_exit
    _

// kernel: _lambda_.4
$region0: #{_lambda_.4}
  #allocation0 [shape = 'u32[]', space=smem, size = 0x4, offset = 0x4, fixed_abs, tag = 'smem constant byte address 0x4 - core index']
  #allocation1 [shape = 'u32[72,128]{1,0:T(1,128)}', space=vmem, size = 0x9000, scoped, tag = 'internal scratch']
  %s0 = inlined_call_operand.vmem [shape: bf16[512,432], index: 0, kind: input, shape index: {}]
  %s1 = inlined_call_operand.vmem [shape: bf16[432,128], index: 1, kind: input, shape index: {}]
  %s2 = inlined_call_operand.vmem [shape: f32[1,128], index: 2, kind: input, shape index: {}]
  %s3 = inlined_call_operand.vmem [shape: f32[512,1], index: 3, kind: input, shape index: {}]
  %s4 = inlined_call_operand.vmem [shape: bf16[512,128], index: 4, kind: output, shape index: {}]
  %s5 = sld [smem:[#allocation0]]
  $region49: #{_lambda_.4} parent=0
    _
  %s7 = ssub.s32 1, %s5
  %s8 = scalar_select 0, %s7, %s5
  loop: start=0, step=1, limit=4
  $region2: #{_lambda_.4} parent=0 // loop_pre_header
    _
  $region3: #{_lambda_.4} parent=0 // loop_header
    %s10 = sphi 0, %s14
    %p11 = scmp.ge.s32.totalorder %s10, 4
    %s20 = sphi 0, %s22
    %s23 = sphi 0, %s20
    %s24 = sphi 0, %s23
    %s40 = sphi 0, %s24
    %s44 = sphi 0, %s44
    %s46 = sphi 0, %s44
    %s47 = sphi 0, %s46
    %s61 = sphi 0, %s47
    %s65 = sphi 0, %s65
    %s67 = sphi 0, %s65
    %s68 = sphi 0, %s67
    %s82 = sphi 0, %s68
    %s88 = sphi 0, %s90
    %s91 = sphi 0, %s88
    %s92 = sphi 0, %s91
    %s108 = sphi 0, %s92
    %s114 = sphi 0, %s116
    %s117 = sphi 0, %s114
    %s118 = sphi 0, %s117
    %s134 = sphi 0, %s118
  $region4: #{_lambda_.4} parent=0 // loop_header_branch
    %13 = sbr.rel (%p11) target = $region8
  $region5: #{_lambda_.4} parent=0 // loop_body
    %s15 = ssub.s32 %s10, 1
    %s16 = ssub.s32 %s10, 2
    %s17 = sadd.s32 %s10, 1
    %s18 = ssub.s32 %s10, %s17
    %p19 = scmp.eq.s32.totalorder %s18, 0
    %s21 = sadd.s32 %s20, 1
    %s22 = scalar_select %p19, %s20, %s21
    %p25 = pneg %p19
    %p26 = scmp.eq.s32.totalorder %s10, 1
    %p27 = por %p25, %p26
    %p28 = scmp.ne.s32.totalorder %s20, %s23
    %p29 = scmp.eq.s32.totalorder %s10, 0
    %p30 = por %p28, %p29
    %p31 = scmp.ne.s32.totalorder %s20, %s23
    %p32 = scmp.eq.s32.totalorder %s15, 1
    %p33 = por %p31, %p32
    %p34 = scmp.ne.s32.totalorder %s23, %s24
    %p35 = scmp.eq.s32.totalorder %s15, 0
    %p36 = por %p34, %p35
    %p37 = scmp.ne.s32.totalorder %s23, %s24
    %p38 = scmp.eq.s32.totalorder %s16, 1
    %p39 = por %p37, %p38
    %p41 = scmp.ne.s32.totalorder %s24, %s40
    %p42 = scmp.eq.s32.totalorder %s16, 0
    %p43 = por %p41, %p42
    %s45 = sadd.s32 %s44, 1
    %p48 = scmp.eq.s32.totalorder %s10, 1
    %p49 = scmp.ne.s32.totalorder %s44, %s46
    %p50 = scmp.eq.s32.totalorder %s10, 0
    %p51 = por %p49, %p50
    %p52 = scmp.ne.s32.totalorder %s44, %s46
    %p53 = scmp.eq.s32.totalorder %s15, 1
    %p54 = por %p52, %p53
    %p55 = scmp.ne.s32.totalorder %s46, %s47
    %p56 = scmp.eq.s32.totalorder %s15, 0
    %p57 = por %p55, %p56
    %p58 = scmp.ne.s32.totalorder %s46, %s47
    %p59 = scmp.eq.s32.totalorder %s16, 1
    %p60 = por %p58, %p59
    %p62 = scmp.ne.s32.totalorder %s47, %s61
    %p63 = scmp.eq.s32.totalorder %s16, 0
    %p64 = por %p62, %p63
    %s66 = sadd.s32 %s65, 1
    %p69 = scmp.eq.s32.totalorder %s10, 1
    %p70 = scmp.ne.s32.totalorder %s65, %s67
    %p71 = scmp.eq.s32.totalorder %s10, 0
    %p72 = por %p70, %p71
    %p73 = scmp.ne.s32.totalorder %s65, %s67
    %p74 = scmp.eq.s32.totalorder %s15, 1
    %p75 = por %p73, %p74
    %p76 = scmp.ne.s32.totalorder %s67, %s68
    %p77 = scmp.eq.s32.totalorder %s15, 0
    %p78 = por %p76, %p77
    %p79 = scmp.ne.s32.totalorder %s67, %s68
    %p80 = scmp.eq.s32.totalorder %s16, 1
    %p81 = por %p79, %p80
    %p83 = scmp.ne.s32.totalorder %s68, %s82
    %p84 = scmp.eq.s32.totalorder %s16, 0
    %p85 = por %p83, %p84
    %s86 = ssub.s32 %s10, %s17
    %p87 = scmp.eq.s32.totalorder %s86, 0
    %s89 = sadd.s32 %s88, 1
    %s90 = scalar_select %p87, %s88, %s89
    %p93 = pneg %p87
    %p94 = scmp.eq.s32.totalorder %s10, 1
    %p95 = por %p93, %p94
    %p96 = scmp.ne.s32.totalorder %s88, %s91
    %p97 = scmp.eq.s32.totalorder %s10, 0
    %p98 = por %p96, %p97
    %p99 = scmp.ne.s32.totalorder %s88, %s91
    %p100 = scmp.eq.s32.totalorder %s15, 1
    %p101 = por %p99, %p100
    %p102 = scmp.ne.s32.totalorder %s91, %s92
    %p103 = scmp.eq.s32.totalorder %s15, 0
    %p104 = por %p102, %p103
    %p105 = scmp.ne.s32.totalorder %s91, %s92
    %p106 = scmp.eq.s32.totalorder %s16, 1
    %p107 = por %p105, %p106
    %p109 = scmp.ne.s32.totalorder %s92, %s108
    %p110 = scmp.eq.s32.totalorder %s16, 0
    %p111 = por %p109, %p110
    %s112 = ssub.s32 %s10, %s17
    %p113 = scmp.eq.s32.totalorder %s112, 0
    %s115 = sadd.s32 %s114, 1
    %s116 = scalar_select %p113, %s114, %s115
    %p119 = pneg %p113
    %p120 = scmp.eq.s32.totalorder %s10, 1
    %p121 = por %p119, %p120
    %p122 = scmp.ne.s32.totalorder %s114, %s117
    %p123 = scmp.eq.s32.totalorder %s10, 0
    %p124 = por %p122, %p123
    %p125 = scmp.ne.s32.totalorder %s114, %s117
    %p126 = scmp.eq.s32.totalorder %s15, 1
    %p127 = por %p125, %p126
    %p128 = scmp.ne.s32.totalorder %s117, %s118
    %p129 = scmp.eq.s32.totalorder %s15, 0
    %p130 = por %p128, %p129
    %p131 = scmp.ne.s32.totalorder %s117, %s118
    %p132 = scmp.eq.s32.totalorder %s16, 1
    %p133 = por %p131, %p132
    %p135 = scmp.ne.s32.totalorder %s118, %s134
    %p136 = scmp.eq.s32.totalorder %s16, 0
    %p137 = por %p135, %p136
    %p138 = scmp.le.s32.totalorder 1, %s10
    %p139 = scmp.lt.s32.totalorder %s10, 3
    %p140 = pnand %p138, %p139
    %p141 = pneg %p140
    // Predicated region
    $region9: #{_lambda_.4} parent=5 // pred_check
      _
    $region10: #{_lambda_.4} parent=5 // pred_check_branch
      %143 = sbr.rel (%p140) target = $region12
    $region11: #{_lambda_.4} parent=5 // pred_region
      %s144 = ssub.s32 %s10, 1
      // Predicated region
      $region13: #{_lambda_.4} parent=11 // pred_check
        %p145 = pneg %p57
      $region14: #{_lambda_.4} parent=11 // pred_check_branch
        %147 = sbr.rel (%p145) target = $region16
      $region15: #{_lambda_.4} parent=11 // pred_region
        _
      $region16: #{_lambda_.4} parent=11 // pred_fallthru
        _
      // Predicated region
      $region17: #{_lambda_.4} parent=11 // pred_check
        %p148 = pneg %p78
      $region18: #{_lambda_.4} parent=11 // pred_check_branch
        %150 = sbr.rel (%p148) target = $region20
      $region19: #{_lambda_.4} parent=11 // pred_region
        _
      $region20: #{_lambda_.4} parent=11 // pred_fallthru
        _
    $region12: #{_lambda_.4} parent=5 // pred_fallthru
      _
    %p151 = scmp.lt.s32.totalorder %s10, 2
    // Predicated region
    $region21: #{_lambda_.4} parent=5 // pred_check
      %p152 = pneg %p151
    $region22: #{_lambda_.4} parent=5 // pred_check_branch
      %154 = sbr.rel (%p152) target = $region24
    $region23: #{_lambda_.4} parent=5 // pred_region
      // Predicated region
      $region25: #{_lambda_.4} parent=23 // pred_check
        %p155 = pneg %p30
      $region26: #{_lambda_.4} parent=23 // pred_check_branch
        %157 = sbr.rel (%p155) target = $region28
      $region27: #{_lambda_.4} parent=23 // pred_region
        %s158 = smul.u32 32, %s10
        %p159 = scmp.lt.s32.totalorder %s158, 63
        %s160 = scalar_select %p159, %s158, 63
        %s161 = smul.addr %s160, 4
        %s162 = smul.addr %s161, 4
        %s163 = scalar_lea.vmem %s0, %s162
        %s164 = smul.u32 32, %s10
      $region28: #{_lambda_.4} parent=23 // pred_fallthru
        _
      // Predicated region
      $region29: #{_lambda_.4} parent=23 // pred_check
        %p165 = pneg %p98
      $region30: #{_lambda_.4} parent=23 // pred_check_branch
        %167 = sbr.rel (%p165) target = $region32
      $region31: #{_lambda_.4} parent=23 // pred_region
        %s168 = smul.u32 32, %s10
        %p169 = scmp.lt.s32.totalorder %s168, 63
        %s170 = scalar_select %p169, %s168, 63
        %s171 = smul.addr %s170, 8
        %s172 = scalar_lea.vmem %s3, %s171
        %s173 = smul.u32 32, %s10
      $region32: #{_lambda_.4} parent=23 // pred_fallthru
        _
    $region24: #{_lambda_.4} parent=5 // pred_fallthru
      _
    %p174 = scmp.le.s32.totalorder 1, %s10
    %p175 = scmp.lt.s32.totalorder %s10, 3
    %p176 = pnand %p174, %p175
    %p177 = pneg %p176
    // Predicated region
    $region33: #{_lambda_.4} parent=5 // pred_check
      _
    $region34: #{_lambda_.4} parent=5 // pred_check_branch
      %179 = sbr.rel (%p176) target = $region36
    $region35: #{_lambda_.4} parent=5 // pred_region
      %s180 = ssub.s32 %s10, 1
      %s181 = smul.u32 32, %s15
      %p182 = scmp.lt.s32.totalorder %s181, 63
      %s183 = scalar_select %p182, %s181, 63
      %s184 = smul.addr %s183, 4
      %s185 = smul.addr %s184, 4
      %s186 = scalar_lea.vmem %s0, %s185
      %p187 = pneg %p36
      %p188 = pneg %p33
      %p189 = pneg %p57
      %p190 = pneg %p54
      %p191 = pneg %p78
      %p192 = pneg %p75
      %s193 = smul.u32 32, %s15
      %p194 = scmp.lt.s32.totalorder %s193, 63
      %s195 = scalar_select %p194, %s193, 63
      %s196 = smul.addr %s195, 8
      %s197 = scalar_lea.vmem %s3, %s196
      %p198 = pneg %p104
      %p199 = pneg %p101
      %p200 = pneg %p130
      %p201 = pneg %p127
      %s202 = smul.u32 32, %s15
      %p203 = scmp.lt.s32.totalorder %s202, 63
      %s204 = scalar_select %p203, %s202, 63
      %s205 = smul.addr %s204, 4
      %s206 = scalar_lea.vmem %s4, %s205
      %s207 = smul.u32 32, %s15
      %p208 = scmp.lt.s32.totalorder %s207, 63
      %s209 = scalar_select %p208, %s207, 63
      %s210 = smul.addr %s209, 4
      %s211 = smul.addr %s210, 4
      %s212 = scalar_lea.vmem %s0, %s211
      %s213 = smul.u32 32, %s15
      %s214 = smul.u32 32, %s15
      %p215 = scmp.lt.s32.totalorder %s214, 63
      %s216 = scalar_select %p215, %s214, 63
      %s217 = smul.addr %s216, 8
      %s218 = scalar_lea.vmem %s3, %s217
      %s219 = smul.u32 32, %s15
      %s220 = smul.u32 32, %s15
      %p221 = scmp.lt.s32.totalorder %s220, 63
      %s222 = scalar_select %p221, %s220, 63
      %s223 = smul.addr %s222, 4
      %s224 = scalar_lea.vmem %s4, %s223
      %s225 = smul.u32 32, %s15
      %v227 = vld [vmem:[%s212] sm:$0xff]
      %v228 = vld [vmem:[%s212 + $0x8] sm:$0xff]
      %v229 = vld [vmem:[%s212 + $0x10] sm:$0xff]
      %v230 = vld [vmem:[%s212 + $0x18] sm:$0xff]
      %v231 = vld [vmem:[%s212 + $0x20] sm:$0xff]
      %v232 = vld [vmem:[%s212 + $0x28] sm:$0xff]
      %v233 = vld [vmem:[%s212 + $0x30] sm:$0xff]
      %v234 = vld [vmem:[%s212 + $0x38] sm:$0xff]
      %v235 = vld [vmem:[%s212 + $0x40] sm:$0xff]
      %v236 = vld [vmem:[%s212 + $0x48] sm:$0xff]
      %v237 = vld [vmem:[%s212 + $0x50] sm:$0xff]
      %v238 = vld [vmem:[%s212 + $0x58] sm:$0xff]
      %v239 = vld [vmem:[%s212 + $0x60] sm:$0xff]
      %v240 = vld [vmem:[%s212 + $0x68] sm:$0xff]
      %v241 = vld [vmem:[%s212 + $0x70] sm:$0xff]
      %v242 = vld [vmem:[%s212 + $0x78] sm:$0xff]
      %v243 = vld [vmem:[%s212 + $0x80] sm:$0xff]
      %v244 = vld [vmem:[%s212 + $0x88] sm:$0xff]
      %v245 = vld [vmem:[%s212 + $0x90] sm:$0xff]
      %v246 = vld [vmem:[%s212 + $0x98] sm:$0xff]
      %v247 = vld [vmem:[%s212 + $0xa0] sm:$0xff]
      %v248 = vld [vmem:[%s212 + $0xa8] sm:$0xff]
      %v249 = vld [vmem:[%s212 + $0xb0] sm:$0xff]
      %v250 = vld [vmem:[%s212 + $0xb8] sm:$0xff]
      %v251 = vld [vmem:[%s212 + $0xc0] sm:$0xff]
      %v252 = vld [vmem:[%s212 + $0xc8] sm:$0xff]
      %v253 = vld [vmem:[%s212 + $0xd0] sm:$0xff]
      %v254 = vld [vmem:[%s212 + $0xd8] sm:$0xff]
      %v255 = vld [vmem:[%s212 + $0xe0] sm:$0xff]
      %v256 = vld [vmem:[%s212 + $0xe8] sm:$0xff]
      %v257 = vld [vmem:[%s212 + $0xf0] sm:$0xff]
      %v258 = vld [vmem:[%s212 + $0xf8] sm:$0xff]
      %v259 = vld [vmem:[%s212 + $0x100] sm:$0xff]
      %v260 = vld [vmem:[%s212 + $0x108] sm:$0xff]
      %v261 = vld [vmem:[%s212 + $0x110] sm:$0xff]
      %v262 = vld [vmem:[%s212 + $0x118] sm:$0xff]
      %v263 = vld [vmem:[%s212 + $0x120] sm:$0xff]
      %v264 = vld [vmem:[%s212 + $0x128] sm:$0xff]
      %v265 = vld [vmem:[%s212 + $0x130] sm:$0xff]
      %v266 = vld [vmem:[%s212 + $0x138] sm:$0xff]
      %v267 = vld [vmem:[%s212 + $0x140] sm:$0xff]
      %v268 = vld [vmem:[%s212 + $0x148] sm:$0xff]
      %v269 = vld [vmem:[%s212 + $0x150] sm:$0xff]
      %v270 = vld [vmem:[%s212 + $0x158] sm:$0xff]
      %v271 = vld [vmem:[%s212 + $0x160] sm:$0xff]
      %v272 = vld [vmem:[%s212 + $0x168] sm:$0xff]
      %v273 = vld [vmem:[%s212 + $0x170] sm:$0xff]
      %v274 = vld [vmem:[%s212 + $0x178] sm:$0xff]
      %v275 = vld [vmem:[%s212 + $0x180] sm:$0xff]
      %v276 = vld [vmem:[%s212 + $0x188] sm:$0xff]
      %v277 = vld [vmem:[%s212 + $0x190] sm:$0xff]
      %v278 = vld [vmem:[%s212 + $0x198] sm:$0xff]
      %v279 = vld [vmem:[%s212 + $0x1a0] sm:$0xff]
      %v280 = vld [vmem:[%s212 + $0x1a8] sm:$0xff]
      %v281 = vld [vmem:[%s212 + $0x1b0] sm:$0xff]
      %v282 = vld [vmem:[%s212 + $0x1b8] sm:$0xff]
      %v283 = vld [vmem:[%s212 + $0x1c0] sm:$0xff]
      %v284 = vld [vmem:[%s212 + $0x1c8] sm:$0xff]
      %v285 = vld [vmem:[%s212 + $0x1d0] sm:$0xff]
      %v286 = vld [vmem:[%s212 + $0x1d8] sm:$0xff]
      %v287 = vld [vmem:[%s212 + $0x1e0] sm:$0xff]
      %v288 = vld [vmem:[%s212 + $0x1e8] sm:$0xff]
      %v289 = vld [vmem:[%s212 + $0x1f0] sm:$0xff]
      %v290 = vld [vmem:[%s212 + $0x1f8] sm:$0xff]
      %v291 = vld [vmem:[%s1] sm:$0xf]
      %v292 = vld [vmem:[%s1 + $0x4] sm:$0xf]
      %v293 = vld [vmem:[%s1 + $0x8] sm:$0xf]
      %v294 = vld [vmem:[%s1 + $0xc] sm:$0xf]
      %v295 = vld [vmem:[%s1 + $0x10] sm:$0xf]
      %v296 = vld [vmem:[%s1 + $0x14] sm:$0xf]
      %v297 = vld [vmem:[%s1 + $0x18] sm:$0xf]
      %v298 = vld [vmem:[%s1 + $0x1c] sm:$0xf]
      %v299 = vld [vmem:[%s1 + $0x20] sm:$0xf]
      %v300 = vld [vmem:[%s1 + $0x24] sm:$0xf]
      %v301 = vld [vmem:[%s1 + $0x28] sm:$0xf]
      %v302 = vld [vmem:[%s1 + $0x2c] sm:$0xf]
      %v303 = vld [vmem:[%s1 + $0x30] sm:$0xf]
      %v304 = vld [vmem:[%s1 + $0x34] sm:$0xf]
      %v305 = vld [vmem:[%s1 + $0x38] sm:$0xf]
      %v306 = vld [vmem:[%s1 + $0x3c] sm:$0xf]
      %v307 = vld [vmem:[%s1 + $0x40] sm:$0xf]
      %v308 = vld [vmem:[%s1 + $0x44] sm:$0xf]
      %v309 = vld [vmem:[%s1 + $0x48] sm:$0xf]
      %v310 = vld [vmem:[%s1 + $0x4c] sm:$0xf]
      %v311 = vld [vmem:[%s1 + $0x50] sm:$0xf]
      %v312 = vld [vmem:[%s1 + $0x54] sm:$0xf]
      %v313 = vld [vmem:[%s1 + $0x58] sm:$0xf]
      %v314 = vld [vmem:[%s1 + $0x5c] sm:$0xf]
      %v315 = vld [vmem:[%s1 + $0x60] sm:$0xf]
      %v316 = vld [vmem:[%s1 + $0x64] sm:$0xf]
      %v317 = vld [vmem:[%s1 + $0x68] sm:$0xf]
      %v318 = vld [vmem:[%s1 + $0x6c] sm:$0xf]
      %v319 = vld [vmem:[%s1 + $0x70] sm:$0xf]
      %v320 = vld [vmem:[%s1 + $0x74] sm:$0xf]
      %v321 = vld [vmem:[%s1 + $0x78] sm:$0xf]
      %v322 = vld [vmem:[%s1 + $0x7c] sm:$0xf]
      %v323 = vld [vmem:[%s1 + $0x80] sm:$0xf]
      %v324 = vld [vmem:[%s1 + $0x84] sm:$0xf]
      %v325 = vld [vmem:[%s1 + $0x88] sm:$0xf]
      %v326 = vld [vmem:[%s1 + $0x8c] sm:$0xf]
      %v327 = vld [vmem:[%s1 + $0x90] sm:$0xf]
      %v328 = vld [vmem:[%s1 + $0x94] sm:$0xf]
      %v329 = vld [vmem:[%s1 + $0x98] sm:$0xf]
      %v330 = vld [vmem:[%s1 + $0x9c] sm:$0xf]
      %v331 = vld [vmem:[%s1 + $0xa0] sm:$0xf]
      %v332 = vld [vmem:[%s1 + $0xa4] sm:$0xf]
      %v333 = vld [vmem:[%s1 + $0xa8] sm:$0xf]
      %v334 = vld [vmem:[%s1 + $0xac] sm:$0xf]
      %v335 = vld [vmem:[%s1 + $0xb0] sm:$0xf]
      %v336 = vld [vmem:[%s1 + $0xb4] sm:$0xf]
      %v337 = vld [vmem:[%s1 + $0xb8] sm:$0xf]
      %v338 = vld [vmem:[%s1 + $0xbc] sm:$0xf]
      %v339 = vld [vmem:[%s1 + $0xc0] sm:$0xf]
      %v340 = vld [vmem:[%s1 + $0xc4] sm:$0xf]
      %v341 = vld [vmem:[%s1 + $0xc8] sm:$0xf]
      %v342 = vld [vmem:[%s1 + $0xcc] sm:$0xf]
      %v343 = vld [vmem:[%s1 + $0xd0] sm:$0xf]
      %v344 = vld [vmem:[%s1 + $0xd4] sm:$0xf]
      %v345 = vld [vmem:[%s2] sm:$0x1]
      %v347 = vperm.slane %v345, 0
      %v413 = vunpack.c.l.b16 %v227
      %v414 = vunpack.c.h.b16 %v227
      %v415 = vunpack.c.l.b16 %v228
      %v416 = vunpack.c.h.b16 %v228
      %v417 = vunpack.c.l.b16 %v229
      %v418 = vunpack.c.h.b16 %v229
      %v419 = vunpack.c.l.b16 %v230
      %v420 = vunpack.c.h.b16 %v230
      %v421 = vunpack.c.l.b16 %v231
      %v422 = vunpack.c.h.b16 %v231
      %v423 = vunpack.c.l.b16 %v232
      %v424 = vunpack.c.h.b16 %v232
      %v425 = vunpack.c.l.b16 %v233
      %v426 = vunpack.c.h.b16 %v233
      %v427 = vunpack.c.l.b16 %v234
      %v428 = vunpack.c.h.b16 %v234
      %v429 = vunpack.c.l.b16 %v235
      %v430 = vunpack.c.h.b16 %v235
      %v431 = vunpack.c.l.b16 %v236
      %v432 = vunpack.c.h.b16 %v236
      %v433 = vunpack.c.l.b16 %v237
      %v434 = vunpack.c.h.b16 %v237
      %v435 = vunpack.c.l.b16 %v238
      %v436 = vunpack.c.h.b16 %v238
      %v437 = vunpack.c.l.b16 %v239
      %v438 = vunpack.c.h.b16 %v239
      %v439 = vunpack.c.l.b16 %v240
      %v440 = vunpack.c.h.b16 %v240
      %v441 = vunpack.c.l.b16 %v241
      %v442 = vunpack.c.h.b16 %v241
      %v443 = vunpack.c.l.b16 %v242
      %v444 = vunpack.c.h.b16 %v242
      %v445 = vunpack.c.l.b16 %v243
      %v446 = vunpack.c.h.b16 %v243
      %v447 = vunpack.c.l.b16 %v244
      %v448 = vunpack.c.h.b16 %v244
      %v449 = vunpack.c.l.b16 %v245
      %v450 = vunpack.c.h.b16 %v245
      %v451 = vunpack.c.l.b16 %v246
      %v452 = vunpack.c.h.b16 %v246
      %v453 = vunpack.c.l.b16 %v247
      %v454 = vunpack.c.h.b16 %v247
      %v455 = vunpack.c.l.b16 %v248
      %v456 = vunpack.c.h.b16 %v248
      %v457 = vunpack.c.l.b16 %v249
      %v458 = vunpack.c.h.b16 %v249
      %v459 = vunpack.c.l.b16 %v250
      %v460 = vunpack.c.h.b16 %v250
      %v461 = vunpack.c.l.b16 %v251
      %v462 = vunpack.c.h.b16 %v251
      %v463 = vunpack.c.l.b16 %v252
      %v464 = vunpack.c.h.b16 %v252
      %v465 = vunpack.c.l.b16 %v253
      %v466 = vunpack.c.h.b16 %v253
      %v467 = vunpack.c.l.b16 %v254
      %v468 = vunpack.c.h.b16 %v254
      %v469 = vunpack.c.l.b16 %v255
      %v470 = vunpack.c.h.b16 %v255
      %v471 = vunpack.c.l.b16 %v256
      %v472 = vunpack.c.h.b16 %v256
      %v473 = vunpack.c.l.b16 %v257
      %v474 = vunpack.c.h.b16 %v257
      %v475 = vunpack.c.l.b16 %v258
      %v476 = vunpack.c.h.b16 %v258
      %v477 = vunpack.c.l.b16 %v259
      %v478 = vunpack.c.h.b16 %v259
      %v479 = vunpack.c.l.b16 %v260
      %v480 = vunpack.c.h.b16 %v260
      %v481 = vunpack.c.l.b16 %v261
      %v482 = vunpack.c.h.b16 %v261
      %v483 = vunpack.c.l.b16 %v262
      %v484 = vunpack.c.h.b16 %v262
      %v485 = vunpack.c.l.b16 %v263
      %v486 = vunpack.c.h.b16 %v263
      %v487 = vunpack.c.l.b16 %v264
      %v488 = vunpack.c.h.b16 %v264
      %v489 = vunpack.c.l.b16 %v265
      %v490 = vunpack.c.h.b16 %v265
      %v491 = vunpack.c.l.b16 %v266
      %v492 = vunpack.c.h.b16 %v266
      %v493 = vunpack.c.l.b16 %v267
      %v494 = vunpack.c.h.b16 %v267
      %v495 = vunpack.c.l.b16 %v268
      %v496 = vunpack.c.h.b16 %v268
      %v497 = vunpack.c.l.b16 %v269
      %v498 = vunpack.c.h.b16 %v269
      %v499 = vunpack.c.l.b16 %v270
      %v500 = vunpack.c.h.b16 %v270
      %v501 = vunpack.c.l.b16 %v271
      %v502 = vunpack.c.h.b16 %v271
      %v503 = vunpack.c.l.b16 %v272
      %v504 = vunpack.c.h.b16 %v272
      %v505 = vunpack.c.l.b16 %v273
      %v506 = vunpack.c.h.b16 %v273
      %v507 = vunpack.c.l.b16 %v274
      %v508 = vunpack.c.h.b16 %v274
      %v509 = vunpack.c.l.b16 %v275
      %v510 = vunpack.c.h.b16 %v275
      %v511 = vunpack.c.l.b16 %v276
      %v512 = vunpack.c.h.b16 %v276
      %v513 = vunpack.c.l.b16 %v277
      %v514 = vunpack.c.h.b16 %v277
      %v515 = vunpack.c.l.b16 %v278
      %v516 = vunpack.c.h.b16 %v278
      %v517 = vunpack.c.l.b16 %v279
      %v518 = vunpack.c.h.b16 %v279
      %v519 = vunpack.c.l.b16 %v280
      %v520 = vunpack.c.h.b16 %v280
      %v521 = vunpack.c.l.b16 %v281
      %v522 = vunpack.c.h.b16 %v281
      %v523 = vunpack.c.l.b16 %v282
      %v524 = vunpack.c.h.b16 %v282
      %v525 = vunpack.c.l.b16 %v283
      %v526 = vunpack.c.h.b16 %v283
      %v527 = vunpack.c.l.b16 %v284
      %v528 = vunpack.c.h.b16 %v284
      %v529 = vunpack.c.l.b16 %v285
      %v530 = vunpack.c.h.b16 %v285
      %v531 = vunpack.c.l.b16 %v286
      %v532 = vunpack.c.h.b16 %v286
      %v533 = vunpack.c.l.b16 %v287
      %v534 = vunpack.c.h.b16 %v287
      %v535 = vunpack.c.l.b16 %v288
      %v536 = vunpack.c.h.b16 %v288
      %v537 = vunpack.c.l.b16 %v289
      %v538 = vunpack.c.h.b16 %v289
      %v539 = vunpack.c.l.b16 %v290
      %v540 = vunpack.c.h.b16 %v290
      %v541 = vpack.c.b16 %v417, %v413
      %v542 = vpack.c.b16 %v418, %v414
      %v543 = vpack.c.b16 %v419, %v415
      %v544 = vpack.c.b16 %v420, %v416
      %v545 = vpack.c.b16 %v425, %v421
      %v546 = vpack.c.b16 %v426, %v422
      %v547 = vpack.c.b16 %v427, %v423
      %v548 = vpack.c.b16 %v428, %v424
      %v549 = vpack.c.b16 %v433, %v429
      %v550 = vpack.c.b16 %v434, %v430
      %v551 = vpack.c.b16 %v435, %v431
      %v552 = vpack.c.b16 %v436, %v432
      %v553 = vpack.c.b16 %v441, %v437
      %v554 = vpack.c.b16 %v442, %v438
      %v555 = vpack.c.b16 %v443, %v439
      %v556 = vpack.c.b16 %v444, %v440
      %v557 = vpack.c.b16 %v449, %v445
      %v558 = vpack.c.b16 %v450, %v446
      %v559 = vpack.c.b16 %v451, %v447
      %v560 = vpack.c.b16 %v452, %v448
      %v561 = vpack.c.b16 %v457, %v453
      %v562 = vpack.c.b16 %v458, %v454
      %v563 = vpack.c.b16 %v459, %v455
      %v564 = vpack.c.b16 %v460, %v456
      %v565 = vpack.c.b16 %v465, %v461
      %v566 = vpack.c.b16 %v466, %v462
      %v567 = vpack.c.b16 %v467, %v463
      %v568 = vpack.c.b16 %v468, %v464
      %v569 = vpack.c.b16 %v473, %v469
      %v570 = vpack.c.b16 %v474, %v470
      %v571 = vpack.c.b16 %v475, %v471
      %v572 = vpack.c.b16 %v476, %v472
      %v573 = vpack.c.b16 %v481, %v477
      %v574 = vpack.c.b16 %v482, %v478
      %v575 = vpack.c.b16 %v483, %v479
      %v576 = vpack.c.b16 %v484, %v480
      %v577 = vpack.c.b16 %v489, %v485
      %v578 = vpack.c.b16 %v490, %v486
      %v579 = vpack.c.b16 %v491, %v487
      %v580 = vpack.c.b16 %v492, %v488
      %v581 = vpack.c.b16 %v497, %v493
      %v582 = vpack.c.b16 %v498, %v494
      %v583 = vpack.c.b16 %v499, %v495
      %v584 = vpack.c.b16 %v500, %v496
      %v585 = vpack.c.b16 %v505, %v501
      %v586 = vpack.c.b16 %v506, %v502
      %v587 = vpack.c.b16 %v507, %v503
      %v588 = vpack.c.b16 %v508, %v504
      %v589 = vpack.c.b16 %v513, %v509
      %v590 = vpack.c.b16 %v514, %v510
      %v591 = vpack.c.b16 %v515, %v511
      %v592 = vpack.c.b16 %v516, %v512
      %v593 = vpack.c.b16 %v521, %v517
      %v594 = vpack.c.b16 %v522, %v518
      %v595 = vpack.c.b16 %v523, %v519
      %v596 = vpack.c.b16 %v524, %v520
      %v597 = vpack.c.b16 %v529, %v525
      %v598 = vpack.c.b16 %v530, %v526
      %v599 = vpack.c.b16 %v531, %v527
      %v600 = vpack.c.b16 %v532, %v528
      %v601 = vpack.c.b16 %v537, %v533
      %v602 = vpack.c.b16 %v538, %v534
      %v603 = vpack.c.b16 %v539, %v535
      %v604 = vpack.c.b16 %v540, %v536
      %v707 = vunpack.c.l.b16 %v291
      %v708 = vunpack.c.l.b16 %v292
      %v709 = vunpack.c.l.b16 %v293
      %v710 = vunpack.c.l.b16 %v294
      %v711 = vunpack.c.l.b16 %v295
      %v712 = vunpack.c.l.b16 %v296
      %v713 = vunpack.c.l.b16 %v297
      %v714 = vunpack.c.l.b16 %v298
      %v715 = vunpack.c.l.b16 %v299
      %v716 = vunpack.c.l.b16 %v300
      %v717 = vunpack.c.l.b16 %v301
      %v718 = vunpack.c.l.b16 %v302
      %v719 = vunpack.c.l.b16 %v303
      %v720 = vunpack.c.l.b16 %v304
      %v721 = vunpack.c.l.b16 %v305
      %v722 = vunpack.c.l.b16 %v306
      %v723 = vunpack.c.l.b16 %v307
      %v724 = vunpack.c.l.b16 %v308
      %v725 = vunpack.c.l.b16 %v309
      %v726 = vunpack.c.l.b16 %v310
      %v727 = vunpack.c.l.b16 %v311
      %v728 = vunpack.c.l.b16 %v312
      %v729 = vunpack.c.l.b16 %v313
      %v730 = vunpack.c.l.b16 %v314
      %v731 = vunpack.c.l.b16 %v315
      %v732 = vunpack.c.l.b16 %v316
      %v733 = vunpack.c.l.b16 %v317
      %v734 = vunpack.c.l.b16 %v318
      %v735 = vunpack.c.l.b16 %v319
      %v736 = vunpack.c.l.b16 %v320
      %v737 = vunpack.c.l.b16 %v321
      %v738 = vunpack.c.l.b16 %v322
      %v739 = vunpack.c.l.b16 %v323
      %v740 = vunpack.c.l.b16 %v324
      %v741 = vunpack.c.l.b16 %v325
      %v742 = vunpack.c.l.b16 %v326
      %v743 = vunpack.c.l.b16 %v327
      %v744 = vunpack.c.l.b16 %v328
      %v745 = vunpack.c.l.b16 %v329
      %v746 = vunpack.c.l.b16 %v330
      %v747 = vunpack.c.l.b16 %v331
      %v748 = vunpack.c.l.b16 %v332
      %v749 = vunpack.c.l.b16 %v333
      %v750 = vunpack.c.l.b16 %v334
      %v751 = vunpack.c.l.b16 %v335
      %v752 = vunpack.c.l.b16 %v336
      %v753 = vunpack.c.l.b16 %v337
      %v754 = vunpack.c.l.b16 %v338
      %v755 = vunpack.c.l.b16 %v339
      %v756 = vunpack.c.l.b16 %v340
      %v757 = vunpack.c.l.b16 %v341
      %v758 = vunpack.c.l.b16 %v342
      %v759 = vunpack.c.l.b16 %v343
      %v760 = vunpack.c.l.b16 %v344
      %v761 = vpack.c.b16 %v708, %v707
      %v762 = vpack.c.b16 %v710, %v709
      %v763 = vpack.c.b16 %v712, %v711
      %v764 = vpack.c.b16 %v714, %v713
      %v765 = vpack.c.b16 %v716, %v715
      %v766 = vpack.c.b16 %v718, %v717
      %v767 = vpack.c.b16 %v720, %v719
      %v768 = vpack.c.b16 %v722, %v721
      %v769 = vpack.c.b16 %v724, %v723
      %v770 = vpack.c.b16 %v726, %v725
      %v771 = vpack.c.b16 %v728, %v727
      %v772 = vpack.c.b16 %v730, %v729
      %v773 = vpack.c.b16 %v732, %v731
      %v774 = vpack.c.b16 %v734, %v733
      %v775 = vpack.c.b16 %v736, %v735
      %v776 = vpack.c.b16 %v738, %v737
      %v777 = vpack.c.b16 %v740, %v739
      %v778 = vpack.c.b16 %v742, %v741
      %v779 = vpack.c.b16 %v744, %v743
      %v780 = vpack.c.b16 %v746, %v745
      %v781 = vpack.c.b16 %v748, %v747
      %v782 = vpack.c.b16 %v750, %v749
      %v783 = vpack.c.b16 %v752, %v751
      %v784 = vpack.c.b16 %v754, %v753
      %v785 = vpack.c.b16 %v756, %v755
      %v786 = vpack.c.b16 %v758, %v757
      %v787 = vpack.c.b16 %v760, %v759
      %vm815 = vcmask 392192
      %v817 = vsel %vm815, %v544, 0
      %v820 = vsel %vm815, %v548, 0
      %v823 = vsel %vm815, %v552, 0
      %v826 = vsel %vm815, %v556, 0
      %v829 = vsel %vm815, %v560, 0
      %v832 = vsel %vm815, %v564, 0
      %v835 = vsel %vm815, %v568, 0
      %v838 = vsel %vm815, %v572, 0
      %v841 = vsel %vm815, %v576, 0
      %v844 = vsel %vm815, %v580, 0
      %v847 = vsel %vm815, %v584, 0
      %v850 = vsel %vm815, %v588, 0
      %v853 = vsel %vm815, %v592, 0
      %v856 = vsel %vm815, %v596, 0
      %v859 = vsel %vm815, %v600, 0
      %v862 = vsel %vm815, %v604, 0
      %864 = vmatpush.bf16.msra.mxu0 %v768
      %865 = vmatpush.bf16.msra.mxu0 %v767
      %866 = vmatpush.bf16.msra.mxu0 %v766
      %867 = vmatpush.bf16.msra.mxu0 %v765
      %868 = vmatpush.bf16.msra.mxu0 %v764
      %869 = vmatpush.bf16.msra.mxu0 %v763
      %870 = vmatpush.bf16.msra.mxu0 %v762
      %871 = vmatpush.bf16.msra.mxu0 %v761
      %872 = vmatmul.bf16.gmra.mxu0 %v541
      %v873 = vpop.f32.mrf.mxu0
      %v874 = vadd.f32 %v347, %v873
      %v875 = vpop.f32.mrf.mxu0
      %v876 = vadd.f32 %v347, %v875
      %877 = vmatmul.bf16.gmra.mxu0 %v545
      %v878 = vpop.f32.mrf.mxu0
      %v879 = vadd.f32 %v347, %v878
      %v880 = vpop.f32.mrf.mxu0
      %v881 = vadd.f32 %v347, %v880
      %882 = vmatmul.bf16.gmra.mxu0 %v549
      %v883 = vpop.f32.mrf.mxu0
      %v884 = vadd.f32 %v347, %v883
      %v885 = vpop.f32.mrf.mxu0
      %v886 = vadd.f32 %v347, %v885
      %887 = vmatmul.bf16.gmra.mxu0 %v553
      %v888 = vpop.f32.mrf.mxu0
      %v889 = vadd.f32 %v347, %v888
      %v890 = vpop.f32.mrf.mxu0
      %v891 = vadd.f32 %v347, %v890
      %892 = vmatmul.bf16.gmra.mxu0 %v557
      %v893 = vpop.f32.mrf.mxu0
      %v894 = vadd.f32 %v347, %v893
      %v895 = vpop.f32.mrf.mxu0
      %v896 = vadd.f32 %v347, %v895
      %897 = vmatmul.bf16.gmra.mxu0 %v561
      %v898 = vpop.f32.mrf.mxu0
      %v899 = vadd.f32 %v347, %v898
      %v900 = vpop.f32.mrf.mxu0
      %v901 = vadd.f32 %v347, %v900
      %902 = vmatmul.bf16.gmra.mxu0 %v565
      %v903 = vpop.f32.mrf.mxu0
      %v904 = vadd.f32 %v347, %v903
      %v905 = vpop.f32.mrf.mxu0
      %v906 = vadd.f32 %v347, %v905
      %907 = vmatmul.bf16.gmra.mxu0 %v569
      %v908 = vpop.f32.mrf.mxu0
      %v909 = vadd.f32 %v347, %v908
      %v910 = vpop.f32.mrf.mxu0
      %v911 = vadd.f32 %v347, %v910
      %912 = vmatmul.bf16.gmra.mxu0 %v573
      %v913 = vpop.f32.mrf.mxu0
      %v914 = vadd.f32 %v347, %v913
      %v915 = vpop.f32.mrf.mxu0
      %v916 = vadd.f32 %v347, %v915
      %917 = vmatmul.bf16.gmra.mxu0 %v577
      %v918 = vpop.f32.mrf.mxu0
      %v919 = vadd.f32 %v347, %v918
      %v920 = vpop.f32.mrf.mxu0
      %v921 = vadd.f32 %v347, %v920
      %922 = vmatmul.bf16.gmra.mxu0 %v581
      %v923 = vpop.f32.mrf.mxu0
      %v924 = vadd.f32 %v347, %v923
      %v925 = vpop.f32.mrf.mxu0
      %v926 = vadd.f32 %v347, %v925
      %927 = vmatmul.bf16.gmra.mxu0 %v585
      %v928 = vpop.f32.mrf.mxu0
      %v929 = vadd.f32 %v347, %v928
      %v930 = vpop.f32.mrf.mxu0
      %v931 = vadd.f32 %v347, %v930
      %932 = vmatmul.bf16.gmra.mxu0 %v589
      %v933 = vpop.f32.mrf.mxu0
      %v934 = vadd.f32 %v347, %v933
      %v935 = vpop.f32.mrf.mxu0
      %v936 = vadd.f32 %v347, %v935
      %937 = vmatmul.bf16.gmra.mxu0 %v593
      %v938 = vpop.f32.mrf.mxu0
      %v939 = vadd.f32 %v347, %v938
      %v940 = vpop.f32.mrf.mxu0
      %v941 = vadd.f32 %v347, %v940
      %942 = vmatmul.bf16.gmra.mxu0 %v597
      %v943 = vpop.f32.mrf.mxu0
      %v944 = vadd.f32 %v347, %v943
      %v945 = vpop.f32.mrf.mxu0
      %v946 = vadd.f32 %v347, %v945
      %947 = vmatmul.bf16.gmra.mxu0 %v601
      %v948 = vpop.f32.mrf.mxu0
      %v949 = vadd.f32 %v347, %v948
      %v950 = vpop.f32.mrf.mxu0
      %v951 = vadd.f32 %v347, %v950
      %952 = vdwg.mxu0
      %953 = vmatpush.bf16.msra.mxu0 %v776
      %954 = vmatpush.bf16.msra.mxu0 %v775
      %955 = vmatpush.bf16.msra.mxu0 %v774
      %956 = vmatpush.bf16.msra.mxu0 %v773
      %957 = vmatpush.bf16.msra.mxu0 %v772
      %958 = vmatpush.bf16.msra.mxu0 %v771
      %959 = vmatpush.bf16.msra.mxu0 %v770
      %960 = vmatpush.bf16.msra.mxu0 %v769
      %961 = vmatmul.bf16.gmra.mxu0 %v542
      %v962 = vpop.f32.mrf.mxu0
      %v963 = vadd.f32 %v874, %v962
      %v964 = vpop.f32.mrf.mxu0
      %v965 = vadd.f32 %v876, %v964
      %966 = vmatmul.bf16.gmra.mxu0 %v546
      %v967 = vpop.f32.mrf.mxu0
      %v968 = vadd.f32 %v879, %v967
      %v969 = vpop.f32.mrf.mxu0
      %v970 = vadd.f32 %v881, %v969
      %971 = vmatmul.bf16.gmra.mxu0 %v550
      %v972 = vpop.f32.mrf.mxu0
      %v973 = vadd.f32 %v884, %v972
      %v974 = vpop.f32.mrf.mxu0
      %v975 = vadd.f32 %v886, %v974
      %976 = vmatmul.bf16.gmra.mxu0 %v554
      %v977 = vpop.f32.mrf.mxu0
      %v978 = vadd.f32 %v889, %v977
      %v979 = vpop.f32.mrf.mxu0
      %v980 = vadd.f32 %v891, %v979
      %981 = vmatmul.bf16.gmra.mxu0 %v558
      %v982 = vpop.f32.mrf.mxu0
      %v983 = vadd.f32 %v894, %v982
      %v984 = vpop.f32.mrf.mxu0
      %v985 = vadd.f32 %v896, %v984
      %986 = vmatmul.bf16.gmra.mxu0 %v562
      %v987 = vpop.f32.mrf.mxu0
      %v988 = vadd.f32 %v899, %v987
      %v989 = vpop.f32.mrf.mxu0
      %v990 = vadd.f32 %v901, %v989
      %991 = vmatmul.bf16.gmra.mxu0 %v566
      %v992 = vpop.f32.mrf.mxu0
      %v993 = vadd.f32 %v904, %v992
      %v994 = vpop.f32.mrf.mxu0
      %v995 = vadd.f32 %v906, %v994
      %996 = vmatmul.bf16.gmra.mxu0 %v570
      %v997 = vpop.f32.mrf.mxu0
      %v998 = vadd.f32 %v909, %v997
      %v999 = vpop.f32.mrf.mxu0
      %v1000 = vadd.f32 %v911, %v999
      %1001 = vmatmul.bf16.gmra.mxu0 %v574
      %v1002 = vpop.f32.mrf.mxu0
      %v1003 = vadd.f32 %v914, %v1002
      %v1004 = vpop.f32.mrf.mxu0
      %v1005 = vadd.f32 %v916, %v1004
      %1006 = vmatmul.bf16.gmra.mxu0 %v578
      %v1007 = vpop.f32.mrf.mxu0
      %v1008 = vadd.f32 %v919, %v1007
      %v1009 = vpop.f32.mrf.mxu0
      %v1010 = vadd.f32 %v921, %v1009
      %1011 = vmatmul.bf16.gmra.mxu0 %v582
      %v1012 = vpop.f32.mrf.mxu0
      %v1013 = vadd.f32 %v924, %v1012
      %v1014 = vpop.f32.mrf.mxu0
      %v1015 = vadd.f32 %v926, %v1014
      %1016 = vmatmul.bf16.gmra.mxu0 %v586
      %v1017 = vpop.f32.mrf.mxu0
      %v1018 = vadd.f32 %v929, %v1017
      %v1019 = vpop.f32.mrf.mxu0
      %v1020 = vadd.f32 %v931, %v1019
      %1021 = vmatmul.bf16.gmra.mxu0 %v590
      %v1022 = vpop.f32.mrf.mxu0
      %v1023 = vadd.f32 %v934, %v1022
      %v1024 = vpop.f32.mrf.mxu0
      %v1025 = vadd.f32 %v936, %v1024
      %1026 = vmatmul.bf16.gmra.mxu0 %v594
      %v1027 = vpop.f32.mrf.mxu0
      %v1028 = vadd.f32 %v939, %v1027
      %v1029 = vpop.f32.mrf.mxu0
      %v1030 = vadd.f32 %v941, %v1029
      %1031 = vmatmul.bf16.gmra.mxu0 %v598
      %v1032 = vpop.f32.mrf.mxu0
      %v1033 = vadd.f32 %v944, %v1032
      %v1034 = vpop.f32.mrf.mxu0
      %v1035 = vadd.f32 %v946, %v1034
      %1036 = vmatmul.bf16.gmra.mxu0 %v602
      %v1037 = vpop.f32.mrf.mxu0
      %v1038 = vadd.f32 %v949, %v1037
      %v1039 = vpop.f32.mrf.mxu0
      %v1040 = vadd.f32 %v951, %v1039
      %1041 = vdwg.mxu0
      %1042 = vmatpush.bf16.msra.mxu0 %v784
      %1043 = vmatpush.bf16.msra.mxu0 %v783
      %1044 = vmatpush.bf16.msra.mxu0 %v782
      %1045 = vmatpush.bf16.msra.mxu0 %v781
      %1046 = vmatpush.bf16.msra.mxu0 %v780
      %1047 = vmatpush.bf16.msra.mxu0 %v779
      %1048 = vmatpush.bf16.msra.mxu0 %v778
      %1049 = vmatpush.bf16.msra.mxu0 %v777
      %1050 = vmatmul.bf16.gmra.mxu0 %v543
      %v1051 = vpop.f32.mrf.mxu0
      %v1052 = vadd.f32 %v963, %v1051
      %v1053 = vpop.f32.mrf.mxu0
      %v1054 = vadd.f32 %v965, %v1053
      %1055 = vmatmul.bf16.gmra.mxu0 %v547
      %v1056 = vpop.f32.mrf.mxu0
      %v1057 = vadd.f32 %v968, %v1056
      %v1058 = vpop.f32.mrf.mxu0
      %v1059 = vadd.f32 %v970, %v1058
      %1060 = vmatmul.bf16.gmra.mxu0 %v551
      %v1061 = vpop.f32.mrf.mxu0
      %v1062 = vadd.f32 %v973, %v1061
      %v1063 = vpop.f32.mrf.mxu0
      %v1064 = vadd.f32 %v975, %v1063
      %1065 = vmatmul.bf16.gmra.mxu0 %v555
      %v1066 = vpop.f32.mrf.mxu0
      %v1067 = vadd.f32 %v978, %v1066
      %v1068 = vpop.f32.mrf.mxu0
      %v1069 = vadd.f32 %v980, %v1068
      %1070 = vmatmul.bf16.gmra.mxu0 %v559
      %v1071 = vpop.f32.mrf.mxu0
      %v1072 = vadd.f32 %v983, %v1071
      %v1073 = vpop.f32.mrf.mxu0
      %v1074 = vadd.f32 %v985, %v1073
      %1075 = vmatmul.bf16.gmra.mxu0 %v563
      %v1076 = vpop.f32.mrf.mxu0
      %v1077 = vadd.f32 %v988, %v1076
      %v1078 = vpop.f32.mrf.mxu0
      %v1079 = vadd.f32 %v990, %v1078
      %1080 = vmatmul.bf16.gmra.mxu0 %v567
      %v1081 = vpop.f32.mrf.mxu0
      %v1082 = vadd.f32 %v993, %v1081
      %v1083 = vpop.f32.mrf.mxu0
      %v1084 = vadd.f32 %v995, %v1083
      %1085 = vmatmul.bf16.gmra.mxu0 %v571
      %v1086 = vpop.f32.mrf.mxu0
      %v1087 = vadd.f32 %v998, %v1086
      %v1088 = vpop.f32.mrf.mxu0
      %v1089 = vadd.f32 %v1000, %v1088
      %1090 = vmatmul.bf16.gmra.mxu0 %v575
      %v1091 = vpop.f32.mrf.mxu0
      %v1092 = vadd.f32 %v1003, %v1091
      %v1093 = vpop.f32.mrf.mxu0
      %v1094 = vadd.f32 %v1005, %v1093
      %1095 = vmatmul.bf16.gmra.mxu0 %v579
      %v1096 = vpop.f32.mrf.mxu0
      %v1097 = vadd.f32 %v1008, %v1096
      %v1098 = vpop.f32.mrf.mxu0
      %v1099 = vadd.f32 %v1010, %v1098
      %1100 = vmatmul.bf16.gmra.mxu0 %v583
      %v1101 = vpop.f32.mrf.mxu0
      %v1102 = vadd.f32 %v1013, %v1101
      %v1103 = vpop.f32.mrf.mxu0
      %v1104 = vadd.f32 %v1015, %v1103
      %1105 = vmatmul.bf16.gmra.mxu0 %v587
      %v1106 = vpop.f32.mrf.mxu0
      %v1107 = vadd.f32 %v1018, %v1106
      %v1108 = vpop.f32.mrf.mxu0
      %v1109 = vadd.f32 %v1020, %v1108
      %1110 = vmatmul.bf16.gmra.mxu0 %v591
      %v1111 = vpop.f32.mrf.mxu0
      %v1112 = vadd.f32 %v1023, %v1111
      %v1113 = vpop.f32.mrf.mxu0
      %v1114 = vadd.f32 %v1025, %v1113
      %1115 = vmatmul.bf16.gmra.mxu0 %v595
      %v1116 = vpop.f32.mrf.mxu0
      %v1117 = vadd.f32 %v1028, %v1116
      %v1118 = vpop.f32.mrf.mxu0
      %v1119 = vadd.f32 %v1030, %v1118
      %1120 = vmatmul.bf16.gmra.mxu0 %v599
      %v1121 = vpop.f32.mrf.mxu0
      %v1122 = vadd.f32 %v1033, %v1121
      %v1123 = vpop.f32.mrf.mxu0
      %v1124 = vadd.f32 %v1035, %v1123
      %1125 = vmatmul.bf16.gmra.mxu0 %v603
      %v1126 = vpop.f32.mrf.mxu0
      %v1127 = vadd.f32 %v1038, %v1126
      %v1128 = vpop.f32.mrf.mxu0
      %v1129 = vadd.f32 %v1040, %v1128
      %1130 = vdwg.mxu0
      %1131 = vmatpush.bf16.msra.mxu0 0
      %1132 = vmatpush.bf16.msra.mxu0 0
      %1133 = vmatpush.bf16.msra.mxu0 0
      %1134 = vmatpush.bf16.msra.mxu0 0
      %1135 = vmatpush.bf16.msra.mxu0 0
      %1136 = vmatpush.bf16.msra.mxu0 %v787
      %1137 = vmatpush.bf16.msra.mxu0 %v786
      %1138 = vmatpush.bf16.msra.mxu0 %v785
      %1139 = vmatmul.bf16.gmra.mxu0 %v817
      %v1140 = vpop.f32.mrf.mxu0
      %v1141 = vadd.f32 %v1052, %v1140
      %v1142 = vpop.f32.mrf.mxu0
      %v1143 = vadd.f32 %v1054, %v1142
      %1144 = vmatmul.bf16.gmra.mxu0 %v820
      %v1145 = vpop.f32.mrf.mxu0
      %v1146 = vadd.f32 %v1057, %v1145
      %v1147 = vpop.f32.mrf.mxu0
      %v1148 = vadd.f32 %v1059, %v1147
      %1149 = vmatmul.bf16.gmra.mxu0 %v823
      %v1150 = vpop.f32.mrf.mxu0
      %v1151 = vadd.f32 %v1062, %v1150
      %v1152 = vpop.f32.mrf.mxu0
      %v1153 = vadd.f32 %v1064, %v1152
      %1154 = vmatmul.bf16.gmra.mxu0 %v826
      %v1155 = vpop.f32.mrf.mxu0
      %v1156 = vadd.f32 %v1067, %v1155
      %v1157 = vpop.f32.mrf.mxu0
      %v1158 = vadd.f32 %v1069, %v1157
      %1159 = vmatmul.bf16.gmra.mxu0 %v829
      %v1160 = vpop.f32.mrf.mxu0
      %v1161 = vadd.f32 %v1072, %v1160
      %v1162 = vpop.f32.mrf.mxu0
      %v1163 = vadd.f32 %v1074, %v1162
      %1164 = vmatmul.bf16.gmra.mxu0 %v832
      %v1165 = vpop.f32.mrf.mxu0
      %v1166 = vadd.f32 %v1077, %v1165
      %v1167 = vpop.f32.mrf.mxu0
      %v1168 = vadd.f32 %v1079, %v1167
      %1169 = vmatmul.bf16.gmra.mxu0 %v835
      %v1170 = vpop.f32.mrf.mxu0
      %v1171 = vadd.f32 %v1082, %v1170
      %v1172 = vpop.f32.mrf.mxu0
      %v1173 = vadd.f32 %v1084, %v1172
      %1174 = vmatmul.bf16.gmra.mxu0 %v838
      %v1175 = vpop.f32.mrf.mxu0
      %v1176 = vadd.f32 %v1087, %v1175
      %v1177 = vpop.f32.mrf.mxu0
      %v1178 = vadd.f32 %v1089, %v1177
      %1179 = vmatmul.bf16.gmra.mxu0 %v841
      %v1180 = vpop.f32.mrf.mxu0
      %v1181 = vadd.f32 %v1092, %v1180
      %v1182 = vpop.f32.mrf.mxu0
      %v1183 = vadd.f32 %v1094, %v1182
      %1184 = vmatmul.bf16.gmra.mxu0 %v844
      %v1185 = vpop.f32.mrf.mxu0
      %v1186 = vadd.f32 %v1097, %v1185
      %v1187 = vpop.f32.mrf.mxu0
      %v1188 = vadd.f32 %v1099, %v1187
      %1189 = vmatmul.bf16.gmra.mxu0 %v847
      %v1190 = vpop.f32.mrf.mxu0
      %v1191 = vadd.f32 %v1102, %v1190
      %v1192 = vpop.f32.mrf.mxu0
      %v1193 = vadd.f32 %v1104, %v1192
      %1194 = vmatmul.bf16.gmra.mxu0 %v850
      %v1195 = vpop.f32.mrf.mxu0
      %v1196 = vadd.f32 %v1107, %v1195
      %v1197 = vpop.f32.mrf.mxu0
      %v1198 = vadd.f32 %v1109, %v1197
      %1199 = vmatmul.bf16.gmra.mxu0 %v853
      %v1200 = vpop.f32.mrf.mxu0
      %v1201 = vadd.f32 %v1112, %v1200
      %v1202 = vpop.f32.mrf.mxu0
      %v1203 = vadd.f32 %v1114, %v1202
      %1204 = vmatmul.bf16.gmra.mxu0 %v856
      %v1205 = vpop.f32.mrf.mxu0
      %v1206 = vadd.f32 %v1117, %v1205
      %v1207 = vpop.f32.mrf.mxu0
      %v1208 = vadd.f32 %v1119, %v1207
      %1209 = vmatmul.bf16.gmra.mxu0 %v859
      %v1210 = vpop.f32.mrf.mxu0
      %v1211 = vadd.f32 %v1122, %v1210
      %v1212 = vpop.f32.mrf.mxu0
      %v1213 = vadd.f32 %v1124, %v1212
      %1214 = vmatmul.bf16.gmra.mxu0 %v862
      %v1215 = vpop.f32.mrf.mxu0
      %v1216 = vadd.f32 %v1127, %v1215
      %v1217 = vpop.f32.mrf.mxu0
      %v1218 = vadd.f32 %v1129, %v1217
      %1219 = vdwg.mxu0
      %v1220 = vmax.f32 %v1141, 0.0
      %v1221 = vmax.f32 %v1143, 0.0
      %v1222 = vmax.f32 %v1146, 0.0
      %v1223 = vmax.f32 %v1148, 0.0
      %v1224 = vmax.f32 %v1151, 0.0
      %v1225 = vmax.f32 %v1153, 0.0
      %v1226 = vmax.f32 %v1156, 0.0
      %v1227 = vmax.f32 %v1158, 0.0
      %v1228 = vmax.f32 %v1161, 0.0
      %v1229 = vmax.f32 %v1163, 0.0
      %v1230 = vmax.f32 %v1166, 0.0
      %v1231 = vmax.f32 %v1168, 0.0
      %v1232 = vmax.f32 %v1171, 0.0
      %v1233 = vmax.f32 %v1173, 0.0
      %v1234 = vmax.f32 %v1176, 0.0
      %v1235 = vmax.f32 %v1178, 0.0
      %v1236 = vmax.f32 %v1181, 0.0
      %v1237 = vmax.f32 %v1183, 0.0
      %v1238 = vmax.f32 %v1186, 0.0
      %v1239 = vmax.f32 %v1188, 0.0
      %v1240 = vmax.f32 %v1191, 0.0
      %v1241 = vmax.f32 %v1193, 0.0
      %v1242 = vmax.f32 %v1196, 0.0
      %v1243 = vmax.f32 %v1198, 0.0
      %v1244 = vmax.f32 %v1201, 0.0
      %v1245 = vmax.f32 %v1203, 0.0
      %v1246 = vmax.f32 %v1206, 0.0
      %v1247 = vmax.f32 %v1208, 0.0
      %v1248 = vmax.f32 %v1211, 0.0
      %v1249 = vmax.f32 %v1213, 0.0
      %v1250 = vmax.f32 %v1216, 0.0
      %v1251 = vmax.f32 %v1218, 0.0
      %v1252 = vld [vmem:[%s218] sm:$0xff]
      %v1253 = vld [vmem:[%s218 + $0x8] sm:$0xff]
      %v1254 = vld [vmem:[%s218 + $0x10] sm:$0xff]
      %v1255 = vld [vmem:[%s218 + $0x18] sm:$0xff]
      %v1256 = vld [vmem:[%s218 + $0x20] sm:$0xff]
      %v1257 = vld [vmem:[%s218 + $0x28] sm:$0xff]
      %v1258 = vld [vmem:[%s218 + $0x30] sm:$0xff]
      %v1259 = vld [vmem:[%s218 + $0x38] sm:$0xff]
      %v1260 = vld [vmem:[%s218 + $0x40] sm:$0xff]
      %v1261 = vld [vmem:[%s218 + $0x48] sm:$0xff]
      %v1262 = vld [vmem:[%s218 + $0x50] sm:$0xff]
      %v1263 = vld [vmem:[%s218 + $0x58] sm:$0xff]
      %v1264 = vld [vmem:[%s218 + $0x60] sm:$0xff]
      %v1265 = vld [vmem:[%s218 + $0x68] sm:$0xff]
      %v1266 = vld [vmem:[%s218 + $0x70] sm:$0xff]
      %v1267 = vld [vmem:[%s218 + $0x78] sm:$0xff]
      %v1268 = vld [vmem:[%s218 + $0x80] sm:$0xff]
      %v1269 = vld [vmem:[%s218 + $0x88] sm:$0xff]
      %v1270 = vld [vmem:[%s218 + $0x90] sm:$0xff]
      %v1271 = vld [vmem:[%s218 + $0x98] sm:$0xff]
      %v1272 = vld [vmem:[%s218 + $0xa0] sm:$0xff]
      %v1273 = vld [vmem:[%s218 + $0xa8] sm:$0xff]
      %v1274 = vld [vmem:[%s218 + $0xb0] sm:$0xff]
      %v1275 = vld [vmem:[%s218 + $0xb8] sm:$0xff]
      %v1276 = vld [vmem:[%s218 + $0xc0] sm:$0xff]
      %v1277 = vld [vmem:[%s218 + $0xc8] sm:$0xff]
      %v1278 = vld [vmem:[%s218 + $0xd0] sm:$0xff]
      %v1279 = vld [vmem:[%s218 + $0xd8] sm:$0xff]
      %v1280 = vld [vmem:[%s218 + $0xe0] sm:$0xff]
      %v1281 = vld [vmem:[%s218 + $0xe8] sm:$0xff]
      %v1282 = vld [vmem:[%s218 + $0xf0] sm:$0xff]
      %v1283 = vld [vmem:[%s218 + $0xf8] sm:$0xff]
      %1285 = vset.pattern.permute.xlu0 0
      %1286 = vperm.xlu0 %1285, %v1252
      %v1287 = vpop.permute.xlu0 %1286
      %1290 = vset.pattern.permute.xlu0 0
      %1291 = vperm.xlu0 %1290, %v1253
      %v1292 = vpop.permute.xlu0 %1291
      %1295 = vset.pattern.permute.xlu0 0
      %1296 = vperm.xlu0 %1295, %v1254
      %v1297 = vpop.permute.xlu0 %1296
      %1300 = vset.pattern.permute.xlu0 0
      %1301 = vperm.xlu0 %1300, %v1255
      %v1302 = vpop.permute.xlu0 %1301
      %1305 = vset.pattern.permute.xlu0 0
      %1306 = vperm.xlu0 %1305, %v1256
      %v1307 = vpop.permute.xlu0 %1306
      %1310 = vset.pattern.permute.xlu0 0
      %1311 = vperm.xlu0 %1310, %v1257
      %v1312 = vpop.permute.xlu0 %1311
      %1315 = vset.pattern.permute.xlu0 0
      %1316 = vperm.xlu0 %1315, %v1258
      %v1317 = vpop.permute.xlu0 %1316
      %1320 = vset.pattern.permute.xlu0 0
      %1321 = vperm.xlu0 %1320, %v1259
      %v1322 = vpop.permute.xlu0 %1321
      %1325 = vset.pattern.permute.xlu0 0
      %1326 = vperm.xlu0 %1325, %v1260
      %v1327 = vpop.permute.xlu0 %1326
      %1330 = vset.pattern.permute.xlu0 0
      %1331 = vperm.xlu0 %1330, %v1261
      %v1332 = vpop.permute.xlu0 %1331
      %1335 = vset.pattern.permute.xlu0 0
      %1336 = vperm.xlu0 %1335, %v1262
      %v1337 = vpop.permute.xlu0 %1336
      %1340 = vset.pattern.permute.xlu0 0
      %1341 = vperm.xlu0 %1340, %v1263
      %v1342 = vpop.permute.xlu0 %1341
      %1345 = vset.pattern.permute.xlu0 0
      %1346 = vperm.xlu0 %1345, %v1264
      %v1347 = vpop.permute.xlu0 %1346
      %1350 = vset.pattern.permute.xlu0 0
      %1351 = vperm.xlu0 %1350, %v1265
      %v1352 = vpop.permute.xlu0 %1351
      %1355 = vset.pattern.permute.xlu0 0
      %1356 = vperm.xlu0 %1355, %v1266
      %v1357 = vpop.permute.xlu0 %1356
      %1360 = vset.pattern.permute.xlu0 0
      %1361 = vperm.xlu0 %1360, %v1267
      %v1362 = vpop.permute.xlu0 %1361
      %1365 = vset.pattern.permute.xlu0 0
      %1366 = vperm.xlu0 %1365, %v1268
      %v1367 = vpop.permute.xlu0 %1366
      %1370 = vset.pattern.permute.xlu0 0
      %1371 = vperm.xlu0 %1370, %v1269
      %v1372 = vpop.permute.xlu0 %1371
      %1375 = vset.pattern.permute.xlu0 0
      %1376 = vperm.xlu0 %1375, %v1270
      %v1377 = vpop.permute.xlu0 %1376
      %1380 = vset.pattern.permute.xlu0 0
      %1381 = vperm.xlu0 %1380, %v1271
      %v1382 = vpop.permute.xlu0 %1381
      %1385 = vset.pattern.permute.xlu0 0
      %1386 = vperm.xlu0 %1385, %v1272
      %v1387 = vpop.permute.xlu0 %1386
      %1390 = vset.pattern.permute.xlu0 0
      %1391 = vperm.xlu0 %1390, %v1273
      %v1392 = vpop.permute.xlu0 %1391
      %1395 = vset.pattern.permute.xlu0 0
      %1396 = vperm.xlu0 %1395, %v1274
      %v1397 = vpop.permute.xlu0 %1396
      %1400 = vset.pattern.permute.xlu0 0
      %1401 = vperm.xlu0 %1400, %v1275
      %v1402 = vpop.permute.xlu0 %1401
      %1405 = vset.pattern.permute.xlu0 0
      %1406 = vperm.xlu0 %1405, %v1276
      %v1407 = vpop.permute.xlu0 %1406
      %1410 = vset.pattern.permute.xlu0 0
      %1411 = vperm.xlu0 %1410, %v1277
      %v1412 = vpop.permute.xlu0 %1411
      %1415 = vset.pattern.permute.xlu0 0
      %1416 = vperm.xlu0 %1415, %v1278
      %v1417 = vpop.permute.xlu0 %1416
      %1420 = vset.pattern.permute.xlu0 0
      %1421 = vperm.xlu0 %1420, %v1279
      %v1422 = vpop.permute.xlu0 %1421
      %1425 = vset.pattern.permute.xlu0 0
      %1426 = vperm.xlu0 %1425, %v1280
      %v1427 = vpop.permute.xlu0 %1426
      %1430 = vset.pattern.permute.xlu0 0
      %1431 = vperm.xlu0 %1430, %v1281
      %v1432 = vpop.permute.xlu0 %1431
      %1435 = vset.pattern.permute.xlu0 0
      %1436 = vperm.xlu0 %1435, %v1282
      %v1437 = vpop.permute.xlu0 %1436
      %1440 = vset.pattern.permute.xlu0 0
      %1441 = vperm.xlu0 %1440, %v1283
      %v1442 = vpop.permute.xlu0 %1441
      %v1444 = vmul.f32 %v1220, %v1287
      %v1445 = vmul.f32 %v1221, %v1292
      %v1446 = vmul.f32 %v1222, %v1297
      %v1447 = vmul.f32 %v1223, %v1302
      %v1448 = vmul.f32 %v1224, %v1307
      %v1449 = vmul.f32 %v1225, %v1312
      %v1450 = vmul.f32 %v1226, %v1317
      %v1451 = vmul.f32 %v1227, %v1322
      %v1452 = vmul.f32 %v1228, %v1327
      %v1453 = vmul.f32 %v1229, %v1332
      %v1454 = vmul.f32 %v1230, %v1337
      %v1455 = vmul.f32 %v1231, %v1342
      %v1456 = vmul.f32 %v1232, %v1347
      %v1457 = vmul.f32 %v1233, %v1352
      %v1458 = vmul.f32 %v1234, %v1357
      %v1459 = vmul.f32 %v1235, %v1362
      %v1460 = vmul.f32 %v1236, %v1367
      %v1461 = vmul.f32 %v1237, %v1372
      %v1462 = vmul.f32 %v1238, %v1377
      %v1463 = vmul.f32 %v1239, %v1382
      %v1464 = vmul.f32 %v1240, %v1387
      %v1465 = vmul.f32 %v1241, %v1392
      %v1466 = vmul.f32 %v1242, %v1397
      %v1467 = vmul.f32 %v1243, %v1402
      %v1468 = vmul.f32 %v1244, %v1407
      %v1469 = vmul.f32 %v1245, %v1412
      %v1470 = vmul.f32 %v1246, %v1417
      %v1471 = vmul.f32 %v1247, %v1422
      %v1472 = vmul.f32 %v1248, %v1427
      %v1473 = vmul.f32 %v1249, %v1432
      %v1474 = vmul.f32 %v1250, %v1437
      %v1475 = vmul.f32 %v1251, %v1442
      %v1476 = vpack.c.bf16 %v1444, %v1444
      %v1477 = vpack.c.bf16 %v1445, %v1445
      %v1478 = vpack.c.bf16 %v1446, %v1446
      %v1479 = vpack.c.bf16 %v1447, %v1447
      %v1480 = vpack.c.bf16 %v1448, %v1448
      %v1481 = vpack.c.bf16 %v1449, %v1449
      %v1482 = vpack.c.bf16 %v1450, %v1450
      %v1483 = vpack.c.bf16 %v1451, %v1451
      %v1484 = vpack.c.bf16 %v1452, %v1452
      %v1485 = vpack.c.bf16 %v1453, %v1453
      %v1486 = vpack.c.bf16 %v1454, %v1454
      %v1487 = vpack.c.bf16 %v1455, %v1455
      %v1488 = vpack.c.bf16 %v1456, %v1456
      %v1489 = vpack.c.bf16 %v1457, %v1457
      %v1490 = vpack.c.bf16 %v1458, %v1458
      %v1491 = vpack.c.bf16 %v1459, %v1459
      %v1492 = vpack.c.bf16 %v1460, %v1460
      %v1493 = vpack.c.bf16 %v1461, %v1461
      %v1494 = vpack.c.bf16 %v1462, %v1462
      %v1495 = vpack.c.bf16 %v1463, %v1463
      %v1496 = vpack.c.bf16 %v1464, %v1464
      %v1497 = vpack.c.bf16 %v1465, %v1465
      %v1498 = vpack.c.bf16 %v1466, %v1466
      %v1499 = vpack.c.bf16 %v1467, %v1467
      %v1500 = vpack.c.bf16 %v1468, %v1468
      %v1501 = vpack.c.bf16 %v1469, %v1469
      %v1502 = vpack.c.bf16 %v1470, %v1470
      %v1503 = vpack.c.bf16 %v1471, %v1471
      %v1504 = vpack.c.bf16 %v1472, %v1472
      %v1505 = vpack.c.bf16 %v1473, %v1473
      %v1506 = vpack.c.bf16 %v1474, %v1474
      %v1507 = vpack.c.bf16 %v1475, %v1475
      %1508 = vst [vmem:[%s224] sm:$0xf] %v1476
      %1509 = vst [vmem:[%s224 + $0x4] sm:$0xf] %v1477
      %1510 = vst [vmem:[%s224 + $0x8] sm:$0xf] %v1478
      %1511 = vst [vmem:[%s224 + $0xc] sm:$0xf] %v1479
      %1512 = vst [vmem:[%s224 + $0x10] sm:$0xf] %v1480
      %1513 = vst [vmem:[%s224 + $0x14] sm:$0xf] %v1481
      %1514 = vst [vmem:[%s224 + $0x18] sm:$0xf] %v1482
      %1515 = vst [vmem:[%s224 + $0x1c] sm:$0xf] %v1483
      %1516 = vst [vmem:[%s224 + $0x20] sm:$0xf] %v1484
      %1517 = vst [vmem:[%s224 + $0x24] sm:$0xf] %v1485
      %1518 = vst [vmem:[%s224 + $0x28] sm:$0xf] %v1486
      %1519 = vst [vmem:[%s224 + $0x2c] sm:$0xf] %v1487
      %1520 = vst [vmem:[%s224 + $0x30] sm:$0xf] %v1488
      %1521 = vst [vmem:[%s224 + $0x34] sm:$0xf] %v1489
      %1522 = vst [vmem:[%s224 + $0x38] sm:$0xf] %v1490
      %1523 = vst [vmem:[%s224 + $0x3c] sm:$0xf] %v1491
      %1524 = vst [vmem:[%s224 + $0x40] sm:$0xf] %v1492
      %1525 = vst [vmem:[%s224 + $0x44] sm:$0xf] %v1493
      %1526 = vst [vmem:[%s224 + $0x48] sm:$0xf] %v1494
      %1527 = vst [vmem:[%s224 + $0x4c] sm:$0xf] %v1495
      %1528 = vst [vmem:[%s224 + $0x50] sm:$0xf] %v1496
      %1529 = vst [vmem:[%s224 + $0x54] sm:$0xf] %v1497
      %1530 = vst [vmem:[%s224 + $0x58] sm:$0xf] %v1498
      %1531 = vst [vmem:[%s224 + $0x5c] sm:$0xf] %v1499
      %1532 = vst [vmem:[%s224 + $0x60] sm:$0xf] %v1500
      %1533 = vst [vmem:[%s224 + $0x64] sm:$0xf] %v1501
      %1534 = vst [vmem:[%s224 + $0x68] sm:$0xf] %v1502
      %1535 = vst [vmem:[%s224 + $0x6c] sm:$0xf] %v1503
      %1536 = vst [vmem:[%s224 + $0x70] sm:$0xf] %v1504
      %1537 = vst [vmem:[%s224 + $0x74] sm:$0xf] %v1505
      %1538 = vst [vmem:[%s224 + $0x78] sm:$0xf] %v1506
      %1539 = vst [vmem:[%s224 + $0x7c] sm:$0xf] %v1507
      %s1540 = smul.u32 32, %s15
      %p1541 = scmp.lt.s32.totalorder %s1540, 63
      %s1542 = scalar_select %p1541, %s1540, 63
      %s1543 = smul.addr %s1542, 4
      %s1544 = scalar_lea.vmem %s4, %s1543
      // Predicated region
      $region37: #{_lambda_.4} parent=35 // pred_check
        %p1545 = pneg %p127
      $region38: #{_lambda_.4} parent=35 // pred_check_branch
        %1547 = sbr.rel (%p1545) target = $region40
      $region39: #{_lambda_.4} parent=35 // pred_region
        %s1548 = smul.u32 32, %s15
      $region40: #{_lambda_.4} parent=35 // pred_fallthru
        _
    $region36: #{_lambda_.4} parent=5 // pred_fallthru
      _
    %p1549 = scmp.le.s32.totalorder 2, %s10
    // Predicated region
    $region41: #{_lambda_.4} parent=5 // pred_check
      %p1550 = pneg %p1549
    $region42: #{_lambda_.4} parent=5 // pred_check_branch
      %1552 = sbr.rel (%p1550) target = $region44
    $region43: #{_lambda_.4} parent=5 // pred_region
      %s1553 = ssub.s32 %s10, 2
      // Predicated region
      $region45: #{_lambda_.4} parent=43 // pred_check
        %p1554 = pneg %p133
      $region46: #{_lambda_.4} parent=43 // pred_check_branch
        %1556 = sbr.rel (%p1554) target = $region48
      $region47: #{_lambda_.4} parent=43 // pred_region
        %s1557 = smul.u32 32, %s16
        %p1558 = scmp.lt.s32.totalorder %s1557, 63
        %s1559 = scalar_select %p1558, %s1557, 63
        %s1560 = smul.addr %s1559, 4
        %s1561 = scalar_lea.vmem %s4, %s1560
      $region48: #{_lambda_.4} parent=43 // pred_fallthru
        _
    $region44: #{_lambda_.4} parent=5 // pred_fallthru
      _
  $region6: #{_lambda_.4} parent=0 // loop_footer
    %s14 = sadd.s32 1, %s10
  $region7: #{_lambda_.4} parent=0 // loop_footer_branch
    %9 = sbr.rel target = $region3
  $region8: #{_lambda_.4} parent=0 // loop_exit
    _

// kernel: _lambda_.5
$region0: #{_lambda_.5}
  #allocation0 [shape = 'u32[]', space=smem, size = 0x4, offset = 0x4, fixed_abs, tag = 'smem constant byte address 0x4 - core index']
  #allocation1 [shape = 'u32[72,128]{1,0:T(1,128)}', space=vmem, size = 0x9000, scoped, tag = 'internal scratch']
  %s0 = inlined_call_operand.vmem [shape: bf16[64,864], index: 0, kind: input, shape index: {}]
  %s1 = inlined_call_operand.vmem [shape: bf16[864,128], index: 1, kind: input, shape index: {}]
  %s2 = inlined_call_operand.vmem [shape: f32[1,128], index: 2, kind: input, shape index: {}]
  %s3 = inlined_call_operand.vmem [shape: bf16[128,128], index: 3, kind: input, shape index: {}]
  %s4 = inlined_call_operand.vmem [shape: f32[1,128], index: 4, kind: input, shape index: {}]
  %s5 = inlined_call_operand.vmem [shape: f32[64,1], index: 5, kind: input, shape index: {}]
  %s6 = inlined_call_operand.vmem [shape: bf16[64,128], index: 6, kind: output, shape index: {}]
  %s7 = sld [smem:[#allocation0]]
  $region34: #{_lambda_.5} parent=0
    _
  %s9 = ssub.s32 1, %s7
  %s10 = scalar_select 0, %s9, %s7
  // Predicated region
  $region2: #{_lambda_.5} parent=0 // pred_check
    _
  $region3: #{_lambda_.5} parent=0 // pred_check_branch
    %12 = sbr.rel (0) target = $region5
  $region4: #{_lambda_.5} parent=0 // pred_region
    _
  $region5: #{_lambda_.5} parent=0 // pred_fallthru
    _
  // Predicated region
  $region6: #{_lambda_.5} parent=0 // pred_check
    _
  $region7: #{_lambda_.5} parent=0 // pred_check_branch
    %14 = sbr.rel (0) target = $region9
  $region8: #{_lambda_.5} parent=0 // pred_region
    _
  $region9: #{_lambda_.5} parent=0 // pred_fallthru
    _
  // Predicated region
  $region10: #{_lambda_.5} parent=0 // pred_check
    _
  $region11: #{_lambda_.5} parent=0 // pred_check_branch
    %16 = sbr.rel (0) target = $region13
  $region12: #{_lambda_.5} parent=0 // pred_region
    _
  $region13: #{_lambda_.5} parent=0 // pred_fallthru
    _
  // Predicated region
  $region14: #{_lambda_.5} parent=0 // pred_check
    _
  $region15: #{_lambda_.5} parent=0 // pred_check_branch
    %18 = sbr.rel (0) target = $region17
  $region16: #{_lambda_.5} parent=0 // pred_region
    _
  $region17: #{_lambda_.5} parent=0 // pred_fallthru
    _
  // Predicated region
  $region18: #{_lambda_.5} parent=0 // pred_check
    _
  $region19: #{_lambda_.5} parent=0 // pred_check_branch
    %20 = sbr.rel (0) target = $region21
  $region20: #{_lambda_.5} parent=0 // pred_region
    _
  $region21: #{_lambda_.5} parent=0 // pred_fallthru
    _
  // Predicated region
  $region22: #{_lambda_.5} parent=0 // pred_check
    _
  $region23: #{_lambda_.5} parent=0 // pred_check_branch
    %22 = sbr.rel (0) target = $region25
  $region24: #{_lambda_.5} parent=0 // pred_region
    _
  $region25: #{_lambda_.5} parent=0 // pred_fallthru
    _
  %v24 = vld [vmem:[%s5] sm:$0xff]
  %v25 = vld [vmem:[%s5 + $0x8] sm:$0xff]
  %v26 = vld [vmem:[%s5 + $0x10] sm:$0xff]
  %v27 = vld [vmem:[%s5 + $0x18] sm:$0xff]
  %v28 = vld [vmem:[%s5 + $0x20] sm:$0xff]
  %v29 = vld [vmem:[%s5 + $0x28] sm:$0xff]
  %v30 = vld [vmem:[%s5 + $0x30] sm:$0xff]
  %v31 = vld [vmem:[%s5 + $0x38] sm:$0xff]
  %v32 = vld [vmem:[%s0] sm:$0xff]
  %v33 = vld [vmem:[%s0 + $0x8] sm:$0xff]
  %v34 = vld [vmem:[%s0 + $0x10] sm:$0xff]
  %v35 = vld [vmem:[%s0 + $0x18] sm:$0xf]
  %v36 = vld [vmem:[%s0 + $0x1c] sm:$0xff]
  %v37 = vld [vmem:[%s0 + $0x24] sm:$0xff]
  %v38 = vld [vmem:[%s0 + $0x2c] sm:$0xff]
  %v39 = vld [vmem:[%s0 + $0x34] sm:$0xf]
  %v40 = vld [vmem:[%s0 + $0x38] sm:$0xff]
  %v41 = vld [vmem:[%s0 + $0x40] sm:$0xff]
  %v42 = vld [vmem:[%s0 + $0x48] sm:$0xff]
  %v43 = vld [vmem:[%s0 + $0x50] sm:$0xf]
  %v44 = vld [vmem:[%s0 + $0x54] sm:$0xff]
  %v45 = vld [vmem:[%s0 + $0x5c] sm:$0xff]
  %v46 = vld [vmem:[%s0 + $0x64] sm:$0xff]
  %v47 = vld [vmem:[%s0 + $0x6c] sm:$0xf]
  %v48 = vld [vmem:[%s0 + $0x70] sm:$0xff]
  %v49 = vld [vmem:[%s0 + $0x78] sm:$0xff]
  %v50 = vld [vmem:[%s0 + $0x80] sm:$0xff]
  %v51 = vld [vmem:[%s0 + $0x88] sm:$0xf]
  %v52 = vld [vmem:[%s0 + $0x8c] sm:$0xff]
  %v53 = vld [vmem:[%s0 + $0x94] sm:$0xff]
  %v54 = vld [vmem:[%s0 + $0x9c] sm:$0xff]
  %v55 = vld [vmem:[%s0 + $0xa4] sm:$0xf]
  %v56 = vld [vmem:[%s0 + $0xa8] sm:$0xff]
  %v57 = vld [vmem:[%s0 + $0xb0] sm:$0xff]
  %v58 = vld [vmem:[%s0 + $0xb8] sm:$0xff]
  %v59 = vld [vmem:[%s0 + $0xc0] sm:$0xf]
  %v60 = vld [vmem:[%s0 + $0xc4] sm:$0xff]
  %v61 = vld [vmem:[%s0 + $0xcc] sm:$0xff]
  %v62 = vld [vmem:[%s0 + $0xd4] sm:$0xff]
  %v63 = vld [vmem:[%s0 + $0xdc] sm:$0xf]
  %v64 = vld [vmem:[%s1] sm:$0xf]
  %v65 = vld [vmem:[%s1 + $0x4] sm:$0xf]
  %v66 = vld [vmem:[%s1 + $0x8] sm:$0xf]
  %v67 = vld [vmem:[%s1 + $0xc] sm:$0xf]
  %v68 = vld [vmem:[%s1 + $0x10] sm:$0xf]
  %v69 = vld [vmem:[%s1 + $0x14] sm:$0xf]
  %v70 = vld [vmem:[%s1 + $0x18] sm:$0xf]
  %v71 = vld [vmem:[%s1 + $0x1c] sm:$0xf]
  %v72 = vld [vmem:[%s1 + $0x20] sm:$0xf]
  %v73 = vld [vmem:[%s1 + $0x24] sm:$0xf]
  %v74 = vld [vmem:[%s1 + $0x28] sm:$0xf]
  %v75 = vld [vmem:[%s1 + $0x2c] sm:$0xf]
  %v76 = vld [vmem:[%s1 + $0x30] sm:$0xf]
  %v77 = vld [vmem:[%s1 + $0x34] sm:$0xf]
  %v78 = vld [vmem:[%s1 + $0x38] sm:$0xf]
  %v79 = vld [vmem:[%s1 + $0x3c] sm:$0xf]
  %v80 = vld [vmem:[%s1 + $0x40] sm:$0xf]
  %v81 = vld [vmem:[%s1 + $0x44] sm:$0xf]
  %v82 = vld [vmem:[%s1 + $0x48] sm:$0xf]
  %v83 = vld [vmem:[%s1 + $0x4c] sm:$0xf]
  %v84 = vld [vmem:[%s1 + $0x50] sm:$0xf]
  %v85 = vld [vmem:[%s1 + $0x54] sm:$0xf]
  %v86 = vld [vmem:[%s1 + $0x58] sm:$0xf]
  %v87 = vld [vmem:[%s1 + $0x5c] sm:$0xf]
  %v88 = vld [vmem:[%s1 + $0x60] sm:$0xf]
  %v89 = vld [vmem:[%s1 + $0x64] sm:$0xf]
  %v90 = vld [vmem:[%s1 + $0x68] sm:$0xf]
  %v91 = vld [vmem:[%s1 + $0x6c] sm:$0xf]
  %v92 = vld [vmem:[%s1 + $0x70] sm:$0xf]
  %v93 = vld [vmem:[%s1 + $0x74] sm:$0xf]
  %v94 = vld [vmem:[%s1 + $0x78] sm:$0xf]
  %v95 = vld [vmem:[%s1 + $0x7c] sm:$0xf]
  %v96 = vld [vmem:[%s1 + $0x80] sm:$0xf]
  %v97 = vld [vmem:[%s1 + $0x84] sm:$0xf]
  %v98 = vld [vmem:[%s1 + $0x88] sm:$0xf]
  %v99 = vld [vmem:[%s1 + $0x8c] sm:$0xf]
  %v100 = vld [vmem:[%s1 + $0x90] sm:$0xf]
  %v101 = vld [vmem:[%s1 + $0x94] sm:$0xf]
  %v102 = vld [vmem:[%s1 + $0x98] sm:$0xf]
  %v103 = vld [vmem:[%s1 + $0x9c] sm:$0xf]
  %v104 = vld [vmem:[%s1 + $0xa0] sm:$0xf]
  %v105 = vld [vmem:[%s1 + $0xa4] sm:$0xf]
  %v106 = vld [vmem:[%s1 + $0xa8] sm:$0xf]
  %v107 = vld [vmem:[%s1 + $0xac] sm:$0xf]
  %v108 = vld [vmem:[%s1 + $0xb0] sm:$0xf]
  %v109 = vld [vmem:[%s1 + $0xb4] sm:$0xf]
  %v110 = vld [vmem:[%s1 + $0xb8] sm:$0xf]
  %v111 = vld [vmem:[%s1 + $0xbc] sm:$0xf]
  %v112 = vld [vmem:[%s1 + $0xc0] sm:$0xf]
  %v113 = vld [vmem:[%s1 + $0xc4] sm:$0xf]
  %v114 = vld [vmem:[%s1 + $0xc8] sm:$0xf]
  %v115 = vld [vmem:[%s1 + $0xcc] sm:$0xf]
  %v116 = vld [vmem:[%s1 + $0xd0] sm:$0xf]
  %v117 = vld [vmem:[%s1 + $0xd4] sm:$0xf]
  %v118 = vld [vmem:[%s1 + $0xd8] sm:$0xf]
  %v119 = vld [vmem:[%s1 + $0xdc] sm:$0xf]
  %v120 = vld [vmem:[%s1 + $0xe0] sm:$0xf]
  %v121 = vld [vmem:[%s1 + $0xe4] sm:$0xf]
  %v122 = vld [vmem:[%s1 + $0xe8] sm:$0xf]
  %v123 = vld [vmem:[%s1 + $0xec] sm:$0xf]
  %v124 = vld [vmem:[%s1 + $0xf0] sm:$0xf]
  %v125 = vld [vmem:[%s1 + $0xf4] sm:$0xf]
  %v126 = vld [vmem:[%s1 + $0xf8] sm:$0xf]
  %v127 = vld [vmem:[%s1 + $0xfc] sm:$0xf]
  %v128 = vld [vmem:[%s1 + $0x100] sm:$0xf]
  %v129 = vld [vmem:[%s1 + $0x104] sm:$0xf]
  %v130 = vld [vmem:[%s1 + $0x108] sm:$0xf]
  %v131 = vld [vmem:[%s1 + $0x10c] sm:$0xf]
  %v132 = vld [vmem:[%s1 + $0x110] sm:$0xf]
  %v133 = vld [vmem:[%s1 + $0x114] sm:$0xf]
  %v134 = vld [vmem:[%s1 + $0x118] sm:$0xf]
  %v135 = vld [vmem:[%s1 + $0x11c] sm:$0xf]
  %v136 = vld [vmem:[%s1 + $0x120] sm:$0xf]
  %v137 = vld [vmem:[%s1 + $0x124] sm:$0xf]
  %v138 = vld [vmem:[%s1 + $0x128] sm:$0xf]
  %v139 = vld [vmem:[%s1 + $0x12c] sm:$0xf]
  %v140 = vld [vmem:[%s1 + $0x130] sm:$0xf]
  %v141 = vld [vmem:[%s1 + $0x134] sm:$0xf]
  %v142 = vld [vmem:[%s1 + $0x138] sm:$0xf]
  %v143 = vld [vmem:[%s1 + $0x13c] sm:$0xf]
  %v144 = vld [vmem:[%s1 + $0x140] sm:$0xf]
  %v145 = vld [vmem:[%s1 + $0x144] sm:$0xf]
  %v146 = vld [vmem:[%s1 + $0x148] sm:$0xf]
  %v147 = vld [vmem:[%s1 + $0x14c] sm:$0xf]
  %v148 = vld [vmem:[%s1 + $0x150] sm:$0xf]
  %v149 = vld [vmem:[%s1 + $0x154] sm:$0xf]
  %v150 = vld [vmem:[%s1 + $0x158] sm:$0xf]
  %v151 = vld [vmem:[%s1 + $0x15c] sm:$0xf]
  %v152 = vld [vmem:[%s1 + $0x160] sm:$0xf]
  %v153 = vld [vmem:[%s1 + $0x164] sm:$0xf]
  %v154 = vld [vmem:[%s1 + $0x168] sm:$0xf]
  %v155 = vld [vmem:[%s1 + $0x16c] sm:$0xf]
  %v156 = vld [vmem:[%s1 + $0x170] sm:$0xf]
  %v157 = vld [vmem:[%s1 + $0x174] sm:$0xf]
  %v158 = vld [vmem:[%s1 + $0x178] sm:$0xf]
  %v159 = vld [vmem:[%s1 + $0x17c] sm:$0xf]
  %v160 = vld [vmem:[%s1 + $0x180] sm:$0xf]
  %v161 = vld [vmem:[%s1 + $0x184] sm:$0xf]
  %v162 = vld [vmem:[%s1 + $0x188] sm:$0xf]
  %v163 = vld [vmem:[%s1 + $0x18c] sm:$0xf]
  %v164 = vld [vmem:[%s1 + $0x190] sm:$0xf]
  %v165 = vld [vmem:[%s1 + $0x194] sm:$0xf]
  %v166 = vld [vmem:[%s1 + $0x198] sm:$0xf]
  %v167 = vld [vmem:[%s1 + $0x19c] sm:$0xf]
  %v168 = vld [vmem:[%s1 + $0x1a0] sm:$0xf]
  %v169 = vld [vmem:[%s1 + $0x1a4] sm:$0xf]
  %v170 = vld [vmem:[%s1 + $0x1a8] sm:$0xf]
  %v171 = vld [vmem:[%s1 + $0x1ac] sm:$0xf]
  %v172 = vld [vmem:[%s2] sm:$0x1]
  %v174 = vperm.slane %v172, 0
  %v208 = vunpack.c.l.b16 %v32
  %v209 = vunpack.c.h.b16 %v32
  %v210 = vunpack.c.l.b16 %v33
  %v211 = vunpack.c.h.b16 %v33
  %v212 = vunpack.c.l.b16 %v34
  %v213 = vunpack.c.h.b16 %v34
  %v214 = vunpack.c.l.b16 %v35
  %v215 = vunpack.c.l.b16 %v36
  %v216 = vunpack.c.h.b16 %v36
  %v217 = vunpack.c.l.b16 %v37
  %v218 = vunpack.c.h.b16 %v37
  %v219 = vunpack.c.l.b16 %v38
  %v220 = vunpack.c.h.b16 %v38
  %v221 = vunpack.c.l.b16 %v39
  %v222 = vunpack.c.l.b16 %v40
  %v223 = vunpack.c.h.b16 %v40
  %v224 = vunpack.c.l.b16 %v41
  %v225 = vunpack.c.h.b16 %v41
  %v226 = vunpack.c.l.b16 %v42
  %v227 = vunpack.c.h.b16 %v42
  %v228 = vunpack.c.l.b16 %v43
  %v229 = vunpack.c.l.b16 %v44
  %v230 = vunpack.c.h.b16 %v44
  %v231 = vunpack.c.l.b16 %v45
  %v232 = vunpack.c.h.b16 %v45
  %v233 = vunpack.c.l.b16 %v46
  %v234 = vunpack.c.h.b16 %v46
  %v235 = vunpack.c.l.b16 %v47
  %v236 = vunpack.c.l.b16 %v48
  %v237 = vunpack.c.h.b16 %v48
  %v238 = vunpack.c.l.b16 %v49
  %v239 = vunpack.c.h.b16 %v49
  %v240 = vunpack.c.l.b16 %v50
  %v241 = vunpack.c.h.b16 %v50
  %v242 = vunpack.c.l.b16 %v51
  %v243 = vunpack.c.l.b16 %v52
  %v244 = vunpack.c.h.b16 %v52
  %v245 = vunpack.c.l.b16 %v53
  %v246 = vunpack.c.h.b16 %v53
  %v247 = vunpack.c.l.b16 %v54
  %v248 = vunpack.c.h.b16 %v54
  %v249 = vunpack.c.l.b16 %v55
  %v250 = vunpack.c.l.b16 %v56
  %v251 = vunpack.c.h.b16 %v56
  %v252 = vunpack.c.l.b16 %v57
  %v253 = vunpack.c.h.b16 %v57
  %v254 = vunpack.c.l.b16 %v58
  %v255 = vunpack.c.h.b16 %v58
  %v256 = vunpack.c.l.b16 %v59
  %v257 = vunpack.c.l.b16 %v60
  %v258 = vunpack.c.h.b16 %v60
  %v259 = vunpack.c.l.b16 %v61
  %v260 = vunpack.c.h.b16 %v61
  %v261 = vunpack.c.l.b16 %v62
  %v262 = vunpack.c.h.b16 %v62
  %v263 = vunpack.c.l.b16 %v63
  %v264 = vpack.c.b16 %v215, %v208
  %v265 = vpack.c.b16 %v216, %v209
  %v266 = vpack.c.b16 %v217, %v210
  %v267 = vpack.c.b16 %v218, %v211
  %v268 = vpack.c.b16 %v219, %v212
  %v269 = vpack.c.b16 %v220, %v213
  %v270 = vpack.c.b16 %v221, %v214
  %v271 = vpack.c.b16 %v229, %v222
  %v272 = vpack.c.b16 %v230, %v223
  %v273 = vpack.c.b16 %v231, %v224
  %v274 = vpack.c.b16 %v232, %v225
  %v275 = vpack.c.b16 %v233, %v226
  %v276 = vpack.c.b16 %v234, %v227
  %v277 = vpack.c.b16 %v235, %v228
  %v278 = vpack.c.b16 %v243, %v236
  %v279 = vpack.c.b16 %v244, %v237
  %v280 = vpack.c.b16 %v245, %v238
  %v281 = vpack.c.b16 %v246, %v239
  %v282 = vpack.c.b16 %v247, %v240
  %v283 = vpack.c.b16 %v248, %v241
  %v284 = vpack.c.b16 %v249, %v242
  %v285 = vpack.c.b16 %v257, %v250
  %v286 = vpack.c.b16 %v258, %v251
  %v287 = vpack.c.b16 %v259, %v252
  %v288 = vpack.c.b16 %v260, %v253
  %v289 = vpack.c.b16 %v261, %v254
  %v290 = vpack.c.b16 %v262, %v255
  %v291 = vpack.c.b16 %v263, %v256
  %v424 = vunpack.c.l.b16 %v64
  %v425 = vunpack.c.l.b16 %v65
  %v426 = vunpack.c.l.b16 %v66
  %v427 = vunpack.c.l.b16 %v67
  %v428 = vunpack.c.l.b16 %v68
  %v429 = vunpack.c.l.b16 %v69
  %v430 = vunpack.c.l.b16 %v70
  %v431 = vunpack.c.l.b16 %v71
  %v432 = vunpack.c.l.b16 %v72
  %v433 = vunpack.c.l.b16 %v73
  %v434 = vunpack.c.l.b16 %v74
  %v435 = vunpack.c.l.b16 %v75
  %v436 = vunpack.c.l.b16 %v76
  %v437 = vunpack.c.l.b16 %v77
  %v438 = vunpack.c.l.b16 %v78
  %v439 = vunpack.c.l.b16 %v79
  %v440 = vunpack.c.l.b16 %v80
  %v441 = vunpack.c.l.b16 %v81
  %v442 = vunpack.c.l.b16 %v82
  %v443 = vunpack.c.l.b16 %v83
  %v444 = vunpack.c.l.b16 %v84
  %v445 = vunpack.c.l.b16 %v85
  %v446 = vunpack.c.l.b16 %v86
  %v447 = vunpack.c.l.b16 %v87
  %v448 = vunpack.c.l.b16 %v88
  %v449 = vunpack.c.l.b16 %v89
  %v450 = vunpack.c.l.b16 %v90
  %v451 = vunpack.c.l.b16 %v91
  %v452 = vunpack.c.l.b16 %v92
  %v453 = vunpack.c.l.b16 %v93
  %v454 = vunpack.c.l.b16 %v94
  %v455 = vunpack.c.l.b16 %v95
  %v456 = vunpack.c.l.b16 %v96
  %v457 = vunpack.c.l.b16 %v97
  %v458 = vunpack.c.l.b16 %v98
  %v459 = vunpack.c.l.b16 %v99
  %v460 = vunpack.c.l.b16 %v100
  %v461 = vunpack.c.l.b16 %v101
  %v462 = vunpack.c.l.b16 %v102
  %v463 = vunpack.c.l.b16 %v103
  %v464 = vunpack.c.l.b16 %v104
  %v465 = vunpack.c.l.b16 %v105
  %v466 = vunpack.c.l.b16 %v106
  %v467 = vunpack.c.l.b16 %v107
  %v468 = vunpack.c.l.b16 %v108
  %v469 = vunpack.c.l.b16 %v109
  %v470 = vunpack.c.l.b16 %v110
  %v471 = vunpack.c.l.b16 %v111
  %v472 = vunpack.c.l.b16 %v112
  %v473 = vunpack.c.l.b16 %v113
  %v474 = vunpack.c.l.b16 %v114
  %v475 = vunpack.c.l.b16 %v115
  %v476 = vunpack.c.l.b16 %v116
  %v477 = vunpack.c.l.b16 %v117
  %v478 = vunpack.c.l.b16 %v118
  %v479 = vunpack.c.l.b16 %v119
  %v480 = vunpack.c.l.b16 %v120
  %v481 = vunpack.c.l.b16 %v121
  %v482 = vunpack.c.l.b16 %v122
  %v483 = vunpack.c.l.b16 %v123
  %v484 = vunpack.c.l.b16 %v124
  %v485 = vunpack.c.l.b16 %v125
  %v486 = vunpack.c.l.b16 %v126
  %v487 = vunpack.c.l.b16 %v127
  %v488 = vunpack.c.l.b16 %v128
  %v489 = vunpack.c.l.b16 %v129
  %v490 = vunpack.c.l.b16 %v130
  %v491 = vunpack.c.l.b16 %v131
  %v492 = vunpack.c.l.b16 %v132
  %v493 = vunpack.c.l.b16 %v133
  %v494 = vunpack.c.l.b16 %v134
  %v495 = vunpack.c.l.b16 %v135
  %v496 = vunpack.c.l.b16 %v136
  %v497 = vunpack.c.l.b16 %v137
  %v498 = vunpack.c.l.b16 %v138
  %v499 = vunpack.c.l.b16 %v139
  %v500 = vunpack.c.l.b16 %v140
  %v501 = vunpack.c.l.b16 %v141
  %v502 = vunpack.c.l.b16 %v142
  %v503 = vunpack.c.l.b16 %v143
  %v504 = vunpack.c.l.b16 %v144
  %v505 = vunpack.c.l.b16 %v145
  %v506 = vunpack.c.l.b16 %v146
  %v507 = vunpack.c.l.b16 %v147
  %v508 = vunpack.c.l.b16 %v148
  %v509 = vunpack.c.l.b16 %v149
  %v510 = vunpack.c.l.b16 %v150
  %v511 = vunpack.c.l.b16 %v151
  %v512 = vunpack.c.l.b16 %v152
  %v513 = vunpack.c.l.b16 %v153
  %v514 = vunpack.c.l.b16 %v154
  %v515 = vunpack.c.l.b16 %v155
  %v516 = vunpack.c.l.b16 %v156
  %v517 = vunpack.c.l.b16 %v157
  %v518 = vunpack.c.l.b16 %v158
  %v519 = vunpack.c.l.b16 %v159
  %v520 = vunpack.c.l.b16 %v160
  %v521 = vunpack.c.l.b16 %v161
  %v522 = vunpack.c.l.b16 %v162
  %v523 = vunpack.c.l.b16 %v163
  %v524 = vunpack.c.l.b16 %v164
  %v525 = vunpack.c.l.b16 %v165
  %v526 = vunpack.c.l.b16 %v166
  %v527 = vunpack.c.l.b16 %v167
  %v528 = vunpack.c.l.b16 %v168
  %v529 = vunpack.c.l.b16 %v169
  %v530 = vunpack.c.l.b16 %v170
  %v531 = vunpack.c.l.b16 %v171
  %v532 = vpack.c.b16 %v425, %v424
  %v533 = vpack.c.b16 %v427, %v426
  %v534 = vpack.c.b16 %v429, %v428
  %v535 = vpack.c.b16 %v431, %v430
  %v536 = vpack.c.b16 %v433, %v432
  %v537 = vpack.c.b16 %v435, %v434
  %v538 = vpack.c.b16 %v437, %v436
  %v539 = vpack.c.b16 %v439, %v438
  %v540 = vpack.c.b16 %v441, %v440
  %v541 = vpack.c.b16 %v443, %v442
  %v542 = vpack.c.b16 %v445, %v444
  %v543 = vpack.c.b16 %v447, %v446
  %v544 = vpack.c.b16 %v449, %v448
  %v545 = vpack.c.b16 %v451, %v450
  %v546 = vpack.c.b16 %v453, %v452
  %v547 = vpack.c.b16 %v455, %v454
  %v548 = vpack.c.b16 %v457, %v456
  %v549 = vpack.c.b16 %v459, %v458
  %v550 = vpack.c.b16 %v461, %v460
  %v551 = vpack.c.b16 %v463, %v462
  %v552 = vpack.c.b16 %v465, %v464
  %v553 = vpack.c.b16 %v467, %v466
  %v554 = vpack.c.b16 %v469, %v468
  %v555 = vpack.c.b16 %v471, %v470
  %v556 = vpack.c.b16 %v473, %v472
  %v557 = vpack.c.b16 %v475, %v474
  %v558 = vpack.c.b16 %v477, %v476
  %v559 = vpack.c.b16 %v479, %v478
  %v560 = vpack.c.b16 %v481, %v480
  %v561 = vpack.c.b16 %v483, %v482
  %v562 = vpack.c.b16 %v485, %v484
  %v563 = vpack.c.b16 %v487, %v486
  %v564 = vpack.c.b16 %v489, %v488
  %v565 = vpack.c.b16 %v491, %v490
  %v566 = vpack.c.b16 %v493, %v492
  %v567 = vpack.c.b16 %v495, %v494
  %v568 = vpack.c.b16 %v497, %v496
  %v569 = vpack.c.b16 %v499, %v498
  %v570 = vpack.c.b16 %v501, %v500
  %v571 = vpack.c.b16 %v503, %v502
  %v572 = vpack.c.b16 %v505, %v504
  %v573 = vpack.c.b16 %v507, %v506
  %v574 = vpack.c.b16 %v509, %v508
  %v575 = vpack.c.b16 %v511, %v510
  %v576 = vpack.c.b16 %v513, %v512
  %v577 = vpack.c.b16 %v515, %v514
  %v578 = vpack.c.b16 %v517, %v516
  %v579 = vpack.c.b16 %v519, %v518
  %v580 = vpack.c.b16 %v521, %v520
  %v581 = vpack.c.b16 %v523, %v522
  %v582 = vpack.c.b16 %v525, %v524
  %v583 = vpack.c.b16 %v527, %v526
  %v584 = vpack.c.b16 %v529, %v528
  %v585 = vpack.c.b16 %v531, %v530
  %vm640 = vcmask 785408
  %v642 = vsel %vm640, %v270, 0
  %v645 = vsel %vm640, %v277, 0
  %v648 = vsel %vm640, %v284, 0
  %v651 = vsel %vm640, %v291, 0
  %653 = vmatpush.bf16.msra.mxu0 %v539
  %654 = vmatpush.bf16.msra.mxu0 %v538
  %655 = vmatpush.bf16.msra.mxu0 %v537
  %656 = vmatpush.bf16.msra.mxu0 %v536
  %657 = vmatpush.bf16.msra.mxu0 %v535
  %658 = vmatpush.bf16.msra.mxu0 %v534
  %659 = vmatpush.bf16.msra.mxu0 %v533
  %660 = vmatpush.bf16.msra.mxu0 %v532
  %661 = vmatmul.bf16.gmra.mxu0 %v264
  %v662 = vpop.f32.mrf.mxu0
  %v663 = vadd.f32 %v174, %v662
  %v664 = vpop.f32.mrf.mxu0
  %v665 = vadd.f32 %v174, %v664
  %666 = vmatmul.bf16.gmra.mxu0 %v271
  %v667 = vpop.f32.mrf.mxu0
  %v668 = vadd.f32 %v174, %v667
  %v669 = vpop.f32.mrf.mxu0
  %v670 = vadd.f32 %v174, %v669
  %671 = vmatmul.bf16.gmra.mxu0 %v278
  %v672 = vpop.f32.mrf.mxu0
  %v673 = vadd.f32 %v174, %v672
  %v674 = vpop.f32.mrf.mxu0
  %v675 = vadd.f32 %v174, %v674
  %676 = vmatmul.bf16.gmra.mxu0 %v285
  %v677 = vpop.f32.mrf.mxu0
  %v678 = vadd.f32 %v174, %v677
  %v679 = vpop.f32.mrf.mxu0
  %v680 = vadd.f32 %v174, %v679
  %681 = vdwg.mxu0
  %682 = vmatpush.bf16.msra.mxu0 %v547
  %683 = vmatpush.bf16.msra.mxu0 %v546
  %684 = vmatpush.bf16.msra.mxu0 %v545
  %685 = vmatpush.bf16.msra.mxu0 %v544
  %686 = vmatpush.bf16.msra.mxu0 %v543
  %687 = vmatpush.bf16.msra.mxu0 %v542
  %688 = vmatpush.bf16.msra.mxu0 %v541
  %689 = vmatpush.bf16.msra.mxu0 %v540
  %690 = vmatmul.bf16.gmra.mxu0 %v265
  %v691 = vpop.f32.mrf.mxu0
  %v692 = vadd.f32 %v663, %v691
  %v693 = vpop.f32.mrf.mxu0
  %v694 = vadd.f32 %v665, %v693
  %695 = vmatmul.bf16.gmra.mxu0 %v272
  %v696 = vpop.f32.mrf.mxu0
  %v697 = vadd.f32 %v668, %v696
  %v698 = vpop.f32.mrf.mxu0
  %v699 = vadd.f32 %v670, %v698
  %700 = vmatmul.bf16.gmra.mxu0 %v279
  %v701 = vpop.f32.mrf.mxu0
  %v702 = vadd.f32 %v673, %v701
  %v703 = vpop.f32.mrf.mxu0
  %v704 = vadd.f32 %v675, %v703
  %705 = vmatmul.bf16.gmra.mxu0 %v286
  %v706 = vpop.f32.mrf.mxu0
  %v707 = vadd.f32 %v678, %v706
  %v708 = vpop.f32.mrf.mxu0
  %v709 = vadd.f32 %v680, %v708
  %710 = vdwg.mxu0
  %711 = vmatpush.bf16.msra.mxu0 %v555
  %712 = vmatpush.bf16.msra.mxu0 %v554
  %713 = vmatpush.bf16.msra.mxu0 %v553
  %714 = vmatpush.bf16.msra.mxu0 %v552
  %715 = vmatpush.bf16.msra.mxu0 %v551
  %716 = vmatpush.bf16.msra.mxu0 %v550
  %717 = vmatpush.bf16.msra.mxu0 %v549
  %718 = vmatpush.bf16.msra.mxu0 %v548
  %719 = vmatmul.bf16.gmra.mxu0 %v266
  %v720 = vpop.f32.mrf.mxu0
  %v721 = vadd.f32 %v692, %v720
  %v722 = vpop.f32.mrf.mxu0
  %v723 = vadd.f32 %v694, %v722
  %724 = vmatmul.bf16.gmra.mxu0 %v273
  %v725 = vpop.f32.mrf.mxu0
  %v726 = vadd.f32 %v697, %v725
  %v727 = vpop.f32.mrf.mxu0
  %v728 = vadd.f32 %v699, %v727
  %729 = vmatmul.bf16.gmra.mxu0 %v280
  %v730 = vpop.f32.mrf.mxu0
  %v731 = vadd.f32 %v702, %v730
  %v732 = vpop.f32.mrf.mxu0
  %v733 = vadd.f32 %v704, %v732
  %734 = vmatmul.bf16.gmra.mxu0 %v287
  %v735 = vpop.f32.mrf.mxu0
  %v736 = vadd.f32 %v707, %v735
  %v737 = vpop.f32.mrf.mxu0
  %v738 = vadd.f32 %v709, %v737
  %739 = vdwg.mxu0
  %740 = vmatpush.bf16.msra.mxu0 %v563
  %741 = vmatpush.bf16.msra.mxu0 %v562
  %742 = vmatpush.bf16.msra.mxu0 %v561
  %743 = vmatpush.bf16.msra.mxu0 %v560
  %744 = vmatpush.bf16.msra.mxu0 %v559
  %745 = vmatpush.bf16.msra.mxu0 %v558
  %746 = vmatpush.bf16.msra.mxu0 %v557
  %747 = vmatpush.bf16.msra.mxu0 %v556
  %748 = vmatmul.bf16.gmra.mxu0 %v267
  %v749 = vpop.f32.mrf.mxu0
  %v750 = vadd.f32 %v721, %v749
  %v751 = vpop.f32.mrf.mxu0
  %v752 = vadd.f32 %v723, %v751
  %753 = vmatmul.bf16.gmra.mxu0 %v274
  %v754 = vpop.f32.mrf.mxu0
  %v755 = vadd.f32 %v726, %v754
  %v756 = vpop.f32.mrf.mxu0
  %v757 = vadd.f32 %v728, %v756
  %758 = vmatmul.bf16.gmra.mxu0 %v281
  %v759 = vpop.f32.mrf.mxu0
  %v760 = vadd.f32 %v731, %v759
  %v761 = vpop.f32.mrf.mxu0
  %v762 = vadd.f32 %v733, %v761
  %763 = vmatmul.bf16.gmra.mxu0 %v288
  %v764 = vpop.f32.mrf.mxu0
  %v765 = vadd.f32 %v736, %v764
  %v766 = vpop.f32.mrf.mxu0
  %v767 = vadd.f32 %v738, %v766
  %768 = vdwg.mxu0
  %769 = vmatpush.bf16.msra.mxu0 %v571
  %770 = vmatpush.bf16.msra.mxu0 %v570
  %771 = vmatpush.bf16.msra.mxu0 %v569
  %772 = vmatpush.bf16.msra.mxu0 %v568
  %773 = vmatpush.bf16.msra.mxu0 %v567
  %774 = vmatpush.bf16.msra.mxu0 %v566
  %775 = vmatpush.bf16.msra.mxu0 %v565
  %776 = vmatpush.bf16.msra.mxu0 %v564
  %777 = vmatmul.bf16.gmra.mxu0 %v268
  %v778 = vpop.f32.mrf.mxu0
  %v779 = vadd.f32 %v750, %v778
  %v780 = vpop.f32.mrf.mxu0
  %v781 = vadd.f32 %v752, %v780
  %782 = vmatmul.bf16.gmra.mxu0 %v275
  %v783 = vpop.f32.mrf.mxu0
  %v784 = vadd.f32 %v755, %v783
  %v785 = vpop.f32.mrf.mxu0
  %v786 = vadd.f32 %v757, %v785
  %787 = vmatmul.bf16.gmra.mxu0 %v282
  %v788 = vpop.f32.mrf.mxu0
  %v789 = vadd.f32 %v760, %v788
  %v790 = vpop.f32.mrf.mxu0
  %v791 = vadd.f32 %v762, %v790
  %792 = vmatmul.bf16.gmra.mxu0 %v289
  %v793 = vpop.f32.mrf.mxu0
  %v794 = vadd.f32 %v765, %v793
  %v795 = vpop.f32.mrf.mxu0
  %v796 = vadd.f32 %v767, %v795
  %797 = vdwg.mxu0
  %798 = vmatpush.bf16.msra.mxu0 %v579
  %799 = vmatpush.bf16.msra.mxu0 %v578
  %800 = vmatpush.bf16.msra.mxu0 %v577
  %801 = vmatpush.bf16.msra.mxu0 %v576
  %802 = vmatpush.bf16.msra.mxu0 %v575
  %803 = vmatpush.bf16.msra.mxu0 %v574
  %804 = vmatpush.bf16.msra.mxu0 %v573
  %805 = vmatpush.bf16.msra.mxu0 %v572
  %806 = vmatmul.bf16.gmra.mxu0 %v269
  %v807 = vpop.f32.mrf.mxu0
  %v808 = vadd.f32 %v779, %v807
  %v809 = vpop.f32.mrf.mxu0
  %v810 = vadd.f32 %v781, %v809
  %811 = vmatmul.bf16.gmra.mxu0 %v276
  %v812 = vpop.f32.mrf.mxu0
  %v813 = vadd.f32 %v784, %v812
  %v814 = vpop.f32.mrf.mxu0
  %v815 = vadd.f32 %v786, %v814
  %816 = vmatmul.bf16.gmra.mxu0 %v283
  %v817 = vpop.f32.mrf.mxu0
  %v818 = vadd.f32 %v789, %v817
  %v819 = vpop.f32.mrf.mxu0
  %v820 = vadd.f32 %v791, %v819
  %821 = vmatmul.bf16.gmra.mxu0 %v290
  %v822 = vpop.f32.mrf.mxu0
  %v823 = vadd.f32 %v794, %v822
  %v824 = vpop.f32.mrf.mxu0
  %v825 = vadd.f32 %v796, %v824
  %826 = vdwg.mxu0
  %827 = vmatpush.bf16.msra.mxu0 0
  %828 = vmatpush.bf16.msra.mxu0 0
  %829 = vmatpush.bf16.msra.mxu0 %v585
  %830 = vmatpush.bf16.msra.mxu0 %v584
  %831 = vmatpush.bf16.msra.mxu0 %v583
  %832 = vmatpush.bf16.msra.mxu0 %v582
  %833 = vmatpush.bf16.msra.mxu0 %v581
  %834 = vmatpush.bf16.msra.mxu0 %v580
  %835 = vmatmul.bf16.gmra.mxu0 %v642
  %v836 = vpop.f32.mrf.mxu0
  %v837 = vadd.f32 %v808, %v836
  %v838 = vpop.f32.mrf.mxu0
  %v839 = vadd.f32 %v810, %v838
  %840 = vmatmul.bf16.gmra.mxu0 %v645
  %v841 = vpop.f32.mrf.mxu0
  %v842 = vadd.f32 %v813, %v841
  %v843 = vpop.f32.mrf.mxu0
  %v844 = vadd.f32 %v815, %v843
  %845 = vmatmul.bf16.gmra.mxu0 %v648
  %v846 = vpop.f32.mrf.mxu0
  %v847 = vadd.f32 %v818, %v846
  %v848 = vpop.f32.mrf.mxu0
  %v849 = vadd.f32 %v820, %v848
  %850 = vmatmul.bf16.gmra.mxu0 %v651
  %v851 = vpop.f32.mrf.mxu0
  %v852 = vadd.f32 %v823, %v851
  %v853 = vpop.f32.mrf.mxu0
  %v854 = vadd.f32 %v825, %v853
  %855 = vdwg.mxu0
  %v856 = vmax.f32 %v837, 0.0
  %v857 = vmax.f32 %v839, 0.0
  %v858 = vmax.f32 %v842, 0.0
  %v859 = vmax.f32 %v844, 0.0
  %v860 = vmax.f32 %v847, 0.0
  %v861 = vmax.f32 %v849, 0.0
  %v862 = vmax.f32 %v852, 0.0
  %v863 = vmax.f32 %v854, 0.0
  %865 = vset.pattern.permute.xlu0 0
  %866 = vperm.xlu0 %865, %v24
  %v867 = vpop.permute.xlu0 %866
  %870 = vset.pattern.permute.xlu0 0
  %871 = vperm.xlu0 %870, %v25
  %v872 = vpop.permute.xlu0 %871
  %875 = vset.pattern.permute.xlu0 0
  %876 = vperm.xlu0 %875, %v26
  %v877 = vpop.permute.xlu0 %876
  %880 = vset.pattern.permute.xlu0 0
  %881 = vperm.xlu0 %880, %v27
  %v882 = vpop.permute.xlu0 %881
  %885 = vset.pattern.permute.xlu0 0
  %886 = vperm.xlu0 %885, %v28
  %v887 = vpop.permute.xlu0 %886
  %890 = vset.pattern.permute.xlu0 0
  %891 = vperm.xlu0 %890, %v29
  %v892 = vpop.permute.xlu0 %891
  %895 = vset.pattern.permute.xlu0 0
  %896 = vperm.xlu0 %895, %v30
  %v897 = vpop.permute.xlu0 %896
  %900 = vset.pattern.permute.xlu0 0
  %901 = vperm.xlu0 %900, %v31
  %v902 = vpop.permute.xlu0 %901
  %v904 = vmul.f32 %v856, %v867
  %v905 = vmul.f32 %v857, %v872
  %v906 = vmul.f32 %v858, %v877
  %v907 = vmul.f32 %v859, %v882
  %v908 = vmul.f32 %v860, %v887
  %v909 = vmul.f32 %v861, %v892
  %v910 = vmul.f32 %v862, %v897
  %v911 = vmul.f32 %v863, %v902
  %v912 = vpack.c.bf16 %v905, %v904
  %v913 = vpack.c.bf16 %v907, %v906
  %v914 = vpack.c.bf16 %v909, %v908
  %v915 = vpack.c.bf16 %v911, %v910
  %v916 = vld [vmem:[%s3] sm:$0xf]
  %v917 = vld [vmem:[%s3 + $0x4] sm:$0xf]
  %v918 = vld [vmem:[%s3 + $0x8] sm:$0xf]
  %v919 = vld [vmem:[%s3 + $0xc] sm:$0xf]
  %v920 = vld [vmem:[%s3 + $0x10] sm:$0xf]
  %v921 = vld [vmem:[%s3 + $0x14] sm:$0xf]
  %v922 = vld [vmem:[%s3 + $0x18] sm:$0xf]
  %v923 = vld [vmem:[%s3 + $0x1c] sm:$0xf]
  %v924 = vld [vmem:[%s3 + $0x20] sm:$0xf]
  %v925 = vld [vmem:[%s3 + $0x24] sm:$0xf]
  %v926 = vld [vmem:[%s3 + $0x28] sm:$0xf]
  %v927 = vld [vmem:[%s3 + $0x2c] sm:$0xf]
  %v928 = vld [vmem:[%s3 + $0x30] sm:$0xf]
  %v929 = vld [vmem:[%s3 + $0x34] sm:$0xf]
  %v930 = vld [vmem:[%s3 + $0x38] sm:$0xf]
  %v931 = vld [vmem:[%s3 + $0x3c] sm:$0xf]
  %v932 = vld [vmem:[%s4] sm:$0x1]
  %v934 = vperm.slane %v932, 0
  %v952 = vunpack.c.l.b16 %v916
  %v953 = vunpack.c.l.b16 %v917
  %v954 = vunpack.c.l.b16 %v918
  %v955 = vunpack.c.l.b16 %v919
  %v956 = vunpack.c.l.b16 %v920
  %v957 = vunpack.c.l.b16 %v921
  %v958 = vunpack.c.l.b16 %v922
  %v959 = vunpack.c.l.b16 %v923
  %v960 = vunpack.c.l.b16 %v924
  %v961 = vunpack.c.l.b16 %v925
  %v962 = vunpack.c.l.b16 %v926
  %v963 = vunpack.c.l.b16 %v927
  %v964 = vunpack.c.l.b16 %v928
  %v965 = vunpack.c.l.b16 %v929
  %v966 = vunpack.c.l.b16 %v930
  %v967 = vunpack.c.l.b16 %v931
  %v968 = vpack.c.b16 %v953, %v952
  %v969 = vpack.c.b16 %v955, %v954
  %v970 = vpack.c.b16 %v957, %v956
  %v971 = vpack.c.b16 %v959, %v958
  %v972 = vpack.c.b16 %v961, %v960
  %v973 = vpack.c.b16 %v963, %v962
  %v974 = vpack.c.b16 %v965, %v964
  %v975 = vpack.c.b16 %v967, %v966
  %984 = vmatpush.bf16.msra.mxu0 %v975
  %985 = vmatpush.bf16.msra.mxu0 %v974
  %986 = vmatpush.bf16.msra.mxu0 %v973
  %987 = vmatpush.bf16.msra.mxu0 %v972
  %988 = vmatpush.bf16.msra.mxu0 %v971
  %989 = vmatpush.bf16.msra.mxu0 %v970
  %990 = vmatpush.bf16.msra.mxu0 %v969
  %991 = vmatpush.bf16.msra.mxu0 %v968
  %992 = vmatmul.bf16.gmra.mxu0 %v912
  %v993 = vpop.f32.mrf.mxu0
  %v994 = vadd.f32 %v934, %v993
  %v995 = vpop.f32.mrf.mxu0
  %v996 = vadd.f32 %v934, %v995
  %997 = vmatmul.bf16.gmra.mxu0 %v913
  %v998 = vpop.f32.mrf.mxu0
  %v999 = vadd.f32 %v934, %v998
  %v1000 = vpop.f32.mrf.mxu0
  %v1001 = vadd.f32 %v934, %v1000
  %1002 = vmatmul.bf16.gmra.mxu0 %v914
  %v1003 = vpop.f32.mrf.mxu0
  %v1004 = vadd.f32 %v934, %v1003
  %v1005 = vpop.f32.mrf.mxu0
  %v1006 = vadd.f32 %v934, %v1005
  %1007 = vmatmul.bf16.gmra.mxu0 %v915
  %v1008 = vpop.f32.mrf.mxu0
  %v1009 = vadd.f32 %v934, %v1008
  %v1010 = vpop.f32.mrf.mxu0
  %v1011 = vadd.f32 %v934, %v1010
  %1012 = vdwg.mxu0
  %v1013 = vmax.f32 %v994, 0.0
  %v1014 = vmax.f32 %v996, 0.0
  %v1015 = vmax.f32 %v999, 0.0
  %v1016 = vmax.f32 %v1001, 0.0
  %v1017 = vmax.f32 %v1004, 0.0
  %v1018 = vmax.f32 %v1006, 0.0
  %v1019 = vmax.f32 %v1009, 0.0
  %v1020 = vmax.f32 %v1011, 0.0
  %v1021 = vmul.f32 %v1013, %v867
  %v1022 = vmul.f32 %v1014, %v872
  %v1023 = vmul.f32 %v1015, %v877
  %v1024 = vmul.f32 %v1016, %v882
  %v1025 = vmul.f32 %v1017, %v887
  %v1026 = vmul.f32 %v1018, %v892
  %v1027 = vmul.f32 %v1019, %v897
  %v1028 = vmul.f32 %v1020, %v902
  %v1029 = vpack.c.bf16 %v1021, %v1021
  %v1030 = vpack.c.bf16 %v1022, %v1022
  %v1031 = vpack.c.bf16 %v1023, %v1023
  %v1032 = vpack.c.bf16 %v1024, %v1024
  %v1033 = vpack.c.bf16 %v1025, %v1025
  %v1034 = vpack.c.bf16 %v1026, %v1026
  %v1035 = vpack.c.bf16 %v1027, %v1027
  %v1036 = vpack.c.bf16 %v1028, %v1028
  %1037 = vst [vmem:[%s6] sm:$0xf] %v1029
  %1038 = vst [vmem:[%s6 + $0x4] sm:$0xf] %v1030
  %1039 = vst [vmem:[%s6 + $0x8] sm:$0xf] %v1031
  %1040 = vst [vmem:[%s6 + $0xc] sm:$0xf] %v1032
  %1041 = vst [vmem:[%s6 + $0x10] sm:$0xf] %v1033
  %1042 = vst [vmem:[%s6 + $0x14] sm:$0xf] %v1034
  %1043 = vst [vmem:[%s6 + $0x18] sm:$0xf] %v1035
  %1044 = vst [vmem:[%s6 + $0x1c] sm:$0xf] %v1036
  // Predicated region
  $region26: #{_lambda_.5} parent=0 // pred_check
    _
  $region27: #{_lambda_.5} parent=0 // pred_check_branch
    %1046 = sbr.rel (0) target = $region29
  $region28: #{_lambda_.5} parent=0 // pred_region
    _
  $region29: #{_lambda_.5} parent=0 // pred_fallthru
    _
  // Predicated region
  $region30: #{_lambda_.5} parent=0 // pred_check
    _
  $region31: #{_lambda_.5} parent=0 // pred_check_branch
    %1048 = sbr.rel (0) target = $region33
  $region32: #{_lambda_.5} parent=0 // pred_region
    _
  $region33: #{_lambda_.5} parent=0 // pred_fallthru
    _

</llo_original>
